<compile_context>
chip_gen: v6e
topology: v6e:2x2x1
jax: 0.10.0
libtpu: 0.0.40
codegen_flags: <defaults>
</compile_context>

<pallas_src>
import math

import jax
import jax.numpy as jnp
from jax import lax
from jax.experimental import pallas as pl
from jax.experimental.pallas import tpu as pltpu


def _erf(x):
    # Abramowitz & Stegun 7.1.26 rational approximation (max abs err ~1.5e-7).
    # TODO(synk): switch to lax.erf once Mosaic erf lowering is guaranteed.
    p = 0.3275911
    a1, a2, a3, a4, a5 = (0.254829592, -0.284496736, 1.421413741,
                          -1.453152027, 1.061405429)
    ax = jnp.abs(x)
    t = 1.0 / (1.0 + p * ax)
    poly = ((((a5 * t + a4) * t + a3) * t + a2) * t + a1) * t
    y = 1.0 - poly * jnp.exp(-ax * ax)
    return jnp.where(x >= 0.0, y, -y)


def _gelu_exact(x):
    # PyTorch nn.GELU() default (approximate='none').
    return 0.5 * x * (1.0 + _erf(x * 0.7071067811865476))


def _round_up(n, m):
    return ((n + m - 1) // m) * m


def convnext_block_pallas(x_nchw, t, p):
    """ConvNextBlock forward.  x_nchw: (B, Cin, H, W) NCHW, t: (B, 256)."""
    B, Cin, H, W = x_nchw.shape
    Cexp = p["w2"].shape[2]
    Cout = p["w3"].shape[1]

    # Flat "row stride": width padded for the 7x7 halo (>= W+6).  When cheap,
    # bump it so H*Wp is a multiple of 128 -> lane-dense (unmasked) stores.
    Wp = W + 6
    step = 128 // math.gcd(128, H)
    if _round_up(Wp, step) - Wp <= 32:
        Wp = _round_up(Wp, step)
    Hp = H + 6
    nflat = H * Wp                   # working flat length; cols (j%Wp)>=W are junk
    P1 = _round_up(Hp * Wp + 6, 128)             # padded-flat input length
    OFF = _round_up(Wp + 1, 128)                 # lane-aligned origin of xn in pad2
    P2 = _round_up(OFF + nflat + Wp + 1, 128)    # pad2 scratch length

    x = x_nchw.astype(jnp.float32)
    t = t.astype(jnp.float32)

    # --- wrapper-side prep (layout only, plus the tiny time-emb MLP) ----------
    xpad = jnp.pad(x, ((0, 0), (0, 0), (3, 3), (3, Wp - W - 3)))  # (B,Cin,Hp,Wp)
    xpad = xpad.reshape(B, Cin, Hp * Wp)
    xpad = jnp.pad(xpad, ((0, 0), (0, 0), (0, P1 - Hp * Wp)))     # (B,Cin,P1)

    emb = t @ p["mlp_w"] + p["mlp_b"][0]
    emb = emb * jax.nn.sigmoid(emb)                    # Swish, (B,Cin)
    bias1 = (emb + p["dw_b"][0]).reshape(B, Cin, 1)    # conv1 bias folded in

    dwt = p["dw_w"].T                                  # (Cin, 49)
    lng = p["ln_g"].T                                  # (Cin, 1)
    lnb = p["ln_b"].T                                  # (Cin, 1)
    w2k = jnp.transpose(p["w2"], (0, 2, 1))            # (9, Cexp, Cin)
    b2 = p["b2"].T                                     # (Cexp, 1)
    w3t = p["w3"].T                                    # (Cout, Cexp)
    wrt = p["wr"].T                                    # (Cout, Cin)
    bout = p["b3"].T + p["br"].T                       # (Cout, 1), b3+br folded

    # validity mask for the junk columns introduced by the stride-Wp flattening.
    mask = (jnp.arange(nflat) % Wp < W).astype(jnp.float32).reshape(1, nflat)

    def kernel(bias1_ref, xpad_ref, dwt_ref, lng_ref, lnb_ref, mask_ref,
               w2k_ref, b2_ref, w3t_ref, wrt_ref, bout_ref,
               out_ref, pad2_ref):
        # ---- depthwise 7x7 conv in flat padded coords (row stride Wp) -------
        acc = jnp.zeros((Cin, nflat), jnp.float32)
        for kh in range(7):
            for kw in range(7):
                o = kh * Wp + kw
                k = kh * 7 + kw
                acc = acc + xpad_ref[0, :, o:o + nflat] * dwt_ref[:, k:k + 1]
        acc = acc + bias1_ref[0]                       # conv1 bias + time emb

        # ---- LayerNorm over channels (the sublane axis), eps=1e-5 -----------
        s = acc[0:1, :]
        for c in range(1, Cin):
            s = s + acc[c:c + 1, :]
        mu = s * (1.0 / Cin)
        d = acc - mu
        sq = d * d
        v = sq[0:1, :]
        for c in range(1, Cin):
            v = v + sq[c:c + 1, :]
        var = v * (1.0 / Cin)
        xn = d * lax.rsqrt(var + 1e-5)
        xn = xn * lng_ref[...] + lnb_ref[...]
        xn = xn * mask_ref[...]        # junk cols -> 0 == conv2's zero-pad ring

        # ---- 3x3 conv Cin -> Cexp on the MXU --------------------------------
        # pad2 holds xn at lane offset OFF with a zero border.  Re-zero only the
        # two border strips every step (scratch persists across grid steps and
        # the parallel batch axis may be split across cores); the interior is
        # fully rewritten each step with a lane-aligned store.
        pad2_ref[:, :OFF] = jnp.zeros((Cin, OFF), jnp.float32)
        pad2_ref[:, OFF + nflat:] = jnp.zeros((Cin, P2 - OFF - nflat),
                                              jnp.float32)
        pad2_ref[:, OFF:OFF + nflat] = xn

        y2 = jnp.zeros((Cexp, nflat), jnp.float32)
        for tap in range(9):
            dh, dw = tap // 3, tap % 3
            o = OFF + (dh - 1) * Wp + (dw - 1)
            y2 = y2 + jnp.dot(w2k_ref[tap], pad2_ref[:, o:o + nflat],
                              preferred_element_type=jnp.float32)
        act = _gelu_exact(y2 + b2_ref[...])            # (Cexp, nflat)

        # ---- 1x1 conv Cexp -> Cout and residual 1x1 Cin -> Cout (MXU) -------
        y3 = jnp.dot(w3t_ref[...], act, preferred_element_type=jnp.float32)
        x_c = xpad_ref[0, :, 3 * Wp + 3:3 * Wp + 3 + nflat]   # un-padded input
        res = jnp.dot(wrt_ref[...], x_c, preferred_element_type=jnp.float32)
        out_ref[0] = y3 + res + bout_ref[...]          # lane-dense (Cout, nflat)

    def _const(arr):
        nd = arr.ndim
        return pl.BlockSpec(arr.shape, lambda b, _nd=nd: (0,) * _nd)

    grid_spec = pltpu.PrefetchScalarGridSpec(
        num_scalar_prefetch=0,
        grid=(B,),
        in_specs=[
            pl.BlockSpec((1, Cin, 1), lambda b: (b, 0, 0)),     # bias1
            pl.BlockSpec((1, Cin, P1), lambda b: (b, 0, 0)),    # xpad (flat)
            _const(dwt), _const(lng), _const(lnb), _const(mask),
            _const(w2k), _const(b2), _const(w3t), _const(wrt), _const(bout),
        ],
        out_specs=pl.BlockSpec((1, Cout, nflat), lambda b: (b, 0, 0)),
        scratch_shapes=[pltpu.VMEM((Cin, P2), jnp.float32)],
    )

    out_flat = pl.pallas_call(
        kernel,
        out_shape=jax.ShapeDtypeStruct((B, Cout, nflat), jnp.float32),
        grid_spec=grid_spec,
        compiler_params=pltpu.CompilerParams(
            dimension_semantics=("parallel",)),
    )(bias1, xpad, dwt, lng, lnb, mask, w2k, b2, w3t, wrt, bout)

    # lane-dense (B,Cout,H*Wp) -> NCHW: reshape + crop junk columns, no transpose.
    return out_flat.reshape(B, Cout, H, Wp)[:, :, :, :W]


def reference(x_nchw, t, p):
    """Pure-JAX reference matching the PyTorch ConvNextBlock forward."""
    B, Cin, H, W = x_nchw.shape
    Cexp = p["w2"].shape[2]
    x = jnp.transpose(x_nchw, (0, 2, 3, 1)).astype(jnp.float32)        # NHWC

    emb = t @ p["mlp_w"] + p["mlp_b"][0]
    emb = emb * jax.nn.sigmoid(emb)                                    # (B, Cin)

    dw = p["dw_w"].reshape(7, 7, Cin)[:, :, None, :]                   # HWIO, I=1
    y = lax.conv_general_dilated(
        x, dw, (1, 1), ((3, 3), (3, 3)),
        dimension_numbers=("NHWC", "HWIO", "NHWC"),
        feature_group_count=Cin) + p["dw_b"][0]
    y = y + emb[:, None, None, :]

    mu = jnp.mean(y, axis=-1, keepdims=True)
    var = jnp.mean((y - mu) ** 2, axis=-1, keepdims=True)
    y = (y - mu) / jnp.sqrt(var + 1e-5) * p["ln_g"][0] + p["ln_b"][0]

    w2 = p["w2"].reshape(3, 3, Cin, Cexp)
    y = lax.conv_general_dilated(
        y, w2, (1, 1), ((1, 1), (1, 1)),
        dimension_numbers=("NHWC", "HWIO", "NHWC")) + p["b2"][0]
    y = jax.nn.gelu(y, approximate=False)

    y = jnp.einsum("bhwc,co->bhwo", y, p["w3"]) + p["b3"][0]
    res = jnp.einsum("bhwc,co->bhwo", x, p["wr"]) + p["br"][0]
    return jnp.transpose(y + res, (0, 3, 1, 2))


def init_params(key, dim_in, dim_out, extra=2):
    exp_dim = dim_in * extra
    ks = jax.random.split(key, 12)

    def n(k, shape, s):
        return jax.random.normal(k, shape, jnp.float32) * s

    return dict(
        mlp_w=n(ks[0], (256, dim_in), 0.05),
        mlp_b=n(ks[1], (1, dim_in), 0.05),
        dw_w=n(ks[2], (49, dim_in), 0.1),
        dw_b=n(ks[3], (1, dim_in), 0.1),
        ln_g=1.0 + n(ks[4], (1, dim_in), 0.1),
        ln_b=n(ks[5], (1, dim_in), 0.1),
        w2=n(ks[6], (9, dim_in, exp_dim), 0.1),
        b2=n(ks[7], (1, exp_dim), 0.1),
        w3=n(ks[8], (exp_dim, dim_out), 0.1),
        b3=n(ks[9], (1, dim_out), 0.1),
        wr=n(ks[10], (dim_in, dim_out), 0.1),
        br=n(ks[11], (1, dim_out), 0.1),
    )


if __name__ == "__main__":
    B, Cin, H, W = 2, 4, 16, 16
    Cout, extra = 8, 2

    key = jax.random.PRNGKey(0)
    kx, kt, kp = jax.random.split(key, 3)
    x = jax.random.normal(kx, (B, Cin, H, W), jnp.float32)
    t = jax.random.normal(kt, (B, 256), jnp.float32)
    params = init_params(kp, Cin, Cout, extra)

    out = convnext_block_pallas(x, t, params)
    out = jax.block_until_ready(out)
    assert out.shape == (B, Cout, H, W), out.shape

    ref = reference(x, t, params)
    max_err = float(jnp.max(jnp.abs(out - ref)))
    assert max_err < 1e-3, f"max abs error {max_err}"

    print("KERNEL_OK")
</pallas_src>

<mosaic_0001>
module attributes {stable_mosaic.version = 11 : i64} {
  func.func @kernel(%arg0: i32, %arg1: memref<1x4x1xf32, #tpu.memory_space<vmem>>, %arg2: memref<1x4x640xf32, #tpu.memory_space<vmem>>, %arg3: memref<4x49xf32, #tpu.memory_space<vmem>>, %arg4: memref<4x1xf32, #tpu.memory_space<vmem>>, %arg5: memref<4x1xf32, #tpu.memory_space<vmem>>, %arg6: memref<1x384xf32, #tpu.memory_space<vmem>>, %arg7: memref<9x8x4xf32, #tpu.memory_space<vmem>>, %arg8: memref<8x1xf32, #tpu.memory_space<vmem>>, %arg9: memref<8x8xf32, #tpu.memory_space<vmem>>, %arg10: memref<8x4xf32, #tpu.memory_space<vmem>>, %arg11: memref<8x1xf32, #tpu.memory_space<vmem>>, %arg12: memref<1x8x384xf32, #tpu.memory_space<vmem>>, %arg13: memref<4x640xf32, #tpu.memory_space<vmem>>) attributes {dimension_semantics = [#tpu.dimension_semantics<parallel>], iteration_bounds = array<i64: 2>, scalar_prefetch = 0 : i64, scratch_operands = 1 : i64, tpu.core_type = #tpu.core_type<tc>, window_params = [{transform_indices = @transform_0, window_bounds = array<i64: 1, 4, 1>}, {transform_indices = @transform_1, window_bounds = array<i64: 1, 4, 640>}, {pipeline_mode = #tpu.pipeline_mode<synchronous>, transform_indices = @transform_2, window_bounds = array<i64: 4, 49>}, {pipeline_mode = #tpu.pipeline_mode<synchronous>, transform_indices = @transform_3, window_bounds = array<i64: 4, 1>}, {pipeline_mode = #tpu.pipeline_mode<synchronous>, transform_indices = @transform_4, window_bounds = array<i64: 4, 1>}, {pipeline_mode = #tpu.pipeline_mode<synchronous>, transform_indices = @transform_5, window_bounds = array<i64: 1, 384>}, {pipeline_mode = #tpu.pipeline_mode<synchronous>, transform_indices = @transform_6, window_bounds = array<i64: 9, 8, 4>}, {pipeline_mode = #tpu.pipeline_mode<synchronous>, transform_indices = @transform_7, window_bounds = array<i64: 8, 1>}, {pipeline_mode = #tpu.pipeline_mode<synchronous>, transform_indices = @transform_8, window_bounds = array<i64: 8, 8>}, {pipeline_mode = #tpu.pipeline_mode<synchronous>, transform_indices = @transform_9, window_bounds = array<i64: 8, 4>}, {pipeline_mode = #tpu.pipeline_mode<synchronous>, transform_indices = @transform_10, window_bounds = array<i64: 8, 1>}, {transform_indices = @transform_11, window_bounds = array<i64: 1, 8, 384>}]} {
    %cst = arith.constant 0.000000e+00 : f32
    %0 = vector.broadcast %cst : f32 to vector<4x384xf32>
    %c0 = arith.constant 0 : index
    %c0_0 = arith.constant 0 : index
    %c0_1 = arith.constant 0 : index
    %1 = vector.load %arg2[%c0, %c0_0, %c0_1] : memref<1x4x640xf32, #tpu.memory_space<vmem>>, vector<1x4x384xf32>
    %2 = vector.shape_cast %1 : vector<1x4x384xf32> to vector<4x384xf32>
    %c0_2 = arith.constant 0 : index
    %c0_3 = arith.constant 0 : index
    %3 = vector.load %arg3[%c0_2, %c0_3] : memref<4x49xf32, #tpu.memory_space<vmem>>, vector<4x1xf32>
    %4 = vector.broadcast %3 : vector<4x1xf32> to vector<4x384xf32>
    %5 = arith.mulf %2, %4 : vector<4x384xf32>
    %6 = arith.addf %0, %5 : vector<4x384xf32>
    %c0_4 = arith.constant 0 : index
    %c0_5 = arith.constant 0 : index
    %c1 = arith.constant 1 : index
    %7 = vector.load %arg2[%c0_4, %c0_5, %c1] : memref<1x4x640xf32, #tpu.memory_space<vmem>>, vector<1x4x384xf32>
    %8 = vector.shape_cast %7 : vector<1x4x384xf32> to vector<4x384xf32>
    %c0_6 = arith.constant 0 : index
    %c1_7 = arith.constant 1 : index
    %9 = vector.load %arg3[%c0_6, %c1_7] : memref<4x49xf32, #tpu.memory_space<vmem>>, vector<4x1xf32>
    %10 = vector.broadcast %9 : vector<4x1xf32> to vector<4x384xf32>
    %11 = arith.mulf %8, %10 : vector<4x384xf32>
    %12 = arith.addf %6, %11 : vector<4x384xf32>
    %c0_8 = arith.constant 0 : index
    %c0_9 = arith.constant 0 : index
    %c2 = arith.constant 2 : index
    %13 = vector.load %arg2[%c0_8, %c0_9, %c2] : memref<1x4x640xf32, #tpu.memory_space<vmem>>, vector<1x4x384xf32>
    %14 = vector.shape_cast %13 : vector<1x4x384xf32> to vector<4x384xf32>
    %c0_10 = arith.constant 0 : index
    %c2_11 = arith.constant 2 : index
    %15 = vector.load %arg3[%c0_10, %c2_11] : memref<4x49xf32, #tpu.memory_space<vmem>>, vector<4x1xf32>
    %16 = vector.broadcast %15 : vector<4x1xf32> to vector<4x384xf32>
    %17 = arith.mulf %14, %16 : vector<4x384xf32>
    %18 = arith.addf %12, %17 : vector<4x384xf32>
    %c0_12 = arith.constant 0 : index
    %c0_13 = arith.constant 0 : index
    %c3 = arith.constant 3 : index
    %19 = vector.load %arg2[%c0_12, %c0_13, %c3] : memref<1x4x640xf32, #tpu.memory_space<vmem>>, vector<1x4x384xf32>
    %20 = vector.shape_cast %19 : vector<1x4x384xf32> to vector<4x384xf32>
    %c0_14 = arith.constant 0 : index
    %c3_15 = arith.constant 3 : index
    %21 = vector.load %arg3[%c0_14, %c3_15] : memref<4x49xf32, #tpu.memory_space<vmem>>, vector<4x1xf32>
    %22 = vector.broadcast %21 : vector<4x1xf32> to vector<4x384xf32>
    %23 = arith.mulf %20, %22 : vector<4x384xf32>
    %24 = arith.addf %18, %23 : vector<4x384xf32>
    %c0_16 = arith.constant 0 : index
    %c0_17 = arith.constant 0 : index
    %c4 = arith.constant 4 : index
    %25 = vector.load %arg2[%c0_16, %c0_17, %c4] : memref<1x4x640xf32, #tpu.memory_space<vmem>>, vector<1x4x384xf32>
    %26 = vector.shape_cast %25 : vector<1x4x384xf32> to vector<4x384xf32>
    %c0_18 = arith.constant 0 : index
    %c4_19 = arith.constant 4 : index
    %27 = vector.load %arg3[%c0_18, %c4_19] : memref<4x49xf32, #tpu.memory_space<vmem>>, vector<4x1xf32>
    %28 = vector.broadcast %27 : vector<4x1xf32> to vector<4x384xf32>
    %29 = arith.mulf %26, %28 : vector<4x384xf32>
    %30 = arith.addf %24, %29 : vector<4x384xf32>
    %c0_20 = arith.constant 0 : index
    %c0_21 = arith.constant 0 : index
    %c5 = arith.constant 5 : index
    %31 = vector.load %arg2[%c0_20, %c0_21, %c5] : memref<1x4x640xf32, #tpu.memory_space<vmem>>, vector<1x4x384xf32>
    %32 = vector.shape_cast %31 : vector<1x4x384xf32> to vector<4x384xf32>
    %c0_22 = arith.constant 0 : index
    %c5_23 = arith.constant 5 : index
    %33 = vector.load %arg3[%c0_22, %c5_23] : memref<4x49xf32, #tpu.memory_space<vmem>>, vector<4x1xf32>
    %34 = vector.broadcast %33 : vector<4x1xf32> to vector<4x384xf32>
    %35 = arith.mulf %32, %34 : vector<4x384xf32>
    %36 = arith.addf %30, %35 : vector<4x384xf32>
    %c0_24 = arith.constant 0 : index
    %c0_25 = arith.constant 0 : index
    %c6 = arith.constant 6 : index
    %37 = vector.load %arg2[%c0_24, %c0_25, %c6] : memref<1x4x640xf32, #tpu.memory_space<vmem>>, vector<1x4x384xf32>
    %38 = vector.shape_cast %37 : vector<1x4x384xf32> to vector<4x384xf32>
    %c0_26 = arith.constant 0 : index
    %c6_27 = arith.constant 6 : index
    %39 = vector.load %arg3[%c0_26, %c6_27] : memref<4x49xf32, #tpu.memory_space<vmem>>, vector<4x1xf32>
    %40 = vector.broadcast %39 : vector<4x1xf32> to vector<4x384xf32>
    %41 = arith.mulf %38, %40 : vector<4x384xf32>
    %42 = arith.addf %36, %41 : vector<4x384xf32>
    %c0_28 = arith.constant 0 : index
    %c0_29 = arith.constant 0 : index
    %c24 = arith.constant 24 : index
    %43 = vector.load %arg2[%c0_28, %c0_29, %c24] : memref<1x4x640xf32, #tpu.memory_space<vmem>>, vector<1x4x384xf32>
    %44 = vector.shape_cast %43 : vector<1x4x384xf32> to vector<4x384xf32>
    %c0_30 = arith.constant 0 : index
    %c7 = arith.constant 7 : index
    %45 = vector.load %arg3[%c0_30, %c7] : memref<4x49xf32, #tpu.memory_space<vmem>>, vector<4x1xf32>
    %46 = vector.broadcast %45 : vector<4x1xf32> to vector<4x384xf32>
    %47 = arith.mulf %44, %46 : vector<4x384xf32>
    %48 = arith.addf %42, %47 : vector<4x384xf32>
    %c0_31 = arith.constant 0 : index
    %c0_32 = arith.constant 0 : index
    %c25 = arith.constant 25 : index
    %49 = vector.load %arg2[%c0_31, %c0_32, %c25] : memref<1x4x640xf32, #tpu.memory_space<vmem>>, vector<1x4x384xf32>
    %50 = vector.shape_cast %49 : vector<1x4x384xf32> to vector<4x384xf32>
    %c0_33 = arith.constant 0 : index
    %c8 = arith.constant 8 : index
    %51 = vector.load %arg3[%c0_33, %c8] : memref<4x49xf32, #tpu.memory_space<vmem>>, vector<4x1xf32>
    %52 = vector.broadcast %51 : vector<4x1xf32> to vector<4x384xf32>
    %53 = arith.mulf %50, %52 : vector<4x384xf32>
    %54 = arith.addf %48, %53 : vector<4x384xf32>
    %c0_34 = arith.constant 0 : index
    %c0_35 = arith.constant 0 : index
    %c26 = arith.constant 26 : index
    %55 = vector.load %arg2[%c0_34, %c0_35, %c26] : memref<1x4x640xf32, #tpu.memory_space<vmem>>, vector<1x4x384xf32>
    %56 = vector.shape_cast %55 : vector<1x4x384xf32> to vector<4x384xf32>
    %c0_36 = arith.constant 0 : index
    %c9 = arith.constant 9 : index
    %57 = vector.load %arg3[%c0_36, %c9] : memref<4x49xf32, #tpu.memory_space<vmem>>, vector<4x1xf32>
    %58 = vector.broadcast %57 : vector<4x1xf32> to vector<4x384xf32>
    %59 = arith.mulf %56, %58 : vector<4x384xf32>
    %60 = arith.addf %54, %59 : vector<4x384xf32>
    %c0_37 = arith.constant 0 : index
    %c0_38 = arith.constant 0 : index
    %c27 = arith.constant 27 : index
    %61 = vector.load %arg2[%c0_37, %c0_38, %c27] : memref<1x4x640xf32, #tpu.memory_space<vmem>>, vector<1x4x384xf32>
    %62 = vector.shape_cast %61 : vector<1x4x384xf32> to vector<4x384xf32>
    %c0_39 = arith.constant 0 : index
    %c10 = arith.constant 10 : index
    %63 = vector.load %arg3[%c0_39, %c10] : memref<4x49xf32, #tpu.memory_space<vmem>>, vector<4x1xf32>
    %64 = vector.broadcast %63 : vector<4x1xf32> to vector<4x384xf32>
    %65 = arith.mulf %62, %64 : vector<4x384xf32>
    %66 = arith.addf %60, %65 : vector<4x384xf32>
    %c0_40 = arith.constant 0 : index
    %c0_41 = arith.constant 0 : index
    %c28 = arith.constant 28 : index
    %67 = vector.load %arg2[%c0_40, %c0_41, %c28] : memref<1x4x640xf32, #tpu.memory_space<vmem>>, vector<1x4x384xf32>
    %68 = vector.shape_cast %67 : vector<1x4x384xf32> to vector<4x384xf32>
    %c0_42 = arith.constant 0 : index
    %c11 = arith.constant 11 : index
    %69 = vector.load %arg3[%c0_42, %c11] : memref<4x49xf32, #tpu.memory_space<vmem>>, vector<4x1xf32>
    %70 = vector.broadcast %69 : vector<4x1xf32> to vector<4x384xf32>
    %71 = arith.mulf %68, %70 : vector<4x384xf32>
    %72 = arith.addf %66, %71 : vector<4x384xf32>
    %c0_43 = arith.constant 0 : index
    %c0_44 = arith.constant 0 : index
    %c29 = arith.constant 29 : index
    %73 = vector.load %arg2[%c0_43, %c0_44, %c29] : memref<1x4x640xf32, #tpu.memory_space<vmem>>, vector<1x4x384xf32>
    %74 = vector.shape_cast %73 : vector<1x4x384xf32> to vector<4x384xf32>
    %c0_45 = arith.constant 0 : index
    %c12 = arith.constant 12 : index
    %75 = vector.load %arg3[%c0_45, %c12] : memref<4x49xf32, #tpu.memory_space<vmem>>, vector<4x1xf32>
    %76 = vector.broadcast %75 : vector<4x1xf32> to vector<4x384xf32>
    %77 = arith.mulf %74, %76 : vector<4x384xf32>
    %78 = arith.addf %72, %77 : vector<4x384xf32>
    %c0_46 = arith.constant 0 : index
    %c0_47 = arith.constant 0 : index
    %c30 = arith.constant 30 : index
    %79 = vector.load %arg2[%c0_46, %c0_47, %c30] : memref<1x4x640xf32, #tpu.memory_space<vmem>>, vector<1x4x384xf32>
    %80 = vector.shape_cast %79 : vector<1x4x384xf32> to vector<4x384xf32>
    %c0_48 = arith.constant 0 : index
    %c13 = arith.constant 13 : index
    %81 = vector.load %arg3[%c0_48, %c13] : memref<4x49xf32, #tpu.memory_space<vmem>>, vector<4x1xf32>
    %82 = vector.broadcast %81 : vector<4x1xf32> to vector<4x384xf32>
    %83 = arith.mulf %80, %82 : vector<4x384xf32>
    %84 = arith.addf %78, %83 : vector<4x384xf32>
    %c0_49 = arith.constant 0 : index
    %c0_50 = arith.constant 0 : index
    %c48 = arith.constant 48 : index
    %85 = vector.load %arg2[%c0_49, %c0_50, %c48] : memref<1x4x640xf32, #tpu.memory_space<vmem>>, vector<1x4x384xf32>
    %86 = vector.shape_cast %85 : vector<1x4x384xf32> to vector<4x384xf32>
    %c0_51 = arith.constant 0 : index
    %c14 = arith.constant 14 : index
    %87 = vector.load %arg3[%c0_51, %c14] : memref<4x49xf32, #tpu.memory_space<vmem>>, vector<4x1xf32>
    %88 = vector.broadcast %87 : vector<4x1xf32> to vector<4x384xf32>
    %89 = arith.mulf %86, %88 : vector<4x384xf32>
    %90 = arith.addf %84, %89 : vector<4x384xf32>
    %c0_52 = arith.constant 0 : index
    %c0_53 = arith.constant 0 : index
    %c49 = arith.constant 49 : index
    %91 = vector.load %arg2[%c0_52, %c0_53, %c49] : memref<1x4x640xf32, #tpu.memory_space<vmem>>, vector<1x4x384xf32>
    %92 = vector.shape_cast %91 : vector<1x4x384xf32> to vector<4x384xf32>
    %c0_54 = arith.constant 0 : index
    %c15 = arith.constant 15 : index
    %93 = vector.load %arg3[%c0_54, %c15] : memref<4x49xf32, #tpu.memory_space<vmem>>, vector<4x1xf32>
    %94 = vector.broadcast %93 : vector<4x1xf32> to vector<4x384xf32>
    %95 = arith.mulf %92, %94 : vector<4x384xf32>
    %96 = arith.addf %90, %95 : vector<4x384xf32>
    %c0_55 = arith.constant 0 : index
    %c0_56 = arith.constant 0 : index
    %c50 = arith.constant 50 : index
    %97 = vector.load %arg2[%c0_55, %c0_56, %c50] : memref<1x4x640xf32, #tpu.memory_space<vmem>>, vector<1x4x384xf32>
    %98 = vector.shape_cast %97 : vector<1x4x384xf32> to vector<4x384xf32>
    %c0_57 = arith.constant 0 : index
    %c16 = arith.constant 16 : index
    %99 = vector.load %arg3[%c0_57, %c16] : memref<4x49xf32, #tpu.memory_space<vmem>>, vector<4x1xf32>
    %100 = vector.broadcast %99 : vector<4x1xf32> to vector<4x384xf32>
    %101 = arith.mulf %98, %100 : vector<4x384xf32>
    %102 = arith.addf %96, %101 : vector<4x384xf32>
    %c0_58 = arith.constant 0 : index
    %c0_59 = arith.constant 0 : index
    %c51 = arith.constant 51 : index
    %103 = vector.load %arg2[%c0_58, %c0_59, %c51] : memref<1x4x640xf32, #tpu.memory_space<vmem>>, vector<1x4x384xf32>
    %104 = vector.shape_cast %103 : vector<1x4x384xf32> to vector<4x384xf32>
    %c0_60 = arith.constant 0 : index
    %c17 = arith.constant 17 : index
    %105 = vector.load %arg3[%c0_60, %c17] : memref<4x49xf32, #tpu.memory_space<vmem>>, vector<4x1xf32>
    %106 = vector.broadcast %105 : vector<4x1xf32> to vector<4x384xf32>
    %107 = arith.mulf %104, %106 : vector<4x384xf32>
    %108 = arith.addf %102, %107 : vector<4x384xf32>
    %c0_61 = arith.constant 0 : index
    %c0_62 = arith.constant 0 : index
    %c52 = arith.constant 52 : index
    %109 = vector.load %arg2[%c0_61, %c0_62, %c52] : memref<1x4x640xf32, #tpu.memory_space<vmem>>, vector<1x4x384xf32>
    %110 = vector.shape_cast %109 : vector<1x4x384xf32> to vector<4x384xf32>
    %c0_63 = arith.constant 0 : index
    %c18 = arith.constant 18 : index
    %111 = vector.load %arg3[%c0_63, %c18] : memref<4x49xf32, #tpu.memory_space<vmem>>, vector<4x1xf32>
    %112 = vector.broadcast %111 : vector<4x1xf32> to vector<4x384xf32>
    %113 = arith.mulf %110, %112 : vector<4x384xf32>
    %114 = arith.addf %108, %113 : vector<4x384xf32>
    %c0_64 = arith.constant 0 : index
    %c0_65 = arith.constant 0 : index
    %c53 = arith.constant 53 : index
    %115 = vector.load %arg2[%c0_64, %c0_65, %c53] : memref<1x4x640xf32, #tpu.memory_space<vmem>>, vector<1x4x384xf32>
    %116 = vector.shape_cast %115 : vector<1x4x384xf32> to vector<4x384xf32>
    %c0_66 = arith.constant 0 : index
    %c19 = arith.constant 19 : index
    %117 = vector.load %arg3[%c0_66, %c19] : memref<4x49xf32, #tpu.memory_space<vmem>>, vector<4x1xf32>
    %118 = vector.broadcast %117 : vector<4x1xf32> to vector<4x384xf32>
    %119 = arith.mulf %116, %118 : vector<4x384xf32>
    %120 = arith.addf %114, %119 : vector<4x384xf32>
    %c0_67 = arith.constant 0 : index
    %c0_68 = arith.constant 0 : index
    %c54 = arith.constant 54 : index
    %121 = vector.load %arg2[%c0_67, %c0_68, %c54] : memref<1x4x640xf32, #tpu.memory_space<vmem>>, vector<1x4x384xf32>
    %122 = vector.shape_cast %121 : vector<1x4x384xf32> to vector<4x384xf32>
    %c0_69 = arith.constant 0 : index
    %c20 = arith.constant 20 : index
    %123 = vector.load %arg3[%c0_69, %c20] : memref<4x49xf32, #tpu.memory_space<vmem>>, vector<4x1xf32>
    %124 = vector.broadcast %123 : vector<4x1xf32> to vector<4x384xf32>
    %125 = arith.mulf %122, %124 : vector<4x384xf32>
    %126 = arith.addf %120, %125 : vector<4x384xf32>
    %c0_70 = arith.constant 0 : index
    %c0_71 = arith.constant 0 : index
    %c72 = arith.constant 72 : index
    %127 = vector.load %arg2[%c0_70, %c0_71, %c72] : memref<1x4x640xf32, #tpu.memory_space<vmem>>, vector<1x4x384xf32>
    %128 = vector.shape_cast %127 : vector<1x4x384xf32> to vector<4x384xf32>
    %c0_72 = arith.constant 0 : index
    %c21 = arith.constant 21 : index
    %129 = vector.load %arg3[%c0_72, %c21] : memref<4x49xf32, #tpu.memory_space<vmem>>, vector<4x1xf32>
    %130 = vector.broadcast %129 : vector<4x1xf32> to vector<4x384xf32>
    %131 = arith.mulf %128, %130 : vector<4x384xf32>
    %132 = arith.addf %126, %131 : vector<4x384xf32>
    %c0_73 = arith.constant 0 : index
    %c0_74 = arith.constant 0 : index
    %c73 = arith.constant 73 : index
    %133 = vector.load %arg2[%c0_73, %c0_74, %c73] : memref<1x4x640xf32, #tpu.memory_space<vmem>>, vector<1x4x384xf32>
    %134 = vector.shape_cast %133 : vector<1x4x384xf32> to vector<4x384xf32>
    %c0_75 = arith.constant 0 : index
    %c22 = arith.constant 22 : index
    %135 = vector.load %arg3[%c0_75, %c22] : memref<4x49xf32, #tpu.memory_space<vmem>>, vector<4x1xf32>
    %136 = vector.broadcast %135 : vector<4x1xf32> to vector<4x384xf32>
    %137 = arith.mulf %134, %136 : vector<4x384xf32>
    %138 = arith.addf %132, %137 : vector<4x384xf32>
    %c0_76 = arith.constant 0 : index
    %c0_77 = arith.constant 0 : index
    %c74 = arith.constant 74 : index
    %139 = vector.load %arg2[%c0_76, %c0_77, %c74] : memref<1x4x640xf32, #tpu.memory_space<vmem>>, vector<1x4x384xf32>
    %140 = vector.shape_cast %139 : vector<1x4x384xf32> to vector<4x384xf32>
    %c0_78 = arith.constant 0 : index
    %c23 = arith.constant 23 : index
    %141 = vector.load %arg3[%c0_78, %c23] : memref<4x49xf32, #tpu.memory_space<vmem>>, vector<4x1xf32>
    %142 = vector.broadcast %141 : vector<4x1xf32> to vector<4x384xf32>
    %143 = arith.mulf %140, %142 : vector<4x384xf32>
    %144 = arith.addf %138, %143 : vector<4x384xf32>
    %c0_79 = arith.constant 0 : index
    %c0_80 = arith.constant 0 : index
    %c75 = arith.constant 75 : index
    %145 = vector.load %arg2[%c0_79, %c0_80, %c75] : memref<1x4x640xf32, #tpu.memory_space<vmem>>, vector<1x4x384xf32>
    %146 = vector.shape_cast %145 : vector<1x4x384xf32> to vector<4x384xf32>
    %c0_81 = arith.constant 0 : index
    %c24_82 = arith.constant 24 : index
    %147 = vector.load %arg3[%c0_81, %c24_82] : memref<4x49xf32, #tpu.memory_space<vmem>>, vector<4x1xf32>
    %148 = vector.broadcast %147 : vector<4x1xf32> to vector<4x384xf32>
    %149 = arith.mulf %146, %148 : vector<4x384xf32>
    %150 = arith.addf %144, %149 : vector<4x384xf32>
    %c0_83 = arith.constant 0 : index
    %c0_84 = arith.constant 0 : index
    %c76 = arith.constant 76 : index
    %151 = vector.load %arg2[%c0_83, %c0_84, %c76] : memref<1x4x640xf32, #tpu.memory_space<vmem>>, vector<1x4x384xf32>
    %152 = vector.shape_cast %151 : vector<1x4x384xf32> to vector<4x384xf32>
    %c0_85 = arith.constant 0 : index
    %c25_86 = arith.constant 25 : index
    %153 = vector.load %arg3[%c0_85, %c25_86] : memref<4x49xf32, #tpu.memory_space<vmem>>, vector<4x1xf32>
    %154 = vector.broadcast %153 : vector<4x1xf32> to vector<4x384xf32>
    %155 = arith.mulf %152, %154 : vector<4x384xf32>
    %156 = arith.addf %150, %155 : vector<4x384xf32>
    %c0_87 = arith.constant 0 : index
    %c0_88 = arith.constant 0 : index
    %c77 = arith.constant 77 : index
    %157 = vector.load %arg2[%c0_87, %c0_88, %c77] : memref<1x4x640xf32, #tpu.memory_space<vmem>>, vector<1x4x384xf32>
    %158 = vector.shape_cast %157 : vector<1x4x384xf32> to vector<4x384xf32>
    %c0_89 = arith.constant 0 : index
    %c26_90 = arith.constant 26 : index
    %159 = vector.load %arg3[%c0_89, %c26_90] : memref<4x49xf32, #tpu.memory_space<vmem>>, vector<4x1xf32>
    %160 = vector.broadcast %159 : vector<4x1xf32> to vector<4x384xf32>
    %161 = arith.mulf %158, %160 : vector<4x384xf32>
    %162 = arith.addf %156, %161 : vector<4x384xf32>
    %c0_91 = arith.constant 0 : index
    %c0_92 = arith.constant 0 : index
    %c78 = arith.constant 78 : index
    %163 = vector.load %arg2[%c0_91, %c0_92, %c78] : memref<1x4x640xf32, #tpu.memory_space<vmem>>, vector<1x4x384xf32>
    %164 = vector.shape_cast %163 : vector<1x4x384xf32> to vector<4x384xf32>
    %c0_93 = arith.constant 0 : index
    %c27_94 = arith.constant 27 : index
    %165 = vector.load %arg3[%c0_93, %c27_94] : memref<4x49xf32, #tpu.memory_space<vmem>>, vector<4x1xf32>
    %166 = vector.broadcast %165 : vector<4x1xf32> to vector<4x384xf32>
    %167 = arith.mulf %164, %166 : vector<4x384xf32>
    %168 = arith.addf %162, %167 : vector<4x384xf32>
    %c0_95 = arith.constant 0 : index
    %c0_96 = arith.constant 0 : index
    %c96 = arith.constant 96 : index
    %169 = vector.load %arg2[%c0_95, %c0_96, %c96] : memref<1x4x640xf32, #tpu.memory_space<vmem>>, vector<1x4x384xf32>
    %170 = vector.shape_cast %169 : vector<1x4x384xf32> to vector<4x384xf32>
    %c0_97 = arith.constant 0 : index
    %c28_98 = arith.constant 28 : index
    %171 = vector.load %arg3[%c0_97, %c28_98] : memref<4x49xf32, #tpu.memory_space<vmem>>, vector<4x1xf32>
    %172 = vector.broadcast %171 : vector<4x1xf32> to vector<4x384xf32>
    %173 = arith.mulf %170, %172 : vector<4x384xf32>
    %174 = arith.addf %168, %173 : vector<4x384xf32>
    %c0_99 = arith.constant 0 : index
    %c0_100 = arith.constant 0 : index
    %c97 = arith.constant 97 : index
    %175 = vector.load %arg2[%c0_99, %c0_100, %c97] : memref<1x4x640xf32, #tpu.memory_space<vmem>>, vector<1x4x384xf32>
    %176 = vector.shape_cast %175 : vector<1x4x384xf32> to vector<4x384xf32>
    %c0_101 = arith.constant 0 : index
    %c29_102 = arith.constant 29 : index
    %177 = vector.load %arg3[%c0_101, %c29_102] : memref<4x49xf32, #tpu.memory_space<vmem>>, vector<4x1xf32>
    %178 = vector.broadcast %177 : vector<4x1xf32> to vector<4x384xf32>
    %179 = arith.mulf %176, %178 : vector<4x384xf32>
    %180 = arith.addf %174, %179 : vector<4x384xf32>
    %c0_103 = arith.constant 0 : index
    %c0_104 = arith.constant 0 : index
    %c98 = arith.constant 98 : index
    %181 = vector.load %arg2[%c0_103, %c0_104, %c98] : memref<1x4x640xf32, #tpu.memory_space<vmem>>, vector<1x4x384xf32>
    %182 = vector.shape_cast %181 : vector<1x4x384xf32> to vector<4x384xf32>
    %c0_105 = arith.constant 0 : index
    %c30_106 = arith.constant 30 : index
    %183 = vector.load %arg3[%c0_105, %c30_106] : memref<4x49xf32, #tpu.memory_space<vmem>>, vector<4x1xf32>
    %184 = vector.broadcast %183 : vector<4x1xf32> to vector<4x384xf32>
    %185 = arith.mulf %182, %184 : vector<4x384xf32>
    %186 = arith.addf %180, %185 : vector<4x384xf32>
    %c0_107 = arith.constant 0 : index
    %c0_108 = arith.constant 0 : index
    %c99 = arith.constant 99 : index
    %187 = vector.load %arg2[%c0_107, %c0_108, %c99] : memref<1x4x640xf32, #tpu.memory_space<vmem>>, vector<1x4x384xf32>
    %188 = vector.shape_cast %187 : vector<1x4x384xf32> to vector<4x384xf32>
    %c0_109 = arith.constant 0 : index
    %c31 = arith.constant 31 : index
    %189 = vector.load %arg3[%c0_109, %c31] : memref<4x49xf32, #tpu.memory_space<vmem>>, vector<4x1xf32>
    %190 = vector.broadcast %189 : vector<4x1xf32> to vector<4x384xf32>
    %191 = arith.mulf %188, %190 : vector<4x384xf32>
    %192 = arith.addf %186, %191 : vector<4x384xf32>
    %c0_110 = arith.constant 0 : index
    %c0_111 = arith.constant 0 : index
    %c100 = arith.constant 100 : index
    %193 = vector.load %arg2[%c0_110, %c0_111, %c100] : memref<1x4x640xf32, #tpu.memory_space<vmem>>, vector<1x4x384xf32>
    %194 = vector.shape_cast %193 : vector<1x4x384xf32> to vector<4x384xf32>
    %c0_112 = arith.constant 0 : index
    %c32 = arith.constant 32 : index
    %195 = vector.load %arg3[%c0_112, %c32] : memref<4x49xf32, #tpu.memory_space<vmem>>, vector<4x1xf32>
    %196 = vector.broadcast %195 : vector<4x1xf32> to vector<4x384xf32>
    %197 = arith.mulf %194, %196 : vector<4x384xf32>
    %198 = arith.addf %192, %197 : vector<4x384xf32>
    %c0_113 = arith.constant 0 : index
    %c0_114 = arith.constant 0 : index
    %c101 = arith.constant 101 : index
    %199 = vector.load %arg2[%c0_113, %c0_114, %c101] : memref<1x4x640xf32, #tpu.memory_space<vmem>>, vector<1x4x384xf32>
    %200 = vector.shape_cast %199 : vector<1x4x384xf32> to vector<4x384xf32>
    %c0_115 = arith.constant 0 : index
    %c33 = arith.constant 33 : index
    %201 = vector.load %arg3[%c0_115, %c33] : memref<4x49xf32, #tpu.memory_space<vmem>>, vector<4x1xf32>
    %202 = vector.broadcast %201 : vector<4x1xf32> to vector<4x384xf32>
    %203 = arith.mulf %200, %202 : vector<4x384xf32>
    %204 = arith.addf %198, %203 : vector<4x384xf32>
    %c0_116 = arith.constant 0 : index
    %c0_117 = arith.constant 0 : index
    %c102 = arith.constant 102 : index
    %205 = vector.load %arg2[%c0_116, %c0_117, %c102] : memref<1x4x640xf32, #tpu.memory_space<vmem>>, vector<1x4x384xf32>
    %206 = vector.shape_cast %205 : vector<1x4x384xf32> to vector<4x384xf32>
    %c0_118 = arith.constant 0 : index
    %c34 = arith.constant 34 : index
    %207 = vector.load %arg3[%c0_118, %c34] : memref<4x49xf32, #tpu.memory_space<vmem>>, vector<4x1xf32>
    %208 = vector.broadcast %207 : vector<4x1xf32> to vector<4x384xf32>
    %209 = arith.mulf %206, %208 : vector<4x384xf32>
    %210 = arith.addf %204, %209 : vector<4x384xf32>
    %c0_119 = arith.constant 0 : index
    %c0_120 = arith.constant 0 : index
    %c120 = arith.constant 120 : index
    %211 = vector.load %arg2[%c0_119, %c0_120, %c120] : memref<1x4x640xf32, #tpu.memory_space<vmem>>, vector<1x4x384xf32>
    %212 = vector.shape_cast %211 : vector<1x4x384xf32> to vector<4x384xf32>
    %c0_121 = arith.constant 0 : index
    %c35 = arith.constant 35 : index
    %213 = vector.load %arg3[%c0_121, %c35] : memref<4x49xf32, #tpu.memory_space<vmem>>, vector<4x1xf32>
    %214 = vector.broadcast %213 : vector<4x1xf32> to vector<4x384xf32>
    %215 = arith.mulf %212, %214 : vector<4x384xf32>
    %216 = arith.addf %210, %215 : vector<4x384xf32>
    %c0_122 = arith.constant 0 : index
    %c0_123 = arith.constant 0 : index
    %c121 = arith.constant 121 : index
    %217 = vector.load %arg2[%c0_122, %c0_123, %c121] : memref<1x4x640xf32, #tpu.memory_space<vmem>>, vector<1x4x384xf32>
    %218 = vector.shape_cast %217 : vector<1x4x384xf32> to vector<4x384xf32>
    %c0_124 = arith.constant 0 : index
    %c36 = arith.constant 36 : index
    %219 = vector.load %arg3[%c0_124, %c36] : memref<4x49xf32, #tpu.memory_space<vmem>>, vector<4x1xf32>
    %220 = vector.broadcast %219 : vector<4x1xf32> to vector<4x384xf32>
    %221 = arith.mulf %218, %220 : vector<4x384xf32>
    %222 = arith.addf %216, %221 : vector<4x384xf32>
    %c0_125 = arith.constant 0 : index
    %c0_126 = arith.constant 0 : index
    %c122 = arith.constant 122 : index
    %223 = vector.load %arg2[%c0_125, %c0_126, %c122] : memref<1x4x640xf32, #tpu.memory_space<vmem>>, vector<1x4x384xf32>
    %224 = vector.shape_cast %223 : vector<1x4x384xf32> to vector<4x384xf32>
    %c0_127 = arith.constant 0 : index
    %c37 = arith.constant 37 : index
    %225 = vector.load %arg3[%c0_127, %c37] : memref<4x49xf32, #tpu.memory_space<vmem>>, vector<4x1xf32>
    %226 = vector.broadcast %225 : vector<4x1xf32> to vector<4x384xf32>
    %227 = arith.mulf %224, %226 : vector<4x384xf32>
    %228 = arith.addf %222, %227 : vector<4x384xf32>
    %c0_128 = arith.constant 0 : index
    %c0_129 = arith.constant 0 : index
    %c123 = arith.constant 123 : index
    %229 = vector.load %arg2[%c0_128, %c0_129, %c123] : memref<1x4x640xf32, #tpu.memory_space<vmem>>, vector<1x4x384xf32>
    %230 = vector.shape_cast %229 : vector<1x4x384xf32> to vector<4x384xf32>
    %c0_130 = arith.constant 0 : index
    %c38 = arith.constant 38 : index
    %231 = vector.load %arg3[%c0_130, %c38] : memref<4x49xf32, #tpu.memory_space<vmem>>, vector<4x1xf32>
    %232 = vector.broadcast %231 : vector<4x1xf32> to vector<4x384xf32>
    %233 = arith.mulf %230, %232 : vector<4x384xf32>
    %234 = arith.addf %228, %233 : vector<4x384xf32>
    %c0_131 = arith.constant 0 : index
    %c0_132 = arith.constant 0 : index
    %c124 = arith.constant 124 : index
    %235 = vector.load %arg2[%c0_131, %c0_132, %c124] : memref<1x4x640xf32, #tpu.memory_space<vmem>>, vector<1x4x384xf32>
    %236 = vector.shape_cast %235 : vector<1x4x384xf32> to vector<4x384xf32>
    %c0_133 = arith.constant 0 : index
    %c39 = arith.constant 39 : index
    %237 = vector.load %arg3[%c0_133, %c39] : memref<4x49xf32, #tpu.memory_space<vmem>>, vector<4x1xf32>
    %238 = vector.broadcast %237 : vector<4x1xf32> to vector<4x384xf32>
    %239 = arith.mulf %236, %238 : vector<4x384xf32>
    %240 = arith.addf %234, %239 : vector<4x384xf32>
    %c0_134 = arith.constant 0 : index
    %c0_135 = arith.constant 0 : index
    %c125 = arith.constant 125 : index
    %241 = vector.load %arg2[%c0_134, %c0_135, %c125] : memref<1x4x640xf32, #tpu.memory_space<vmem>>, vector<1x4x384xf32>
    %242 = vector.shape_cast %241 : vector<1x4x384xf32> to vector<4x384xf32>
    %c0_136 = arith.constant 0 : index
    %c40 = arith.constant 40 : index
    %243 = vector.load %arg3[%c0_136, %c40] : memref<4x49xf32, #tpu.memory_space<vmem>>, vector<4x1xf32>
    %244 = vector.broadcast %243 : vector<4x1xf32> to vector<4x384xf32>
    %245 = arith.mulf %242, %244 : vector<4x384xf32>
    %246 = arith.addf %240, %245 : vector<4x384xf32>
    %c0_137 = arith.constant 0 : index
    %c0_138 = arith.constant 0 : index
    %c126 = arith.constant 126 : index
    %247 = vector.load %arg2[%c0_137, %c0_138, %c126] : memref<1x4x640xf32, #tpu.memory_space<vmem>>, vector<1x4x384xf32>
    %248 = vector.shape_cast %247 : vector<1x4x384xf32> to vector<4x384xf32>
    %c0_139 = arith.constant 0 : index
    %c41 = arith.constant 41 : index
    %249 = vector.load %arg3[%c0_139, %c41] : memref<4x49xf32, #tpu.memory_space<vmem>>, vector<4x1xf32>
    %250 = vector.broadcast %249 : vector<4x1xf32> to vector<4x384xf32>
    %251 = arith.mulf %248, %250 : vector<4x384xf32>
    %252 = arith.addf %246, %251 : vector<4x384xf32>
    %c0_140 = arith.constant 0 : index
    %c0_141 = arith.constant 0 : index
    %c144 = arith.constant 144 : index
    %253 = vector.load %arg2[%c0_140, %c0_141, %c144] : memref<1x4x640xf32, #tpu.memory_space<vmem>>, vector<1x4x384xf32>
    %254 = vector.shape_cast %253 : vector<1x4x384xf32> to vector<4x384xf32>
    %c0_142 = arith.constant 0 : index
    %c42 = arith.constant 42 : index
    %255 = vector.load %arg3[%c0_142, %c42] : memref<4x49xf32, #tpu.memory_space<vmem>>, vector<4x1xf32>
    %256 = vector.broadcast %255 : vector<4x1xf32> to vector<4x384xf32>
    %257 = arith.mulf %254, %256 : vector<4x384xf32>
    %258 = arith.addf %252, %257 : vector<4x384xf32>
    %c0_143 = arith.constant 0 : index
    %c0_144 = arith.constant 0 : index
    %c145 = arith.constant 145 : index
    %259 = vector.load %arg2[%c0_143, %c0_144, %c145] : memref<1x4x640xf32, #tpu.memory_space<vmem>>, vector<1x4x384xf32>
    %260 = vector.shape_cast %259 : vector<1x4x384xf32> to vector<4x384xf32>
    %c0_145 = arith.constant 0 : index
    %c43 = arith.constant 43 : index
    %261 = vector.load %arg3[%c0_145, %c43] : memref<4x49xf32, #tpu.memory_space<vmem>>, vector<4x1xf32>
    %262 = vector.broadcast %261 : vector<4x1xf32> to vector<4x384xf32>
    %263 = arith.mulf %260, %262 : vector<4x384xf32>
    %264 = arith.addf %258, %263 : vector<4x384xf32>
    %c0_146 = arith.constant 0 : index
    %c0_147 = arith.constant 0 : index
    %c146 = arith.constant 146 : index
    %265 = vector.load %arg2[%c0_146, %c0_147, %c146] : memref<1x4x640xf32, #tpu.memory_space<vmem>>, vector<1x4x384xf32>
    %266 = vector.shape_cast %265 : vector<1x4x384xf32> to vector<4x384xf32>
    %c0_148 = arith.constant 0 : index
    %c44 = arith.constant 44 : index
    %267 = vector.load %arg3[%c0_148, %c44] : memref<4x49xf32, #tpu.memory_space<vmem>>, vector<4x1xf32>
    %268 = vector.broadcast %267 : vector<4x1xf32> to vector<4x384xf32>
    %269 = arith.mulf %266, %268 : vector<4x384xf32>
    %270 = arith.addf %264, %269 : vector<4x384xf32>
    %c0_149 = arith.constant 0 : index
    %c0_150 = arith.constant 0 : index
    %c147 = arith.constant 147 : index
    %271 = vector.load %arg2[%c0_149, %c0_150, %c147] : memref<1x4x640xf32, #tpu.memory_space<vmem>>, vector<1x4x384xf32>
    %272 = vector.shape_cast %271 : vector<1x4x384xf32> to vector<4x384xf32>
    %c0_151 = arith.constant 0 : index
    %c45 = arith.constant 45 : index
    %273 = vector.load %arg3[%c0_151, %c45] : memref<4x49xf32, #tpu.memory_space<vmem>>, vector<4x1xf32>
    %274 = vector.broadcast %273 : vector<4x1xf32> to vector<4x384xf32>
    %275 = arith.mulf %272, %274 : vector<4x384xf32>
    %276 = arith.addf %270, %275 : vector<4x384xf32>
    %c0_152 = arith.constant 0 : index
    %c0_153 = arith.constant 0 : index
    %c148 = arith.constant 148 : index
    %277 = vector.load %arg2[%c0_152, %c0_153, %c148] : memref<1x4x640xf32, #tpu.memory_space<vmem>>, vector<1x4x384xf32>
    %278 = vector.shape_cast %277 : vector<1x4x384xf32> to vector<4x384xf32>
    %c0_154 = arith.constant 0 : index
    %c46 = arith.constant 46 : index
    %279 = vector.load %arg3[%c0_154, %c46] : memref<4x49xf32, #tpu.memory_space<vmem>>, vector<4x1xf32>
    %280 = vector.broadcast %279 : vector<4x1xf32> to vector<4x384xf32>
    %281 = arith.mulf %278, %280 : vector<4x384xf32>
    %282 = arith.addf %276, %281 : vector<4x384xf32>
    %c0_155 = arith.constant 0 : index
    %c0_156 = arith.constant 0 : index
    %c149 = arith.constant 149 : index
    %283 = vector.load %arg2[%c0_155, %c0_156, %c149] : memref<1x4x640xf32, #tpu.memory_space<vmem>>, vector<1x4x384xf32>
    %284 = vector.shape_cast %283 : vector<1x4x384xf32> to vector<4x384xf32>
    %c0_157 = arith.constant 0 : index
    %c47 = arith.constant 47 : index
    %285 = vector.load %arg3[%c0_157, %c47] : memref<4x49xf32, #tpu.memory_space<vmem>>, vector<4x1xf32>
    %286 = vector.broadcast %285 : vector<4x1xf32> to vector<4x384xf32>
    %287 = arith.mulf %284, %286 : vector<4x384xf32>
    %288 = arith.addf %282, %287 : vector<4x384xf32>
    %c0_158 = arith.constant 0 : index
    %c0_159 = arith.constant 0 : index
    %c150 = arith.constant 150 : index
    %289 = vector.load %arg2[%c0_158, %c0_159, %c150] : memref<1x4x640xf32, #tpu.memory_space<vmem>>, vector<1x4x384xf32>
    %290 = vector.shape_cast %289 : vector<1x4x384xf32> to vector<4x384xf32>
    %c0_160 = arith.constant 0 : index
    %c48_161 = arith.constant 48 : index
    %291 = vector.load %arg3[%c0_160, %c48_161] : memref<4x49xf32, #tpu.memory_space<vmem>>, vector<4x1xf32>
    %292 = vector.broadcast %291 : vector<4x1xf32> to vector<4x384xf32>
    %293 = arith.mulf %290, %292 : vector<4x384xf32>
    %294 = arith.addf %288, %293 : vector<4x384xf32>
    %c0_162 = arith.constant 0 : index
    %c0_163 = arith.constant 0 : index
    %c0_164 = arith.constant 0 : index
    %295 = vector.load %arg1[%c0_162, %c0_163, %c0_164] : memref<1x4x1xf32, #tpu.memory_space<vmem>>, vector<1x4x1xf32>
    %296 = vector.shape_cast %295 : vector<1x4x1xf32> to vector<4x1xf32>
    %297 = vector.broadcast %296 : vector<4x1xf32> to vector<4x384xf32>
    %298 = arith.addf %294, %297 : vector<4x384xf32>
    %299 = vector.extract_strided_slice %298 {offsets = [0, 0], sizes = [1, 384], strides = [1, 1]} : vector<4x384xf32> to vector<1x384xf32>
    %300 = vector.extract_strided_slice %298 {offsets = [1, 0], sizes = [1, 384], strides = [1, 1]} : vector<4x384xf32> to vector<1x384xf32>
    %301 = arith.addf %299, %300 : vector<1x384xf32>
    %302 = vector.extract_strided_slice %298 {offsets = [2, 0], sizes = [1, 384], strides = [1, 1]} : vector<4x384xf32> to vector<1x384xf32>
    %303 = arith.addf %301, %302 : vector<1x384xf32>
    %304 = vector.extract_strided_slice %298 {offsets = [3, 0], sizes = [1, 384], strides = [1, 1]} : vector<4x384xf32> to vector<1x384xf32>
    %305 = arith.addf %303, %304 : vector<1x384xf32>
    %cst_165 = arith.constant 2.500000e-01 : f32
    %306 = vector.broadcast %cst_165 : f32 to vector<1x384xf32>
    %307 = arith.mulf %305, %306 : vector<1x384xf32>
    %308 = vector.broadcast %307 : vector<1x384xf32> to vector<4x384xf32>
    %309 = arith.subf %298, %308 : vector<4x384xf32>
    %310 = arith.mulf %309, %309 : vector<4x384xf32>
    %311 = vector.extract_strided_slice %310 {offsets = [0, 0], sizes = [1, 384], strides = [1, 1]} : vector<4x384xf32> to vector<1x384xf32>
    %312 = vector.extract_strided_slice %310 {offsets = [1, 0], sizes = [1, 384], strides = [1, 1]} : vector<4x384xf32> to vector<1x384xf32>
    %313 = arith.addf %311, %312 : vector<1x384xf32>
    %314 = vector.extract_strided_slice %310 {offsets = [2, 0], sizes = [1, 384], strides = [1, 1]} : vector<4x384xf32> to vector<1x384xf32>
    %315 = arith.addf %313, %314 : vector<1x384xf32>
    %316 = vector.extract_strided_slice %310 {offsets = [3, 0], sizes = [1, 384], strides = [1, 1]} : vector<4x384xf32> to vector<1x384xf32>
    %317 = arith.addf %315, %316 : vector<1x384xf32>
    %cst_166 = arith.constant 2.500000e-01 : f32
    %318 = vector.broadcast %cst_166 : f32 to vector<1x384xf32>
    %319 = arith.mulf %317, %318 : vector<1x384xf32>
    %cst_167 = arith.constant 9.99999974E-6 : f32
    %320 = vector.broadcast %cst_167 : f32 to vector<1x384xf32>
    %321 = arith.addf %319, %320 : vector<1x384xf32>
    %322 = math.rsqrt %321 : vector<1x384xf32>
    %323 = vector.broadcast %322 : vector<1x384xf32> to vector<4x384xf32>
    %324 = arith.mulf %309, %323 : vector<4x384xf32>
    %c0_168 = arith.constant 0 : index
    %c0_169 = arith.constant 0 : index
    %325 = vector.load %arg4[%c0_168, %c0_169] : memref<4x1xf32, #tpu.memory_space<vmem>>, vector<4x1xf32>
    %326 = vector.broadcast %325 : vector<4x1xf32> to vector<4x384xf32>
    %327 = arith.mulf %324, %326 : vector<4x384xf32>
    %c0_170 = arith.constant 0 : index
    %c0_171 = arith.constant 0 : index
    %328 = vector.load %arg5[%c0_170, %c0_171] : memref<4x1xf32, #tpu.memory_space<vmem>>, vector<4x1xf32>
    %329 = vector.broadcast %328 : vector<4x1xf32> to vector<4x384xf32>
    %330 = arith.addf %327, %329 : vector<4x384xf32>
    %c0_172 = arith.constant 0 : index
    %c0_173 = arith.constant 0 : index
    %331 = vector.load %arg6[%c0_172, %c0_173] : memref<1x384xf32, #tpu.memory_space<vmem>>, vector<1x384xf32>
    %332 = vector.broadcast %331 : vector<1x384xf32> to vector<4x384xf32>
    %333 = arith.mulf %330, %332 : vector<4x384xf32>
    %cst_174 = arith.constant 0.000000e+00 : f32
    %334 = vector.broadcast %cst_174 : f32 to vector<4x128xf32>
    %c0_175 = arith.constant 0 : index
    %c0_176 = arith.constant 0 : index
    %335 = vector.load %arg13[%c0_175, %c0_176] : memref<4x640xf32, #tpu.memory_space<vmem>>, vector<4x128xf32>
    tpu.vector_store %arg13[%c0_175, %c0_176], %334 {strides = array<i32>} : memref<4x640xf32, #tpu.memory_space<vmem>>, vector<4x128xf32>,
    %cst_177 = arith.constant 0.000000e+00 : f32
    %336 = vector.broadcast %cst_177 : f32 to vector<4x128xf32>
    %c0_178 = arith.constant 0 : index
    %c512 = arith.constant 512 : index
    %337 = vector.load %arg13[%c0_178, %c512] : memref<4x640xf32, #tpu.memory_space<vmem>>, vector<4x128xf32>
    tpu.vector_store %arg13[%c0_178, %c512], %336 {strides = array<i32>} : memref<4x640xf32, #tpu.memory_space<vmem>>, vector<4x128xf32>,
    %c0_179 = arith.constant 0 : index
    %c128 = arith.constant 128 : index
    %338 = vector.load %arg13[%c0_179, %c128] : memref<4x640xf32, #tpu.memory_space<vmem>>, vector<4x384xf32>
    tpu.vector_store %arg13[%c0_179, %c128], %333 {strides = array<i32>} : memref<4x640xf32, #tpu.memory_space<vmem>>, vector<4x384xf32>,
    %cst_180 = arith.constant 0.000000e+00 : f32
    %339 = vector.broadcast %cst_180 : f32 to vector<8x384xf32>
    %c0_181 = arith.constant 0 : index
    %c0_182 = arith.constant 0 : index
    %c0_183 = arith.constant 0 : index
    %340 = vector.load %arg7[%c0_181, %c0_182, %c0_183] : memref<9x8x4xf32, #tpu.memory_space<vmem>>, vector<1x8x4xf32>
    %341 = vector.shape_cast %340 : vector<1x8x4xf32> to vector<8x4xf32>
    %c0_184 = arith.constant 0 : index
    %c103 = arith.constant 103 : index
    %342 = vector.load %arg13[%c0_184, %c103] : memref<4x640xf32, #tpu.memory_space<vmem>>, vector<4x384xf32>
    %cst_185 = arith.constant dense<0.000000e+00> : vector<8x384xf32>
    %343 = tpu.matmul %341, %342, %cst_185 {dimension_numbers = #tpu.dot_dimension_numbers<[1], [0], [0], [1], [0, 0, 1, 1], [], []>} : vector<8x4xf32>, vector<4x384xf32>, vector<8x384xf32> -> vector<8x384xf32>
    %344 = arith.addf %339, %343 : vector<8x384xf32>
    %c1_186 = arith.constant 1 : index
    %c0_187 = arith.constant 0 : index
    %c0_188 = arith.constant 0 : index
    %345 = vector.load %arg7[%c1_186, %c0_187, %c0_188] : memref<9x8x4xf32, #tpu.memory_space<vmem>>, vector<1x8x4xf32>
    %346 = vector.shape_cast %345 : vector<1x8x4xf32> to vector<8x4xf32>
    %c0_189 = arith.constant 0 : index
    %c104 = arith.constant 104 : index
    %347 = vector.load %arg13[%c0_189, %c104] : memref<4x640xf32, #tpu.memory_space<vmem>>, vector<4x384xf32>
    %cst_190 = arith.constant dense<0.000000e+00> : vector<8x384xf32>
    %348 = tpu.matmul %346, %347, %cst_190 {dimension_numbers = #tpu.dot_dimension_numbers<[1], [0], [0], [1], [0, 0, 1, 1], [], []>} : vector<8x4xf32>, vector<4x384xf32>, vector<8x384xf32> -> vector<8x384xf32>
    %349 = arith.addf %344, %348 : vector<8x384xf32>
    %c2_191 = arith.constant 2 : index
    %c0_192 = arith.constant 0 : index
    %c0_193 = arith.constant 0 : index
    %350 = vector.load %arg7[%c2_191, %c0_192, %c0_193] : memref<9x8x4xf32, #tpu.memory_space<vmem>>, vector<1x8x4xf32>
    %351 = vector.shape_cast %350 : vector<1x8x4xf32> to vector<8x4xf32>
    %c0_194 = arith.constant 0 : index
    %c105 = arith.constant 105 : index
    %352 = vector.load %arg13[%c0_194, %c105] : memref<4x640xf32, #tpu.memory_space<vmem>>, vector<4x384xf32>
    %cst_195 = arith.constant dense<0.000000e+00> : vector<8x384xf32>
    %353 = tpu.matmul %351, %352, %cst_195 {dimension_numbers = #tpu.dot_dimension_numbers<[1], [0], [0], [1], [0, 0, 1, 1], [], []>} : vector<8x4xf32>, vector<4x384xf32>, vector<8x384xf32> -> vector<8x384xf32>
    %354 = arith.addf %349, %353 : vector<8x384xf32>
    %c3_196 = arith.constant 3 : index
    %c0_197 = arith.constant 0 : index
    %c0_198 = arith.constant 0 : index
    %355 = vector.load %arg7[%c3_196, %c0_197, %c0_198] : memref<9x8x4xf32, #tpu.memory_space<vmem>>, vector<1x8x4xf32>
    %356 = vector.shape_cast %355 : vector<1x8x4xf32> to vector<8x4xf32>
    %c0_199 = arith.constant 0 : index
    %c127 = arith.constant 127 : index
    %357 = vector.load %arg13[%c0_199, %c127] : memref<4x640xf32, #tpu.memory_space<vmem>>, vector<4x384xf32>
    %cst_200 = arith.constant dense<0.000000e+00> : vector<8x384xf32>
    %358 = tpu.matmul %356, %357, %cst_200 {dimension_numbers = #tpu.dot_dimension_numbers<[1], [0], [0], [1], [0, 0, 1, 1], [], []>} : vector<8x4xf32>, vector<4x384xf32>, vector<8x384xf32> -> vector<8x384xf32>
    %359 = arith.addf %354, %358 : vector<8x384xf32>
    %c4_201 = arith.constant 4 : index
    %c0_202 = arith.constant 0 : index
    %c0_203 = arith.constant 0 : index
    %360 = vector.load %arg7[%c4_201, %c0_202, %c0_203] : memref<9x8x4xf32, #tpu.memory_space<vmem>>, vector<1x8x4xf32>
    %361 = vector.shape_cast %360 : vector<1x8x4xf32> to vector<8x4xf32>
    %c0_204 = arith.constant 0 : index
    %c128_205 = arith.constant 128 : index
    %362 = vector.load %arg13[%c0_204, %c128_205] : memref<4x640xf32, #tpu.memory_space<vmem>>, vector<4x384xf32>
    %cst_206 = arith.constant dense<0.000000e+00> : vector<8x384xf32>
    %363 = tpu.matmul %361, %362, %cst_206 {dimension_numbers = #tpu.dot_dimension_numbers<[1], [0], [0], [1], [0, 0, 1, 1], [], []>} : vector<8x4xf32>, vector<4x384xf32>, vector<8x384xf32> -> vector<8x384xf32>
    %364 = arith.addf %359, %363 : vector<8x384xf32>
    %c5_207 = arith.constant 5 : index
    %c0_208 = arith.constant 0 : index
    %c0_209 = arith.constant 0 : index
    %365 = vector.load %arg7[%c5_207, %c0_208, %c0_209] : memref<9x8x4xf32, #tpu.memory_space<vmem>>, vector<1x8x4xf32>
    %366 = vector.shape_cast %365 : vector<1x8x4xf32> to vector<8x4xf32>
    %c0_210 = arith.constant 0 : index
    %c129 = arith.constant 129 : index
    %367 = vector.load %arg13[%c0_210, %c129] : memref<4x640xf32, #tpu.memory_space<vmem>>, vector<4x384xf32>
    %cst_211 = arith.constant dense<0.000000e+00> : vector<8x384xf32>
    %368 = tpu.matmul %366, %367, %cst_211 {dimension_numbers = #tpu.dot_dimension_numbers<[1], [0], [0], [1], [0, 0, 1, 1], [], []>} : vector<8x4xf32>, vector<4x384xf32>, vector<8x384xf32> -> vector<8x384xf32>
    %369 = arith.addf %364, %368 : vector<8x384xf32>
    %c6_212 = arith.constant 6 : index
    %c0_213 = arith.constant 0 : index
    %c0_214 = arith.constant 0 : index
    %370 = vector.load %arg7[%c6_212, %c0_213, %c0_214] : memref<9x8x4xf32, #tpu.memory_space<vmem>>, vector<1x8x4xf32>
    %371 = vector.shape_cast %370 : vector<1x8x4xf32> to vector<8x4xf32>
    %c0_215 = arith.constant 0 : index
    %c151 = arith.constant 151 : index
    %372 = vector.load %arg13[%c0_215, %c151] : memref<4x640xf32, #tpu.memory_space<vmem>>, vector<4x384xf32>
    %cst_216 = arith.constant dense<0.000000e+00> : vector<8x384xf32>
    %373 = tpu.matmul %371, %372, %cst_216 {dimension_numbers = #tpu.dot_dimension_numbers<[1], [0], [0], [1], [0, 0, 1, 1], [], []>} : vector<8x4xf32>, vector<4x384xf32>, vector<8x384xf32> -> vector<8x384xf32>
    %374 = arith.addf %369, %373 : vector<8x384xf32>
    %c7_217 = arith.constant 7 : index
    %c0_218 = arith.constant 0 : index
    %c0_219 = arith.constant 0 : index
    %375 = vector.load %arg7[%c7_217, %c0_218, %c0_219] : memref<9x8x4xf32, #tpu.memory_space<vmem>>, vector<1x8x4xf32>
    %376 = vector.shape_cast %375 : vector<1x8x4xf32> to vector<8x4xf32>
    %c0_220 = arith.constant 0 : index
    %c152 = arith.constant 152 : index
    %377 = vector.load %arg13[%c0_220, %c152] : memref<4x640xf32, #tpu.memory_space<vmem>>, vector<4x384xf32>
    %cst_221 = arith.constant dense<0.000000e+00> : vector<8x384xf32>
    %378 = tpu.matmul %376, %377, %cst_221 {dimension_numbers = #tpu.dot_dimension_numbers<[1], [0], [0], [1], [0, 0, 1, 1], [], []>} : vector<8x4xf32>, vector<4x384xf32>, vector<8x384xf32> -> vector<8x384xf32>
    %379 = arith.addf %374, %378 : vector<8x384xf32>
    %c8_222 = arith.constant 8 : index
    %c0_223 = arith.constant 0 : index
    %c0_224 = arith.constant 0 : index
    %380 = vector.load %arg7[%c8_222, %c0_223, %c0_224] : memref<9x8x4xf32, #tpu.memory_space<vmem>>, vector<1x8x4xf32>
    %381 = vector.shape_cast %380 : vector<1x8x4xf32> to vector<8x4xf32>
    %c0_225 = arith.constant 0 : index
    %c153 = arith.constant 153 : index
    %382 = vector.load %arg13[%c0_225, %c153] : memref<4x640xf32, #tpu.memory_space<vmem>>, vector<4x384xf32>
    %cst_226 = arith.constant dense<0.000000e+00> : vector<8x384xf32>
    %383 = tpu.matmul %381, %382, %cst_226 {dimension_numbers = #tpu.dot_dimension_numbers<[1], [0], [0], [1], [0, 0, 1, 1], [], []>} : vector<8x4xf32>, vector<4x384xf32>, vector<8x384xf32> -> vector<8x384xf32>
    %384 = arith.addf %379, %383 : vector<8x384xf32>
    %c0_227 = arith.constant 0 : index
    %c0_228 = arith.constant 0 : index
    %385 = vector.load %arg8[%c0_227, %c0_228] : memref<8x1xf32, #tpu.memory_space<vmem>>, vector<8x1xf32>
    %386 = vector.broadcast %385 : vector<8x1xf32> to vector<8x384xf32>
    %387 = arith.addf %384, %386 : vector<8x384xf32>
    %cst_229 = arith.constant 5.000000e-01 : f32
    %388 = vector.broadcast %cst_229 : f32 to vector<8x384xf32>
    %389 = arith.mulf %388, %387 : vector<8x384xf32>
    %cst_230 = arith.constant 0.707106769 : f32
    %390 = vector.broadcast %cst_230 : f32 to vector<8x384xf32>
    %391 = arith.mulf %387, %390 : vector<8x384xf32>
    %392 = math.absf %391 : vector<8x384xf32>
    %cst_231 = arith.constant 0.327591091 : f32
    %393 = vector.broadcast %cst_231 : f32 to vector<8x384xf32>
    %394 = arith.mulf %393, %392 : vector<8x384xf32>
    %cst_232 = arith.constant 1.000000e+00 : f32
    %395 = vector.broadcast %cst_232 : f32 to vector<8x384xf32>
    %396 = arith.addf %395, %394 : vector<8x384xf32>
    %cst_233 = arith.constant 1.000000e+00 : f32
    %397 = vector.broadcast %cst_233 : f32 to vector<8x384xf32>
    %398 = arith.divf %397, %396 : vector<8x384xf32>
    %cst_234 = arith.constant 1.06140542 : f32
    %399 = vector.broadcast %cst_234 : f32 to vector<8x384xf32>
    %400 = arith.mulf %399, %398 : vector<8x384xf32>
    %cst_235 = arith.constant -1.45315206 : f32
    %401 = vector.broadcast %cst_235 : f32 to vector<8x384xf32>
    %402 = arith.addf %400, %401 : vector<8x384xf32>
    %403 = arith.mulf %402, %398 : vector<8x384xf32>
    %cst_236 = arith.constant 1.42141378 : f32
    %404 = vector.broadcast %cst_236 : f32 to vector<8x384xf32>
    %405 = arith.addf %403, %404 : vector<8x384xf32>
    %406 = arith.mulf %405, %398 : vector<8x384xf32>
    %cst_237 = arith.constant -0.284496725 : f32
    %407 = vector.broadcast %cst_237 : f32 to vector<8x384xf32>
    %408 = arith.addf %406, %407 : vector<8x384xf32>
    %409 = arith.mulf %408, %398 : vector<8x384xf32>
    %cst_238 = arith.constant 0.254829586 : f32
    %410 = vector.broadcast %cst_238 : f32 to vector<8x384xf32>
    %411 = arith.addf %409, %410 : vector<8x384xf32>
    %412 = arith.mulf %411, %398 : vector<8x384xf32>
    %cst_239 = arith.constant 0.000000e+00 : f32
    %413 = vector.broadcast %cst_239 : f32 to vector<8x384xf32>
    %414 = arith.subf %413, %392 : vector<8x384xf32>
    %415 = arith.mulf %414, %392 : vector<8x384xf32>
    %416 = math.exp %415 : vector<8x384xf32>
    %417 = arith.mulf %412, %416 : vector<8x384xf32>
    %cst_240 = arith.constant 1.000000e+00 : f32
    %418 = vector.broadcast %cst_240 : f32 to vector<8x384xf32>
    %419 = arith.subf %418, %417 : vector<8x384xf32>
    %cst_241 = arith.constant 0.000000e+00 : f32
    %420 = vector.broadcast %cst_241 : f32 to vector<8x384xf32>
    %421 = arith.cmpf oge, %391, %420 : vector<8x384xf32>
    %cst_242 = arith.constant 0.000000e+00 : f32
    %422 = vector.broadcast %cst_242 : f32 to vector<8x384xf32>
    %423 = arith.subf %422, %419 : vector<8x384xf32>
    %424 = arith.select %421, %419, %423 : vector<8x384xi1>, vector<8x384xf32>
    %cst_243 = arith.constant 1.000000e+00 : f32
    %425 = vector.broadcast %cst_243 : f32 to vector<8x384xf32>
    %426 = arith.addf %425, %424 : vector<8x384xf32>
    %427 = arith.mulf %389, %426 : vector<8x384xf32>
    %c0_244 = arith.constant 0 : index
    %c0_245 = arith.constant 0 : index
    %428 = vector.load %arg9[%c0_244, %c0_245] : memref<8x8xf32, #tpu.memory_space<vmem>>, vector<8x8xf32>
    %cst_246 = arith.constant dense<0.000000e+00> : vector<8x384xf32>
    %429 = tpu.matmul %428, %427, %cst_246 {dimension_numbers = #tpu.dot_dimension_numbers<[1], [0], [0], [1], [0, 0, 1, 1], [], []>} : vector<8x8xf32>, vector<8x384xf32>, vector<8x384xf32> -> vector<8x384xf32>
    %c0_247 = arith.constant 0 : index
    %c0_248 = arith.constant 0 : index
    %c75_249 = arith.constant 75 : index
    %430 = vector.load %arg2[%c0_247, %c0_248, %c75_249] : memref<1x4x640xf32, #tpu.memory_space<vmem>>, vector<1x4x384xf32>
    %431 = vector.shape_cast %430 : vector<1x4x384xf32> to vector<4x384xf32>
    %c0_250 = arith.constant 0 : index
    %c0_251 = arith.constant 0 : index
    %432 = vector.load %arg10[%c0_250, %c0_251] : memref<8x4xf32, #tpu.memory_space<vmem>>, vector<8x4xf32>
    %cst_252 = arith.constant dense<0.000000e+00> : vector<8x384xf32>
    %433 = tpu.matmul %432, %431, %cst_252 {dimension_numbers = #tpu.dot_dimension_numbers<[1], [0], [0], [1], [0, 0, 1, 1], [], []>} : vector<8x4xf32>, vector<4x384xf32>, vector<8x384xf32> -> vector<8x384xf32>
    %434 = arith.addf %429, %433 : vector<8x384xf32>
    %c0_253 = arith.constant 0 : index
    %c0_254 = arith.constant 0 : index
    %435 = vector.load %arg11[%c0_253, %c0_254] : memref<8x1xf32, #tpu.memory_space<vmem>>, vector<8x1xf32>
    %436 = vector.broadcast %435 : vector<8x1xf32> to vector<8x384xf32>
    %437 = arith.addf %434, %436 : vector<8x384xf32>
    %c0_255 = arith.constant 0 : index
    %c0_256 = arith.constant 0 : index
    %c0_257 = arith.constant 0 : index
    %438 = vector.load %arg12[%c0_255, %c0_256, %c0_257] : memref<1x8x384xf32, #tpu.memory_space<vmem>>, vector<1x8x384xf32>
    %439 = vector.shape_cast %438 : vector<1x8x384xf32> to vector<8x384xf32>
    %440 = vector.shape_cast %437 : vector<8x384xf32> to vector<1x8x384xf32>
    tpu.vector_store %arg12[%c0_255, %c0_256, %c0_257], %440 {strides = array<i32>} : memref<1x8x384xf32, #tpu.memory_space<vmem>>, vector<1x8x384xf32>,
    return
  }
  func.func @transform_0(%arg0: i32) -> (i32, i32, i32) {
    %c0_i32 = arith.constant 0 : i32
    %c0_i32_0 = arith.constant 0 : i32
    %c0_i32_1 = arith.constant 0 : i32
    return %arg0, %c0_i32, %c0_i32_0 : i32, i32, i32
  }
  func.func @transform_1(%arg0: i32) -> (i32, i32, i32) {
    %c0_i32 = arith.constant 0 : i32
    %c0_i32_0 = arith.constant 0 : i32
    %c0_i32_1 = arith.constant 0 : i32
    return %arg0, %c0_i32, %c0_i32_0 : i32, i32, i32
  }
  func.func @transform_2(%arg0: i32) -> (i32, i32) {
    %c0_i32 = arith.constant 0 : i32
    %c0_i32_0 = arith.constant 0 : i32
    %c0_i32_1 = arith.constant 0 : i32
    return %c0_i32, %c0_i32_0 : i32, i32
  }
  func.func @transform_3(%arg0: i32) -> (i32, i32) {
    %c0_i32 = arith.constant 0 : i32
    %c0_i32_0 = arith.constant 0 : i32
    %c0_i32_1 = arith.constant 0 : i32
    return %c0_i32, %c0_i32_0 : i32, i32
  }
  func.func @transform_4(%arg0: i32) -> (i32, i32) {
    %c0_i32 = arith.constant 0 : i32
    %c0_i32_0 = arith.constant 0 : i32
    %c0_i32_1 = arith.constant 0 : i32
    return %c0_i32, %c0_i32_0 : i32, i32
  }
  func.func @transform_5(%arg0: i32) -> (i32, i32) {
    %c0_i32 = arith.constant 0 : i32
    %c0_i32_0 = arith.constant 0 : i32
    %c0_i32_1 = arith.constant 0 : i32
    return %c0_i32, %c0_i32_0 : i32, i32
  }
  func.func @transform_6(%arg0: i32) -> (i32, i32, i32) {
    %c0_i32 = arith.constant 0 : i32
    %c0_i32_0 = arith.constant 0 : i32
    %c0_i32_1 = arith.constant 0 : i32
    %c0_i32_2 = arith.constant 0 : i32
    return %c0_i32, %c0_i32_0, %c0_i32_1 : i32, i32, i32
  }
  func.func @transform_7(%arg0: i32) -> (i32, i32) {
    %c0_i32 = arith.constant 0 : i32
    %c0_i32_0 = arith.constant 0 : i32
    %c0_i32_1 = arith.constant 0 : i32
    return %c0_i32, %c0_i32_0 : i32, i32
  }
  func.func @transform_8(%arg0: i32) -> (i32, i32) {
    %c0_i32 = arith.constant 0 : i32
    %c0_i32_0 = arith.constant 0 : i32
    %c0_i32_1 = arith.constant 0 : i32
    return %c0_i32, %c0_i32_0 : i32, i32
  }
  func.func @transform_9(%arg0: i32) -> (i32, i32) {
    %c0_i32 = arith.constant 0 : i32
    %c0_i32_0 = arith.constant 0 : i32
    %c0_i32_1 = arith.constant 0 : i32
    return %c0_i32, %c0_i32_0 : i32, i32
  }
  func.func @transform_10(%arg0: i32) -> (i32, i32) {
    %c0_i32 = arith.constant 0 : i32
    %c0_i32_0 = arith.constant 0 : i32
    %c0_i32_1 = arith.constant 0 : i32
    return %c0_i32, %c0_i32_0 : i32, i32
  }
  func.func @transform_11(%arg0: i32) -> (i32, i32, i32) {
    %c0_i32 = arith.constant 0 : i32
    %c0_i32_0 = arith.constant 0 : i32
    %c0_i32_1 = arith.constant 0 : i32
    return %arg0, %c0_i32, %c0_i32_0 : i32, i32, i32
  }
}

</mosaic_0001>

<llo_original>
// kernel: tpu_custom_call.1
$region0: #{tpu_custom_call.1}
  #allocation0 [shape = 'u32[]', space=smem, size = 0x4, offset = 0x4, fixed_abs, tag = 'smem constant byte address 0x4 - core index']
  #allocation1 [shape = 'u32[144,128]{1,0:T(1,128)}', space=vmem, size = 0x12000, scoped, tag = 'internal scratch']
  #allocation2 [shape = 'f32[4,640]{1,0:T(4,128)}', space=vmem, size = 0x2800, scoped, tag = 'scratch operand']
  %s0 = inlined_call_operand.vmem [shape: f32[2,4,1], index: 0, kind: input, shape index: {}]
  %s1 = inlined_call_operand.vmem [shape: f32[2,4,640], index: 1, kind: input, shape index: {}]
  %s2 = inlined_call_operand.vmem [shape: f32[4,49], index: 2, kind: input, shape index: {}]
  %s3 = inlined_call_operand.vmem [shape: f32[4,1], index: 3, kind: input, shape index: {}]
  %s4 = inlined_call_operand.vmem [shape: f32[4,1], index: 4, kind: input, shape index: {}]
  %s5 = inlined_call_operand.vmem [shape: f32[1,384], index: 5, kind: input, shape index: {}]
  %s6 = inlined_call_operand.vmem [shape: f32[9,8,4], index: 6, kind: input, shape index: {}]
  %s7 = inlined_call_operand.vmem [shape: f32[8,1], index: 7, kind: input, shape index: {}]
  %s8 = inlined_call_operand.vmem [shape: f32[8,8], index: 8, kind: input, shape index: {}]
  %s9 = inlined_call_operand.vmem [shape: f32[8,4], index: 9, kind: input, shape index: {}]
  %s10 = inlined_call_operand.vmem [shape: f32[8,1], index: 10, kind: input, shape index: {}]
  %s11 = inlined_call_operand.hbm [shape: f32[2,8,384], index: 11, kind: output, shape index: {}]
  %s12 = sld [smem:[#allocation0]]
  $region77: #{tpu_custom_call.1} parent=0
    _
  %s14 = ssub.s32 1, %s12
  %s15 = scalar_select 0, %s14, %s12
  $region1: #{tpu_custom_call.1} parent=0
    #allocation3 [shape = 'u8[24576]{0}', space=vmem, size = 0x6000, scoped, tag = 'output window, operand 0']
    #allocation4 [shape = 's32[2]{0}', space=sflag, size = 0x8, scoped, tag = 'scoped memory for tpu_custom_call.1']
    %16 = vsyncpa [#allocation4], 0
    %s17 = scalar_lea.sflag [#allocation4], 1
    %18 = vsyncpa %s17, 0
    loop: start=0, step=1, limit=4
    $region2: #{tpu_custom_call.1} parent=1 // loop_pre_header
      _
    $region3: #{tpu_custom_call.1} parent=1 // loop_header
      %s20 = sphi 0, %s24
      %p21 = scmp.ge.s32.totalorder %s20, 4
      %s30 = sphi 0, %s32
      %s33 = sphi 0, %s30
      %s34 = sphi 0, %s33
      %s50 = sphi 0, %s34
      %s56 = sphi 0, %s58
      %s59 = sphi 0, %s56
      %s60 = sphi 0, %s59
      %s76 = sphi 0, %s60
      %s80 = sphi 0, %s80
      %s82 = sphi 0, %s80
      %s83 = sphi 0, %s82
      %s97 = sphi 0, %s83
      %s101 = sphi 0, %s101
      %s103 = sphi 0, %s101
      %s104 = sphi 0, %s103
      %s118 = sphi 0, %s104
      %s122 = sphi 0, %s122
      %s124 = sphi 0, %s122
      %s125 = sphi 0, %s124
      %s139 = sphi 0, %s125
      %s143 = sphi 0, %s143
      %s145 = sphi 0, %s143
      %s146 = sphi 0, %s145
      %s160 = sphi 0, %s146
      %s164 = sphi 0, %s164
      %s166 = sphi 0, %s164
      %s167 = sphi 0, %s166
      %s181 = sphi 0, %s167
      %s185 = sphi 0, %s185
      %s187 = sphi 0, %s185
      %s188 = sphi 0, %s187
      %s202 = sphi 0, %s188
      %s206 = sphi 0, %s206
      %s208 = sphi 0, %s206
      %s209 = sphi 0, %s208
      %s223 = sphi 0, %s209
      %s227 = sphi 0, %s227
      %s229 = sphi 0, %s227
      %s230 = sphi 0, %s229
      %s244 = sphi 0, %s230
      %s248 = sphi 0, %s248
      %s250 = sphi 0, %s248
      %s251 = sphi 0, %s250
      %s265 = sphi 0, %s251
      %s271 = sphi 0, %s273
      %s274 = sphi 0, %s271
      %s275 = sphi 0, %s274
      %s291 = sphi 0, %s275
    $region4: #{tpu_custom_call.1} parent=1 // loop_header_branch
      %23 = sbr.rel (%p21) target = $region8
    $region5: #{tpu_custom_call.1} parent=1 // loop_body
      %s25 = ssub.s32 %s20, 1
      %s26 = ssub.s32 %s20, 2
      %s27 = sadd.s32 %s20, 1
      %s28 = ssub.s32 %s20, %s27
      %p29 = scmp.eq.s32.totalorder %s28, 0
      %s31 = sadd.s32 %s30, 1
      %s32 = scalar_select %p29, %s30, %s31
      %p35 = pneg %p29
      %p36 = scmp.eq.s32.totalorder %s20, 1
      %p37 = por %p35, %p36
      %p38 = scmp.ne.s32.totalorder %s30, %s33
      %p39 = scmp.eq.s32.totalorder %s20, 0
      %p40 = por %p38, %p39
      %p41 = scmp.ne.s32.totalorder %s30, %s33
      %p42 = scmp.eq.s32.totalorder %s25, 1
      %p43 = por %p41, %p42
      %p44 = scmp.ne.s32.totalorder %s33, %s34
      %p45 = scmp.eq.s32.totalorder %s25, 0
      %p46 = por %p44, %p45
      %p47 = scmp.ne.s32.totalorder %s33, %s34
      %p48 = scmp.eq.s32.totalorder %s26, 1
      %p49 = por %p47, %p48
      %p51 = scmp.ne.s32.totalorder %s34, %s50
      %p52 = scmp.eq.s32.totalorder %s26, 0
      %p53 = por %p51, %p52
      %s54 = ssub.s32 %s20, %s27
      %p55 = scmp.eq.s32.totalorder %s54, 0
      %s57 = sadd.s32 %s56, 1
      %s58 = scalar_select %p55, %s56, %s57
      %p61 = pneg %p55
      %p62 = scmp.eq.s32.totalorder %s20, 1
      %p63 = por %p61, %p62
      %p64 = scmp.ne.s32.totalorder %s56, %s59
      %p65 = scmp.eq.s32.totalorder %s20, 0
      %p66 = por %p64, %p65
      %p67 = scmp.ne.s32.totalorder %s56, %s59
      %p68 = scmp.eq.s32.totalorder %s25, 1
      %p69 = por %p67, %p68
      %p70 = scmp.ne.s32.totalorder %s59, %s60
      %p71 = scmp.eq.s32.totalorder %s25, 0
      %p72 = por %p70, %p71
      %p73 = scmp.ne.s32.totalorder %s59, %s60
      %p74 = scmp.eq.s32.totalorder %s26, 1
      %p75 = por %p73, %p74
      %p77 = scmp.ne.s32.totalorder %s60, %s76
      %p78 = scmp.eq.s32.totalorder %s26, 0
      %p79 = por %p77, %p78
      %s81 = sadd.s32 %s80, 1
      %p84 = scmp.eq.s32.totalorder %s20, 1
      %p85 = scmp.ne.s32.totalorder %s80, %s82
      %p86 = scmp.eq.s32.totalorder %s20, 0
      %p87 = por %p85, %p86
      %p88 = scmp.ne.s32.totalorder %s80, %s82
      %p89 = scmp.eq.s32.totalorder %s25, 1
      %p90 = por %p88, %p89
      %p91 = scmp.ne.s32.totalorder %s82, %s83
      %p92 = scmp.eq.s32.totalorder %s25, 0
      %p93 = por %p91, %p92
      %p94 = scmp.ne.s32.totalorder %s82, %s83
      %p95 = scmp.eq.s32.totalorder %s26, 1
      %p96 = por %p94, %p95
      %p98 = scmp.ne.s32.totalorder %s83, %s97
      %p99 = scmp.eq.s32.totalorder %s26, 0
      %p100 = por %p98, %p99
      %s102 = sadd.s32 %s101, 1
      %p105 = scmp.eq.s32.totalorder %s20, 1
      %p106 = scmp.ne.s32.totalorder %s101, %s103
      %p107 = scmp.eq.s32.totalorder %s20, 0
      %p108 = por %p106, %p107
      %p109 = scmp.ne.s32.totalorder %s101, %s103
      %p110 = scmp.eq.s32.totalorder %s25, 1
      %p111 = por %p109, %p110
      %p112 = scmp.ne.s32.totalorder %s103, %s104
      %p113 = scmp.eq.s32.totalorder %s25, 0
      %p114 = por %p112, %p113
      %p115 = scmp.ne.s32.totalorder %s103, %s104
      %p116 = scmp.eq.s32.totalorder %s26, 1
      %p117 = por %p115, %p116
      %p119 = scmp.ne.s32.totalorder %s104, %s118
      %p120 = scmp.eq.s32.totalorder %s26, 0
      %p121 = por %p119, %p120
      %s123 = sadd.s32 %s122, 1
      %p126 = scmp.eq.s32.totalorder %s20, 1
      %p127 = scmp.ne.s32.totalorder %s122, %s124
      %p128 = scmp.eq.s32.totalorder %s20, 0
      %p129 = por %p127, %p128
      %p130 = scmp.ne.s32.totalorder %s122, %s124
      %p131 = scmp.eq.s32.totalorder %s25, 1
      %p132 = por %p130, %p131
      %p133 = scmp.ne.s32.totalorder %s124, %s125
      %p134 = scmp.eq.s32.totalorder %s25, 0
      %p135 = por %p133, %p134
      %p136 = scmp.ne.s32.totalorder %s124, %s125
      %p137 = scmp.eq.s32.totalorder %s26, 1
      %p138 = por %p136, %p137
      %p140 = scmp.ne.s32.totalorder %s125, %s139
      %p141 = scmp.eq.s32.totalorder %s26, 0
      %p142 = por %p140, %p141
      %s144 = sadd.s32 %s143, 1
      %p147 = scmp.eq.s32.totalorder %s20, 1
      %p148 = scmp.ne.s32.totalorder %s143, %s145
      %p149 = scmp.eq.s32.totalorder %s20, 0
      %p150 = por %p148, %p149
      %p151 = scmp.ne.s32.totalorder %s143, %s145
      %p152 = scmp.eq.s32.totalorder %s25, 1
      %p153 = por %p151, %p152
      %p154 = scmp.ne.s32.totalorder %s145, %s146
      %p155 = scmp.eq.s32.totalorder %s25, 0
      %p156 = por %p154, %p155
      %p157 = scmp.ne.s32.totalorder %s145, %s146
      %p158 = scmp.eq.s32.totalorder %s26, 1
      %p159 = por %p157, %p158
      %p161 = scmp.ne.s32.totalorder %s146, %s160
      %p162 = scmp.eq.s32.totalorder %s26, 0
      %p163 = por %p161, %p162
      %s165 = sadd.s32 %s164, 1
      %p168 = scmp.eq.s32.totalorder %s20, 1
      %p169 = scmp.ne.s32.totalorder %s164, %s166
      %p170 = scmp.eq.s32.totalorder %s20, 0
      %p171 = por %p169, %p170
      %p172 = scmp.ne.s32.totalorder %s164, %s166
      %p173 = scmp.eq.s32.totalorder %s25, 1
      %p174 = por %p172, %p173
      %p175 = scmp.ne.s32.totalorder %s166, %s167
      %p176 = scmp.eq.s32.totalorder %s25, 0
      %p177 = por %p175, %p176
      %p178 = scmp.ne.s32.totalorder %s166, %s167
      %p179 = scmp.eq.s32.totalorder %s26, 1
      %p180 = por %p178, %p179
      %p182 = scmp.ne.s32.totalorder %s167, %s181
      %p183 = scmp.eq.s32.totalorder %s26, 0
      %p184 = por %p182, %p183
      %s186 = sadd.s32 %s185, 1
      %p189 = scmp.eq.s32.totalorder %s20, 1
      %p190 = scmp.ne.s32.totalorder %s185, %s187
      %p191 = scmp.eq.s32.totalorder %s20, 0
      %p192 = por %p190, %p191
      %p193 = scmp.ne.s32.totalorder %s185, %s187
      %p194 = scmp.eq.s32.totalorder %s25, 1
      %p195 = por %p193, %p194
      %p196 = scmp.ne.s32.totalorder %s187, %s188
      %p197 = scmp.eq.s32.totalorder %s25, 0
      %p198 = por %p196, %p197
      %p199 = scmp.ne.s32.totalorder %s187, %s188
      %p200 = scmp.eq.s32.totalorder %s26, 1
      %p201 = por %p199, %p200
      %p203 = scmp.ne.s32.totalorder %s188, %s202
      %p204 = scmp.eq.s32.totalorder %s26, 0
      %p205 = por %p203, %p204
      %s207 = sadd.s32 %s206, 1
      %p210 = scmp.eq.s32.totalorder %s20, 1
      %p211 = scmp.ne.s32.totalorder %s206, %s208
      %p212 = scmp.eq.s32.totalorder %s20, 0
      %p213 = por %p211, %p212
      %p214 = scmp.ne.s32.totalorder %s206, %s208
      %p215 = scmp.eq.s32.totalorder %s25, 1
      %p216 = por %p214, %p215
      %p217 = scmp.ne.s32.totalorder %s208, %s209
      %p218 = scmp.eq.s32.totalorder %s25, 0
      %p219 = por %p217, %p218
      %p220 = scmp.ne.s32.totalorder %s208, %s209
      %p221 = scmp.eq.s32.totalorder %s26, 1
      %p222 = por %p220, %p221
      %p224 = scmp.ne.s32.totalorder %s209, %s223
      %p225 = scmp.eq.s32.totalorder %s26, 0
      %p226 = por %p224, %p225
      %s228 = sadd.s32 %s227, 1
      %p231 = scmp.eq.s32.totalorder %s20, 1
      %p232 = scmp.ne.s32.totalorder %s227, %s229
      %p233 = scmp.eq.s32.totalorder %s20, 0
      %p234 = por %p232, %p233
      %p235 = scmp.ne.s32.totalorder %s227, %s229
      %p236 = scmp.eq.s32.totalorder %s25, 1
      %p237 = por %p235, %p236
      %p238 = scmp.ne.s32.totalorder %s229, %s230
      %p239 = scmp.eq.s32.totalorder %s25, 0
      %p240 = por %p238, %p239
      %p241 = scmp.ne.s32.totalorder %s229, %s230
      %p242 = scmp.eq.s32.totalorder %s26, 1
      %p243 = por %p241, %p242
      %p245 = scmp.ne.s32.totalorder %s230, %s244
      %p246 = scmp.eq.s32.totalorder %s26, 0
      %p247 = por %p245, %p246
      %s249 = sadd.s32 %s248, 1
      %p252 = scmp.eq.s32.totalorder %s20, 1
      %p253 = scmp.ne.s32.totalorder %s248, %s250
      %p254 = scmp.eq.s32.totalorder %s20, 0
      %p255 = por %p253, %p254
      %p256 = scmp.ne.s32.totalorder %s248, %s250
      %p257 = scmp.eq.s32.totalorder %s25, 1
      %p258 = por %p256, %p257
      %p259 = scmp.ne.s32.totalorder %s250, %s251
      %p260 = scmp.eq.s32.totalorder %s25, 0
      %p261 = por %p259, %p260
      %p262 = scmp.ne.s32.totalorder %s250, %s251
      %p263 = scmp.eq.s32.totalorder %s26, 1
      %p264 = por %p262, %p263
      %p266 = scmp.ne.s32.totalorder %s251, %s265
      %p267 = scmp.eq.s32.totalorder %s26, 0
      %p268 = por %p266, %p267
      %s269 = ssub.s32 %s20, %s27
      %p270 = scmp.eq.s32.totalorder %s269, 0
      %s272 = sadd.s32 %s271, 1
      %s273 = scalar_select %p270, %s271, %s272
      %p276 = pneg %p270
      %p277 = scmp.eq.s32.totalorder %s20, 1
      %p278 = por %p276, %p277
      %p279 = scmp.ne.s32.totalorder %s271, %s274
      %p280 = scmp.eq.s32.totalorder %s20, 0
      %p281 = por %p279, %p280
      %p282 = scmp.ne.s32.totalorder %s271, %s274
      %p283 = scmp.eq.s32.totalorder %s25, 1
      %p284 = por %p282, %p283
      %p285 = scmp.ne.s32.totalorder %s274, %s275
      %p286 = scmp.eq.s32.totalorder %s25, 0
      %p287 = por %p285, %p286
      %p288 = scmp.ne.s32.totalorder %s274, %s275
      %p289 = scmp.eq.s32.totalorder %s26, 1
      %p290 = por %p288, %p289
      %p292 = scmp.ne.s32.totalorder %s275, %s291
      %p293 = scmp.eq.s32.totalorder %s26, 0
      %p294 = por %p292, %p293
      %p295 = scmp.le.s32.totalorder 1, %s20
      %p296 = scmp.lt.s32.totalorder %s20, 3
      %p297 = pnand %p295, %p296
      %p298 = pneg %p297
      // Predicated region
      $region9: #{tpu_custom_call.1} parent=5 // pred_check
        _
      $region10: #{tpu_custom_call.1} parent=5 // pred_check_branch
        %300 = sbr.rel (%p297) target = $region12
      $region11: #{tpu_custom_call.1} parent=5 // pred_region
        %s301 = ssub.s32 %s20, 1
        // Predicated region
        $region13: #{tpu_custom_call.1} parent=11 // pred_check
          %p302 = pneg %p93
        $region14: #{tpu_custom_call.1} parent=11 // pred_check_branch
          %304 = sbr.rel (%p302) target = $region16
        $region15: #{tpu_custom_call.1} parent=11 // pred_region
          _
        $region16: #{tpu_custom_call.1} parent=11 // pred_fallthru
          _
        // Predicated region
        $region17: #{tpu_custom_call.1} parent=11 // pred_check
          %p305 = pneg %p114
        $region18: #{tpu_custom_call.1} parent=11 // pred_check_branch
          %307 = sbr.rel (%p305) target = $region20
        $region19: #{tpu_custom_call.1} parent=11 // pred_region
          _
        $region20: #{tpu_custom_call.1} parent=11 // pred_fallthru
          _
        // Predicated region
        $region21: #{tpu_custom_call.1} parent=11 // pred_check
          %p308 = pneg %p135
        $region22: #{tpu_custom_call.1} parent=11 // pred_check_branch
          %310 = sbr.rel (%p308) target = $region24
        $region23: #{tpu_custom_call.1} parent=11 // pred_region
          _
        $region24: #{tpu_custom_call.1} parent=11 // pred_fallthru
          _
        // Predicated region
        $region25: #{tpu_custom_call.1} parent=11 // pred_check
          %p311 = pneg %p156
        $region26: #{tpu_custom_call.1} parent=11 // pred_check_branch
          %313 = sbr.rel (%p311) target = $region28
        $region27: #{tpu_custom_call.1} parent=11 // pred_region
          _
        $region28: #{tpu_custom_call.1} parent=11 // pred_fallthru
          _
        // Predicated region
        $region29: #{tpu_custom_call.1} parent=11 // pred_check
          %p314 = pneg %p177
        $region30: #{tpu_custom_call.1} parent=11 // pred_check_branch
          %316 = sbr.rel (%p314) target = $region32
        $region31: #{tpu_custom_call.1} parent=11 // pred_region
          _
        $region32: #{tpu_custom_call.1} parent=11 // pred_fallthru
          _
        // Predicated region
        $region33: #{tpu_custom_call.1} parent=11 // pred_check
          %p317 = pneg %p198
        $region34: #{tpu_custom_call.1} parent=11 // pred_check_branch
          %319 = sbr.rel (%p317) target = $region36
        $region35: #{tpu_custom_call.1} parent=11 // pred_region
          _
        $region36: #{tpu_custom_call.1} parent=11 // pred_fallthru
          _
        // Predicated region
        $region37: #{tpu_custom_call.1} parent=11 // pred_check
          %p320 = pneg %p219
        $region38: #{tpu_custom_call.1} parent=11 // pred_check_branch
          %322 = sbr.rel (%p320) target = $region40
        $region39: #{tpu_custom_call.1} parent=11 // pred_region
          _
        $region40: #{tpu_custom_call.1} parent=11 // pred_fallthru
          _
        // Predicated region
        $region41: #{tpu_custom_call.1} parent=11 // pred_check
          %p323 = pneg %p240
        $region42: #{tpu_custom_call.1} parent=11 // pred_check_branch
          %325 = sbr.rel (%p323) target = $region44
        $region43: #{tpu_custom_call.1} parent=11 // pred_region
          _
        $region44: #{tpu_custom_call.1} parent=11 // pred_fallthru
          _
        // Predicated region
        $region45: #{tpu_custom_call.1} parent=11 // pred_check
          %p326 = pneg %p261
        $region46: #{tpu_custom_call.1} parent=11 // pred_check_branch
          %328 = sbr.rel (%p326) target = $region48
        $region47: #{tpu_custom_call.1} parent=11 // pred_region
          _
        $region48: #{tpu_custom_call.1} parent=11 // pred_fallthru
          _
      $region12: #{tpu_custom_call.1} parent=5 // pred_fallthru
        _
      %p329 = scmp.lt.s32.totalorder %s20, 2
      // Predicated region
      $region49: #{tpu_custom_call.1} parent=5 // pred_check
        %p330 = pneg %p329
      $region50: #{tpu_custom_call.1} parent=5 // pred_check_branch
        %332 = sbr.rel (%p330) target = $region52
      $region51: #{tpu_custom_call.1} parent=5 // pred_region
        // Predicated region
        $region53: #{tpu_custom_call.1} parent=51 // pred_check
          %p333 = pneg %p40
        $region54: #{tpu_custom_call.1} parent=51 // pred_check_branch
          %335 = sbr.rel (%p333) target = $region56
        $region55: #{tpu_custom_call.1} parent=51 // pred_region
          %p336 = scmp.lt.s32.totalorder %s20, 1
          %s337 = scalar_select %p336, %s20, 1
          %s338 = smul.addr %s337, 4
          %s339 = scalar_lea.vmem %s0, %s338
        $region56: #{tpu_custom_call.1} parent=51 // pred_fallthru
          _
        // Predicated region
        $region57: #{tpu_custom_call.1} parent=51 // pred_check
          %p340 = pneg %p66
        $region58: #{tpu_custom_call.1} parent=51 // pred_check_branch
          %342 = sbr.rel (%p340) target = $region60
        $region59: #{tpu_custom_call.1} parent=51 // pred_region
          %p343 = scmp.lt.s32.totalorder %s20, 1
          %s344 = scalar_select %p343, %s20, 1
          %s345 = smul.addr %s344, 5
          %s346 = smul.addr %s345, 4
          %s347 = scalar_lea.vmem %s1, %s346
        $region60: #{tpu_custom_call.1} parent=51 // pred_fallthru
          _
      $region52: #{tpu_custom_call.1} parent=5 // pred_fallthru
        _
      %p348 = scmp.le.s32.totalorder 1, %s20
      %p349 = scmp.lt.s32.totalorder %s20, 3
      %p350 = pnand %p348, %p349
      %p351 = pneg %p350
      // Predicated region
      $region61: #{tpu_custom_call.1} parent=5 // pred_check
        _
      $region62: #{tpu_custom_call.1} parent=5 // pred_check_branch
        %353 = sbr.rel (%p350) target = $region64
      $region63: #{tpu_custom_call.1} parent=5 // pred_region
        %s354 = ssub.s32 %s20, 1
        %p355 = scmp.lt.s32.totalorder %s25, 1
        %s356 = scalar_select %p355, %s25, 1
        %s357 = smul.addr %s356, 4
        %s358 = scalar_lea.vmem %s0, %s357
        %p359 = pneg %p46
        %p360 = pneg %p43
        %p361 = scmp.lt.s32.totalorder %s25, 1
        %s362 = scalar_select %p361, %s25, 1
        %s363 = smul.addr %s362, 5
        %s364 = smul.addr %s363, 4
        %s365 = scalar_lea.vmem %s1, %s364
        %p366 = pneg %p72
        %p367 = pneg %p69
        %p368 = pneg %p93
        %p369 = pneg %p90
        %p370 = pneg %p114
        %p371 = pneg %p111
        %p372 = pneg %p135
        %p373 = pneg %p132
        %p374 = pneg %p156
        %p375 = pneg %p153
        %p376 = pneg %p177
        %p377 = pneg %p174
        %p378 = pneg %p198
        %p379 = pneg %p195
        %p380 = pneg %p219
        %p381 = pneg %p216
        %p382 = pneg %p240
        %p383 = pneg %p237
        %p384 = pneg %p261
        %p385 = pneg %p258
        %p386 = pneg %p287
        %p387 = pneg %p284
        %s388 = sand.u32 %s274, 1
        %s389 = scalar_lea.sflag [#allocation4], %s388
        %s390 = sand.u32 %s274, 1
        %s391 = smul.addr %s390, 24
        %s392 = scalar_lea.vmem [#allocation3], %s391
        %p393 = scmp.lt.s32.totalorder %s25, 1
        %s394 = scalar_select %p393, %s25, 1
        %s395 = smul.addr %s394, 4
        %s396 = scalar_lea.vmem %s0, %s395
        %p397 = scmp.lt.s32.totalorder %s25, 1
        %s398 = scalar_select %p397, %s25, 1
        %s399 = smul.addr %s398, 5
        %s400 = smul.addr %s399, 4
        %s401 = scalar_lea.vmem %s1, %s400
        %v402 = vld [vmem:[%s401] sm:$0xff]
        %v403 = vld [vmem:[%s401 + $0x8] sm:$0xf]
        %v404 = vld [vmem:[%s2] sm:$0xf]
        %406 = vset.pattern.permute.xlu0 0
        %407 = vperm.xlu0 %406, %v404
        %v408 = vpop.permute.xlu0 %407
        %v410 = vunpack.c.l.s4 839922192
        %v411 = vunpack.c.0.s8 %v410
        %v412 = vlaneseq
        %v413 = vshrl.u32 %v412, 7
        %v414 = vsub.s32 %v411, %v413
        %v415 = vrot.slane %v408, %v414
        %v417 = vmul.f32 %v402, %v415
        %v418 = vmul.f32 %v403, %v415
        %v419 = vadd.f32 %v417, 0.0
        %v420 = vadd.f32 %v418, 0.0
        %v421 = vld [vmem:[%s401] sm:$0xff]
        %v422 = vld [vmem:[%s401 + $0x8] sm:$0xff]
        %423 = vset.pattern.permute.xlu0 1
        %424 = vperm.xlu0 %423, %v404
        %v425 = vpop.permute.xlu0 %424
        %v427 = vunpack.c.l.s4 839922192
        %v428 = vunpack.c.0.s8 %v427
        %v429 = vlaneseq
        %v430 = vshrl.u32 %v429, 7
        %v431 = vsub.s32 %v428, %v430
        %v432 = vrot.slane %v425, %v431
        %v434 = vmul.f32 %v421, %v432
        %v435 = vmul.f32 %v422, %v432
        %438 = vrot.lane.b32.xlu0 %v434, 127
        %v439 = vpop.permute.xlu0 %438
        %440 = vrot.lane.b32.xlu0 %v435, 127
        %v441 = vpop.permute.xlu0 %440
        %v442 = vrot.slane %v439, 4
        %v443 = vrot.slane %v441, 4
        %vm444 = vcmask 1043456
        %v445 = vsel %vm444, %v442, %v443
        %vm446 = vcmask 1039360
        %v447 = vsel %vm446, %v439, %v445
        %v448 = vsel %vm446, %v441, %v443
        %v451 = vadd.f32 %v419, %v447
        %v452 = vadd.f32 %v420, %v448
        %453 = vset.pattern.permute.xlu0 2
        %454 = vperm.xlu0 %453, %v404
        %v455 = vpop.permute.xlu0 %454
        %v457 = vunpack.c.l.s4 839922192
        %v458 = vunpack.c.0.s8 %v457
        %v459 = vlaneseq
        %v460 = vshrl.u32 %v459, 7
        %v461 = vsub.s32 %v458, %v460
        %v462 = vrot.slane %v455, %v461
        %v464 = vmul.f32 %v421, %v462
        %v465 = vmul.f32 %v422, %v462
        %468 = vrot.lane.b32.xlu0 %v464, 126
        %v469 = vpop.permute.xlu0 %468
        %470 = vrot.lane.b32.xlu0 %v465, 126
        %v471 = vpop.permute.xlu0 %470
        %v472 = vrot.slane %v469, 4
        %v473 = vrot.slane %v471, 4
        %v474 = vsel %vm444, %v472, %v473
        %vm475 = vcmask 1031168
        %v476 = vsel %vm475, %v469, %v474
        %v477 = vsel %vm475, %v471, %v473
        %v480 = vadd.f32 %v451, %v476
        %v481 = vadd.f32 %v452, %v477
        %482 = vset.pattern.permute.xlu0 3
        %483 = vperm.xlu0 %482, %v404
        %v484 = vpop.permute.xlu0 %483
        %v486 = vunpack.c.l.s4 839922192
        %v487 = vunpack.c.0.s8 %v486
        %v488 = vlaneseq
        %v489 = vshrl.u32 %v488, 7
        %v490 = vsub.s32 %v487, %v489
        %v491 = vrot.slane %v484, %v490
        %v493 = vmul.f32 %v421, %v491
        %v494 = vmul.f32 %v422, %v491
        %497 = vrot.lane.b32.xlu0 %v493, 125
        %v498 = vpop.permute.xlu0 %497
        %499 = vrot.lane.b32.xlu0 %v494, 125
        %v500 = vpop.permute.xlu0 %499
        %v501 = vrot.slane %v498, 4
        %v502 = vrot.slane %v500, 4
        %v503 = vsel %vm444, %v501, %v502
        %vm504 = vcmask 1022976
        %v505 = vsel %vm504, %v498, %v503
        %v506 = vsel %vm504, %v500, %v502
        %v509 = vadd.f32 %v480, %v505
        %v510 = vadd.f32 %v481, %v506
        %511 = vset.pattern.permute.xlu0 4
        %512 = vperm.xlu0 %511, %v404
        %v513 = vpop.permute.xlu0 %512
        %v515 = vunpack.c.l.s4 839922192
        %v516 = vunpack.c.0.s8 %v515
        %v517 = vlaneseq
        %v518 = vshrl.u32 %v517, 7
        %v519 = vsub.s32 %v516, %v518
        %v520 = vrot.slane %v513, %v519
        %v522 = vmul.f32 %v421, %v520
        %v523 = vmul.f32 %v422, %v520
        %526 = vrot.lane.b32.xlu0 %v522, 124
        %v527 = vpop.permute.xlu0 %526
        %528 = vrot.lane.b32.xlu0 %v523, 124
        %v529 = vpop.permute.xlu0 %528
        %v530 = vrot.slane %v527, 4
        %v531 = vrot.slane %v529, 4
        %v532 = vsel %vm444, %v530, %v531
        %vm533 = vcmask 1014784
        %v534 = vsel %vm533, %v527, %v532
        %v535 = vsel %vm533, %v529, %v531
        %v538 = vadd.f32 %v509, %v534
        %v539 = vadd.f32 %v510, %v535
        %540 = vset.pattern.permute.xlu0 5
        %541 = vperm.xlu0 %540, %v404
        %v542 = vpop.permute.xlu0 %541
        %v544 = vunpack.c.l.s4 839922192
        %v545 = vunpack.c.0.s8 %v544
        %v546 = vlaneseq
        %v547 = vshrl.u32 %v546, 7
        %v548 = vsub.s32 %v545, %v547
        %v549 = vrot.slane %v542, %v548
        %v551 = vmul.f32 %v421, %v549
        %v552 = vmul.f32 %v422, %v549
        %555 = vrot.lane.b32.xlu0 %v551, 123
        %v556 = vpop.permute.xlu0 %555
        %557 = vrot.lane.b32.xlu0 %v552, 123
        %v558 = vpop.permute.xlu0 %557
        %v559 = vrot.slane %v556, 4
        %v560 = vrot.slane %v558, 4
        %v561 = vsel %vm444, %v559, %v560
        %vm562 = vcmask 1006592
        %v563 = vsel %vm562, %v556, %v561
        %v564 = vsel %vm562, %v558, %v560
        %v567 = vadd.f32 %v538, %v563
        %v568 = vadd.f32 %v539, %v564
        %569 = vset.pattern.permute.xlu0 6
        %570 = vperm.xlu0 %569, %v404
        %v571 = vpop.permute.xlu0 %570
        %v573 = vunpack.c.l.s4 839922192
        %v574 = vunpack.c.0.s8 %v573
        %v575 = vlaneseq
        %v576 = vshrl.u32 %v575, 7
        %v577 = vsub.s32 %v574, %v576
        %v578 = vrot.slane %v571, %v577
        %v580 = vmul.f32 %v421, %v578
        %v581 = vmul.f32 %v422, %v578
        %584 = vrot.lane.b32.xlu0 %v580, 122
        %v585 = vpop.permute.xlu0 %584
        %586 = vrot.lane.b32.xlu0 %v581, 122
        %v587 = vpop.permute.xlu0 %586
        %v588 = vrot.slane %v585, 4
        %v589 = vrot.slane %v587, 4
        %v590 = vsel %vm444, %v588, %v589
        %vm591 = vcmask 998400
        %v592 = vsel %vm591, %v585, %v590
        %v593 = vsel %vm591, %v587, %v589
        %v596 = vadd.f32 %v567, %v592
        %v597 = vadd.f32 %v568, %v593
        %598 = vset.pattern.permute.xlu0 7
        %599 = vperm.xlu0 %598, %v404
        %v600 = vpop.permute.xlu0 %599
        %v602 = vunpack.c.l.s4 839922192
        %v603 = vunpack.c.0.s8 %v602
        %v604 = vlaneseq
        %v605 = vshrl.u32 %v604, 7
        %v606 = vsub.s32 %v603, %v605
        %v607 = vrot.slane %v600, %v606
        %v609 = vmul.f32 %v421, %v607
        %v610 = vmul.f32 %v422, %v607
        %613 = vrot.lane.b32.xlu0 %v609, 104
        %v614 = vpop.permute.xlu0 %613
        %615 = vrot.lane.b32.xlu0 %v610, 104
        %v616 = vpop.permute.xlu0 %615
        %v617 = vrot.slane %v614, 4
        %v618 = vrot.slane %v616, 4
        %v619 = vsel %vm444, %v617, %v618
        %vm620 = vcmask 850944
        %v621 = vsel %vm620, %v614, %v619
        %v622 = vsel %vm620, %v616, %v618
        %v625 = vadd.f32 %v596, %v621
        %v626 = vadd.f32 %v597, %v622
        %627 = vset.pattern.permute.xlu0 8
        %628 = vperm.xlu0 %627, %v404
        %v629 = vpop.permute.xlu0 %628
        %v631 = vunpack.c.l.s4 839922192
        %v632 = vunpack.c.0.s8 %v631
        %v633 = vlaneseq
        %v634 = vshrl.u32 %v633, 7
        %v635 = vsub.s32 %v632, %v634
        %v636 = vrot.slane %v629, %v635
        %v638 = vmul.f32 %v421, %v636
        %v639 = vmul.f32 %v422, %v636
        %642 = vrot.lane.b32.xlu0 %v638, 103
        %v643 = vpop.permute.xlu0 %642
        %644 = vrot.lane.b32.xlu0 %v639, 103
        %v645 = vpop.permute.xlu0 %644
        %v646 = vrot.slane %v643, 4
        %v647 = vrot.slane %v645, 4
        %v648 = vsel %vm444, %v646, %v647
        %vm649 = vcmask 842752
        %v650 = vsel %vm649, %v643, %v648
        %v651 = vsel %vm649, %v645, %v647
        %v654 = vadd.f32 %v625, %v650
        %v655 = vadd.f32 %v626, %v651
        %656 = vset.pattern.permute.xlu0 9
        %657 = vperm.xlu0 %656, %v404
        %v658 = vpop.permute.xlu0 %657
        %v660 = vunpack.c.l.s4 839922192
        %v661 = vunpack.c.0.s8 %v660
        %v662 = vlaneseq
        %v663 = vshrl.u32 %v662, 7
        %v664 = vsub.s32 %v661, %v663
        %v665 = vrot.slane %v658, %v664
        %v667 = vmul.f32 %v421, %v665
        %v668 = vmul.f32 %v422, %v665
        %671 = vrot.lane.b32.xlu0 %v667, 102
        %v672 = vpop.permute.xlu0 %671
        %673 = vrot.lane.b32.xlu0 %v668, 102
        %v674 = vpop.permute.xlu0 %673
        %v675 = vrot.slane %v672, 4
        %v676 = vrot.slane %v674, 4
        %v677 = vsel %vm444, %v675, %v676
        %vm678 = vcmask 834560
        %v679 = vsel %vm678, %v672, %v677
        %v680 = vsel %vm678, %v674, %v676
        %v683 = vadd.f32 %v654, %v679
        %v684 = vadd.f32 %v655, %v680
        %685 = vset.pattern.permute.xlu0 10
        %686 = vperm.xlu0 %685, %v404
        %v687 = vpop.permute.xlu0 %686
        %v689 = vunpack.c.l.s4 839922192
        %v690 = vunpack.c.0.s8 %v689
        %v691 = vlaneseq
        %v692 = vshrl.u32 %v691, 7
        %v693 = vsub.s32 %v690, %v692
        %v694 = vrot.slane %v687, %v693
        %v696 = vmul.f32 %v421, %v694
        %v697 = vmul.f32 %v422, %v694
        %700 = vrot.lane.b32.xlu0 %v696, 101
        %v701 = vpop.permute.xlu0 %700
        %702 = vrot.lane.b32.xlu0 %v697, 101
        %v703 = vpop.permute.xlu0 %702
        %v704 = vrot.slane %v701, 4
        %v705 = vrot.slane %v703, 4
        %v706 = vsel %vm444, %v704, %v705
        %vm707 = vcmask 826368
        %v708 = vsel %vm707, %v701, %v706
        %v709 = vsel %vm707, %v703, %v705
        %v712 = vadd.f32 %v683, %v708
        %v713 = vadd.f32 %v684, %v709
        %714 = vset.pattern.permute.xlu0 11
        %715 = vperm.xlu0 %714, %v404
        %v716 = vpop.permute.xlu0 %715
        %v718 = vunpack.c.l.s4 839922192
        %v719 = vunpack.c.0.s8 %v718
        %v720 = vlaneseq
        %v721 = vshrl.u32 %v720, 7
        %v722 = vsub.s32 %v719, %v721
        %v723 = vrot.slane %v716, %v722
        %v725 = vmul.f32 %v421, %v723
        %v726 = vmul.f32 %v422, %v723
        %729 = vrot.lane.b32.xlu0 %v725, 100
        %v730 = vpop.permute.xlu0 %729
        %731 = vrot.lane.b32.xlu0 %v726, 100
        %v732 = vpop.permute.xlu0 %731
        %v733 = vrot.slane %v730, 4
        %v734 = vrot.slane %v732, 4
        %v735 = vsel %vm444, %v733, %v734
        %vm736 = vcmask 818176
        %v737 = vsel %vm736, %v730, %v735
        %v738 = vsel %vm736, %v732, %v734
        %v741 = vadd.f32 %v712, %v737
        %v742 = vadd.f32 %v713, %v738
        %743 = vset.pattern.permute.xlu0 12
        %744 = vperm.xlu0 %743, %v404
        %v745 = vpop.permute.xlu0 %744
        %v747 = vunpack.c.l.s4 839922192
        %v748 = vunpack.c.0.s8 %v747
        %v749 = vlaneseq
        %v750 = vshrl.u32 %v749, 7
        %v751 = vsub.s32 %v748, %v750
        %v752 = vrot.slane %v745, %v751
        %v754 = vmul.f32 %v421, %v752
        %v755 = vmul.f32 %v422, %v752
        %758 = vrot.lane.b32.xlu0 %v754, 99
        %v759 = vpop.permute.xlu0 %758
        %760 = vrot.lane.b32.xlu0 %v755, 99
        %v761 = vpop.permute.xlu0 %760
        %v762 = vrot.slane %v759, 4
        %v763 = vrot.slane %v761, 4
        %v764 = vsel %vm444, %v762, %v763
        %vm765 = vcmask 809984
        %v766 = vsel %vm765, %v759, %v764
        %v767 = vsel %vm765, %v761, %v763
        %v770 = vadd.f32 %v741, %v766
        %v771 = vadd.f32 %v742, %v767
        %772 = vset.pattern.permute.xlu0 13
        %773 = vperm.xlu0 %772, %v404
        %v774 = vpop.permute.xlu0 %773
        %v776 = vunpack.c.l.s4 839922192
        %v777 = vunpack.c.0.s8 %v776
        %v778 = vlaneseq
        %v779 = vshrl.u32 %v778, 7
        %v780 = vsub.s32 %v777, %v779
        %v781 = vrot.slane %v774, %v780
        %v783 = vmul.f32 %v421, %v781
        %v784 = vmul.f32 %v422, %v781
        %787 = vrot.lane.b32.xlu0 %v783, 98
        %v788 = vpop.permute.xlu0 %787
        %789 = vrot.lane.b32.xlu0 %v784, 98
        %v790 = vpop.permute.xlu0 %789
        %v791 = vrot.slane %v788, 4
        %v792 = vrot.slane %v790, 4
        %v793 = vsel %vm444, %v791, %v792
        %vm794 = vcmask 801792
        %v795 = vsel %vm794, %v788, %v793
        %v796 = vsel %vm794, %v790, %v792
        %v799 = vadd.f32 %v770, %v795
        %v800 = vadd.f32 %v771, %v796
        %801 = vset.pattern.permute.xlu0 14
        %802 = vperm.xlu0 %801, %v404
        %v803 = vpop.permute.xlu0 %802
        %v805 = vunpack.c.l.s4 839922192
        %v806 = vunpack.c.0.s8 %v805
        %v807 = vlaneseq
        %v808 = vshrl.u32 %v807, 7
        %v809 = vsub.s32 %v806, %v808
        %v810 = vrot.slane %v803, %v809
        %v812 = vmul.f32 %v421, %v810
        %v813 = vmul.f32 %v422, %v810
        %816 = vrot.lane.b32.xlu0 %v812, 80
        %v817 = vpop.permute.xlu0 %816
        %818 = vrot.lane.b32.xlu0 %v813, 80
        %v819 = vpop.permute.xlu0 %818
        %v820 = vrot.slane %v817, 4
        %v821 = vrot.slane %v819, 4
        %v822 = vsel %vm444, %v820, %v821
        %vm823 = vcmask 654336
        %v824 = vsel %vm823, %v817, %v822
        %v825 = vsel %vm823, %v819, %v821
        %v828 = vadd.f32 %v799, %v824
        %v829 = vadd.f32 %v800, %v825
        %830 = vset.pattern.permute.xlu0 15
        %831 = vperm.xlu0 %830, %v404
        %v832 = vpop.permute.xlu0 %831
        %v834 = vunpack.c.l.s4 839922192
        %v835 = vunpack.c.0.s8 %v834
        %v836 = vlaneseq
        %v837 = vshrl.u32 %v836, 7
        %v838 = vsub.s32 %v835, %v837
        %v839 = vrot.slane %v832, %v838
        %v841 = vmul.f32 %v421, %v839
        %v842 = vmul.f32 %v422, %v839
        %845 = vrot.lane.b32.xlu0 %v841, 79
        %v846 = vpop.permute.xlu0 %845
        %847 = vrot.lane.b32.xlu0 %v842, 79
        %v848 = vpop.permute.xlu0 %847
        %v849 = vrot.slane %v846, 4
        %v850 = vrot.slane %v848, 4
        %v851 = vsel %vm444, %v849, %v850
        %vm852 = vcmask 646144
        %v853 = vsel %vm852, %v846, %v851
        %v854 = vsel %vm852, %v848, %v850
        %v857 = vadd.f32 %v828, %v853
        %v858 = vadd.f32 %v829, %v854
        %859 = vset.pattern.permute.xlu0 16
        %860 = vperm.xlu0 %859, %v404
        %v861 = vpop.permute.xlu0 %860
        %v863 = vunpack.c.l.s4 839922192
        %v864 = vunpack.c.0.s8 %v863
        %v865 = vlaneseq
        %v866 = vshrl.u32 %v865, 7
        %v867 = vsub.s32 %v864, %v866
        %v868 = vrot.slane %v861, %v867
        %v870 = vmul.f32 %v421, %v868
        %v871 = vmul.f32 %v422, %v868
        %874 = vrot.lane.b32.xlu0 %v870, 78
        %v875 = vpop.permute.xlu0 %874
        %876 = vrot.lane.b32.xlu0 %v871, 78
        %v877 = vpop.permute.xlu0 %876
        %v878 = vrot.slane %v875, 4
        %v879 = vrot.slane %v877, 4
        %v880 = vsel %vm444, %v878, %v879
        %vm881 = vcmask 637952
        %v882 = vsel %vm881, %v875, %v880
        %v883 = vsel %vm881, %v877, %v879
        %v886 = vadd.f32 %v857, %v882
        %v887 = vadd.f32 %v858, %v883
        %888 = vset.pattern.permute.xlu0 17
        %889 = vperm.xlu0 %888, %v404
        %v890 = vpop.permute.xlu0 %889
        %v892 = vunpack.c.l.s4 839922192
        %v893 = vunpack.c.0.s8 %v892
        %v894 = vlaneseq
        %v895 = vshrl.u32 %v894, 7
        %v896 = vsub.s32 %v893, %v895
        %v897 = vrot.slane %v890, %v896
        %v899 = vmul.f32 %v421, %v897
        %v900 = vmul.f32 %v422, %v897
        %903 = vrot.lane.b32.xlu0 %v899, 77
        %v904 = vpop.permute.xlu0 %903
        %905 = vrot.lane.b32.xlu0 %v900, 77
        %v906 = vpop.permute.xlu0 %905
        %v907 = vrot.slane %v904, 4
        %v908 = vrot.slane %v906, 4
        %v909 = vsel %vm444, %v907, %v908
        %vm910 = vcmask 629760
        %v911 = vsel %vm910, %v904, %v909
        %v912 = vsel %vm910, %v906, %v908
        %v915 = vadd.f32 %v886, %v911
        %v916 = vadd.f32 %v887, %v912
        %917 = vset.pattern.permute.xlu0 18
        %918 = vperm.xlu0 %917, %v404
        %v919 = vpop.permute.xlu0 %918
        %v921 = vunpack.c.l.s4 839922192
        %v922 = vunpack.c.0.s8 %v921
        %v923 = vlaneseq
        %v924 = vshrl.u32 %v923, 7
        %v925 = vsub.s32 %v922, %v924
        %v926 = vrot.slane %v919, %v925
        %v928 = vmul.f32 %v421, %v926
        %v929 = vmul.f32 %v422, %v926
        %932 = vrot.lane.b32.xlu0 %v928, 76
        %v933 = vpop.permute.xlu0 %932
        %934 = vrot.lane.b32.xlu0 %v929, 76
        %v935 = vpop.permute.xlu0 %934
        %v936 = vrot.slane %v933, 4
        %v937 = vrot.slane %v935, 4
        %v938 = vsel %vm444, %v936, %v937
        %vm939 = vcmask 621568
        %v940 = vsel %vm939, %v933, %v938
        %v941 = vsel %vm939, %v935, %v937
        %v944 = vadd.f32 %v915, %v940
        %v945 = vadd.f32 %v916, %v941
        %946 = vset.pattern.permute.xlu0 19
        %947 = vperm.xlu0 %946, %v404
        %v948 = vpop.permute.xlu0 %947
        %v950 = vunpack.c.l.s4 839922192
        %v951 = vunpack.c.0.s8 %v950
        %v952 = vlaneseq
        %v953 = vshrl.u32 %v952, 7
        %v954 = vsub.s32 %v951, %v953
        %v955 = vrot.slane %v948, %v954
        %v957 = vmul.f32 %v421, %v955
        %v958 = vmul.f32 %v422, %v955
        %961 = vrot.lane.b32.xlu0 %v957, 75
        %v962 = vpop.permute.xlu0 %961
        %963 = vrot.lane.b32.xlu0 %v958, 75
        %v964 = vpop.permute.xlu0 %963
        %v965 = vrot.slane %v962, 4
        %v966 = vrot.slane %v964, 4
        %v967 = vsel %vm444, %v965, %v966
        %vm968 = vcmask 613376
        %v969 = vsel %vm968, %v962, %v967
        %v970 = vsel %vm968, %v964, %v966
        %v973 = vadd.f32 %v944, %v969
        %v974 = vadd.f32 %v945, %v970
        %975 = vset.pattern.permute.xlu0 20
        %976 = vperm.xlu0 %975, %v404
        %v977 = vpop.permute.xlu0 %976
        %v979 = vunpack.c.l.s4 839922192
        %v980 = vunpack.c.0.s8 %v979
        %v981 = vlaneseq
        %v982 = vshrl.u32 %v981, 7
        %v983 = vsub.s32 %v980, %v982
        %v984 = vrot.slane %v977, %v983
        %v986 = vmul.f32 %v421, %v984
        %v987 = vmul.f32 %v422, %v984
        %990 = vrot.lane.b32.xlu0 %v986, 74
        %v991 = vpop.permute.xlu0 %990
        %992 = vrot.lane.b32.xlu0 %v987, 74
        %v993 = vpop.permute.xlu0 %992
        %v994 = vrot.slane %v991, 4
        %v995 = vrot.slane %v993, 4
        %v996 = vsel %vm444, %v994, %v995
        %vm997 = vcmask 605184
        %v998 = vsel %vm997, %v991, %v996
        %v999 = vsel %vm997, %v993, %v995
        %v1002 = vadd.f32 %v973, %v998
        %v1003 = vadd.f32 %v974, %v999
        %1004 = vset.pattern.permute.xlu0 21
        %1005 = vperm.xlu0 %1004, %v404
        %v1006 = vpop.permute.xlu0 %1005
        %v1008 = vunpack.c.l.s4 839922192
        %v1009 = vunpack.c.0.s8 %v1008
        %v1010 = vlaneseq
        %v1011 = vshrl.u32 %v1010, 7
        %v1012 = vsub.s32 %v1009, %v1011
        %v1013 = vrot.slane %v1006, %v1012
        %v1015 = vmul.f32 %v421, %v1013
        %v1016 = vmul.f32 %v422, %v1013
        %1019 = vrot.lane.b32.xlu0 %v1015, 56
        %v1020 = vpop.permute.xlu0 %1019
        %1021 = vrot.lane.b32.xlu0 %v1016, 56
        %v1022 = vpop.permute.xlu0 %1021
        %v1023 = vrot.slane %v1020, 4
        %v1024 = vrot.slane %v1022, 4
        %v1025 = vsel %vm444, %v1023, %v1024
        %vm1026 = vcmask 457728
        %v1027 = vsel %vm1026, %v1020, %v1025
        %v1028 = vsel %vm1026, %v1022, %v1024
        %v1031 = vadd.f32 %v1002, %v1027
        %v1032 = vadd.f32 %v1003, %v1028
        %1033 = vset.pattern.permute.xlu0 22
        %1034 = vperm.xlu0 %1033, %v404
        %v1035 = vpop.permute.xlu0 %1034
        %v1037 = vunpack.c.l.s4 839922192
        %v1038 = vunpack.c.0.s8 %v1037
        %v1039 = vlaneseq
        %v1040 = vshrl.u32 %v1039, 7
        %v1041 = vsub.s32 %v1038, %v1040
        %v1042 = vrot.slane %v1035, %v1041
        %v1044 = vmul.f32 %v421, %v1042
        %v1045 = vmul.f32 %v422, %v1042
        %1048 = vrot.lane.b32.xlu0 %v1044, 55
        %v1049 = vpop.permute.xlu0 %1048
        %1050 = vrot.lane.b32.xlu0 %v1045, 55
        %v1051 = vpop.permute.xlu0 %1050
        %v1052 = vrot.slane %v1049, 4
        %v1053 = vrot.slane %v1051, 4
        %v1054 = vsel %vm444, %v1052, %v1053
        %vm1055 = vcmask 449536
        %v1056 = vsel %vm1055, %v1049, %v1054
        %v1057 = vsel %vm1055, %v1051, %v1053
        %v1060 = vadd.f32 %v1031, %v1056
        %v1061 = vadd.f32 %v1032, %v1057
        %1062 = vset.pattern.permute.xlu0 23
        %1063 = vperm.xlu0 %1062, %v404
        %v1064 = vpop.permute.xlu0 %1063
        %v1066 = vunpack.c.l.s4 839922192
        %v1067 = vunpack.c.0.s8 %v1066
        %v1068 = vlaneseq
        %v1069 = vshrl.u32 %v1068, 7
        %v1070 = vsub.s32 %v1067, %v1069
        %v1071 = vrot.slane %v1064, %v1070
        %v1073 = vmul.f32 %v421, %v1071
        %v1074 = vmul.f32 %v422, %v1071
        %1077 = vrot.lane.b32.xlu0 %v1073, 54
        %v1078 = vpop.permute.xlu0 %1077
        %1079 = vrot.lane.b32.xlu0 %v1074, 54
        %v1080 = vpop.permute.xlu0 %1079
        %v1081 = vrot.slane %v1078, 4
        %v1082 = vrot.slane %v1080, 4
        %v1083 = vsel %vm444, %v1081, %v1082
        %vm1084 = vcmask 441344
        %v1085 = vsel %vm1084, %v1078, %v1083
        %v1086 = vsel %vm1084, %v1080, %v1082
        %v1089 = vadd.f32 %v1060, %v1085
        %v1090 = vadd.f32 %v1061, %v1086
        %1091 = vset.pattern.permute.xlu0 24
        %1092 = vperm.xlu0 %1091, %v404
        %v1093 = vpop.permute.xlu0 %1092
        %v1095 = vunpack.c.l.s4 839922192
        %v1096 = vunpack.c.0.s8 %v1095
        %v1097 = vlaneseq
        %v1098 = vshrl.u32 %v1097, 7
        %v1099 = vsub.s32 %v1096, %v1098
        %v1100 = vrot.slane %v1093, %v1099
        %v1102 = vmul.f32 %v421, %v1100
        %v1103 = vmul.f32 %v422, %v1100
        %1106 = vrot.lane.b32.xlu0 %v1102, 53
        %v1107 = vpop.permute.xlu0 %1106
        %1108 = vrot.lane.b32.xlu0 %v1103, 53
        %v1109 = vpop.permute.xlu0 %1108
        %v1110 = vrot.slane %v1107, 4
        %v1111 = vrot.slane %v1109, 4
        %v1112 = vsel %vm444, %v1110, %v1111
        %vm1113 = vcmask 433152
        %v1114 = vsel %vm1113, %v1107, %v1112
        %v1115 = vsel %vm1113, %v1109, %v1111
        %v1118 = vadd.f32 %v1089, %v1114
        %v1119 = vadd.f32 %v1090, %v1115
        %1120 = vset.pattern.permute.xlu0 25
        %1121 = vperm.xlu0 %1120, %v404
        %v1122 = vpop.permute.xlu0 %1121
        %v1124 = vunpack.c.l.s4 839922192
        %v1125 = vunpack.c.0.s8 %v1124
        %v1126 = vlaneseq
        %v1127 = vshrl.u32 %v1126, 7
        %v1128 = vsub.s32 %v1125, %v1127
        %v1129 = vrot.slane %v1122, %v1128
        %v1131 = vmul.f32 %v421, %v1129
        %v1132 = vmul.f32 %v422, %v1129
        %1135 = vrot.lane.b32.xlu0 %v1131, 52
        %v1136 = vpop.permute.xlu0 %1135
        %1137 = vrot.lane.b32.xlu0 %v1132, 52
        %v1138 = vpop.permute.xlu0 %1137
        %v1139 = vrot.slane %v1136, 4
        %v1140 = vrot.slane %v1138, 4
        %v1141 = vsel %vm444, %v1139, %v1140
        %vm1142 = vcmask 424960
        %v1143 = vsel %vm1142, %v1136, %v1141
        %v1144 = vsel %vm1142, %v1138, %v1140
        %v1147 = vadd.f32 %v1118, %v1143
        %v1148 = vadd.f32 %v1119, %v1144
        %1149 = vset.pattern.permute.xlu0 26
        %1150 = vperm.xlu0 %1149, %v404
        %v1151 = vpop.permute.xlu0 %1150
        %v1153 = vunpack.c.l.s4 839922192
        %v1154 = vunpack.c.0.s8 %v1153
        %v1155 = vlaneseq
        %v1156 = vshrl.u32 %v1155, 7
        %v1157 = vsub.s32 %v1154, %v1156
        %v1158 = vrot.slane %v1151, %v1157
        %v1160 = vmul.f32 %v421, %v1158
        %v1161 = vmul.f32 %v422, %v1158
        %1164 = vrot.lane.b32.xlu0 %v1160, 51
        %v1165 = vpop.permute.xlu0 %1164
        %1166 = vrot.lane.b32.xlu0 %v1161, 51
        %v1167 = vpop.permute.xlu0 %1166
        %v1168 = vrot.slane %v1165, 4
        %v1169 = vrot.slane %v1167, 4
        %v1170 = vsel %vm444, %v1168, %v1169
        %vm1171 = vcmask 416768
        %v1172 = vsel %vm1171, %v1165, %v1170
        %v1173 = vsel %vm1171, %v1167, %v1169
        %v1176 = vadd.f32 %v1147, %v1172
        %v1177 = vadd.f32 %v1148, %v1173
        %1178 = vset.pattern.permute.xlu0 27
        %1179 = vperm.xlu0 %1178, %v404
        %v1180 = vpop.permute.xlu0 %1179
        %v1182 = vunpack.c.l.s4 839922192
        %v1183 = vunpack.c.0.s8 %v1182
        %v1184 = vlaneseq
        %v1185 = vshrl.u32 %v1184, 7
        %v1186 = vsub.s32 %v1183, %v1185
        %v1187 = vrot.slane %v1180, %v1186
        %v1189 = vmul.f32 %v421, %v1187
        %v1190 = vmul.f32 %v422, %v1187
        %1193 = vrot.lane.b32.xlu0 %v1189, 50
        %v1194 = vpop.permute.xlu0 %1193
        %1195 = vrot.lane.b32.xlu0 %v1190, 50
        %v1196 = vpop.permute.xlu0 %1195
        %v1197 = vrot.slane %v1194, 4
        %v1198 = vrot.slane %v1196, 4
        %v1199 = vsel %vm444, %v1197, %v1198
        %vm1200 = vcmask 408576
        %v1201 = vsel %vm1200, %v1194, %v1199
        %v1202 = vsel %vm1200, %v1196, %v1198
        %v1205 = vadd.f32 %v1176, %v1201
        %v1206 = vadd.f32 %v1177, %v1202
        %1207 = vset.pattern.permute.xlu0 28
        %1208 = vperm.xlu0 %1207, %v404
        %v1209 = vpop.permute.xlu0 %1208
        %v1211 = vunpack.c.l.s4 839922192
        %v1212 = vunpack.c.0.s8 %v1211
        %v1213 = vlaneseq
        %v1214 = vshrl.u32 %v1213, 7
        %v1215 = vsub.s32 %v1212, %v1214
        %v1216 = vrot.slane %v1209, %v1215
        %v1218 = vmul.f32 %v421, %v1216
        %v1219 = vmul.f32 %v422, %v1216
        %1222 = vrot.lane.b32.xlu0 %v1218, 32
        %v1223 = vpop.permute.xlu0 %1222
        %1224 = vrot.lane.b32.xlu0 %v1219, 32
        %v1225 = vpop.permute.xlu0 %1224
        %v1226 = vrot.slane %v1223, 4
        %v1227 = vrot.slane %v1225, 4
        %v1228 = vsel %vm444, %v1226, %v1227
        %vm1229 = vcmask 261120
        %v1230 = vsel %vm1229, %v1223, %v1228
        %v1231 = vsel %vm1229, %v1225, %v1227
        %v1234 = vadd.f32 %v1205, %v1230
        %v1235 = vadd.f32 %v1206, %v1231
        %1236 = vset.pattern.permute.xlu0 29
        %1237 = vperm.xlu0 %1236, %v404
        %v1238 = vpop.permute.xlu0 %1237
        %v1240 = vunpack.c.l.s4 839922192
        %v1241 = vunpack.c.0.s8 %v1240
        %v1242 = vlaneseq
        %v1243 = vshrl.u32 %v1242, 7
        %v1244 = vsub.s32 %v1241, %v1243
        %v1245 = vrot.slane %v1238, %v1244
        %v1247 = vmul.f32 %v421, %v1245
        %v1248 = vmul.f32 %v422, %v1245
        %1251 = vrot.lane.b32.xlu0 %v1247, 31
        %v1252 = vpop.permute.xlu0 %1251
        %1253 = vrot.lane.b32.xlu0 %v1248, 31
        %v1254 = vpop.permute.xlu0 %1253
        %v1255 = vrot.slane %v1252, 4
        %v1256 = vrot.slane %v1254, 4
        %v1257 = vsel %vm444, %v1255, %v1256
        %vm1258 = vcmask 252928
        %v1259 = vsel %vm1258, %v1252, %v1257
        %v1260 = vsel %vm1258, %v1254, %v1256
        %v1263 = vadd.f32 %v1234, %v1259
        %v1264 = vadd.f32 %v1235, %v1260
        %1265 = vset.pattern.permute.xlu0 30
        %1266 = vperm.xlu0 %1265, %v404
        %v1267 = vpop.permute.xlu0 %1266
        %v1269 = vunpack.c.l.s4 839922192
        %v1270 = vunpack.c.0.s8 %v1269
        %v1271 = vlaneseq
        %v1272 = vshrl.u32 %v1271, 7
        %v1273 = vsub.s32 %v1270, %v1272
        %v1274 = vrot.slane %v1267, %v1273
        %v1276 = vmul.f32 %v421, %v1274
        %v1277 = vmul.f32 %v422, %v1274
        %1280 = vrot.lane.b32.xlu0 %v1276, 30
        %v1281 = vpop.permute.xlu0 %1280
        %1282 = vrot.lane.b32.xlu0 %v1277, 30
        %v1283 = vpop.permute.xlu0 %1282
        %v1284 = vrot.slane %v1281, 4
        %v1285 = vrot.slane %v1283, 4
        %v1286 = vsel %vm444, %v1284, %v1285
        %vm1287 = vcmask 244736
        %v1288 = vsel %vm1287, %v1281, %v1286
        %v1289 = vsel %vm1287, %v1283, %v1285
        %v1292 = vadd.f32 %v1263, %v1288
        %v1293 = vadd.f32 %v1264, %v1289
        %1294 = vset.pattern.permute.xlu0 31
        %1295 = vperm.xlu0 %1294, %v404
        %v1296 = vpop.permute.xlu0 %1295
        %v1298 = vunpack.c.l.s4 839922192
        %v1299 = vunpack.c.0.s8 %v1298
        %v1300 = vlaneseq
        %v1301 = vshrl.u32 %v1300, 7
        %v1302 = vsub.s32 %v1299, %v1301
        %v1303 = vrot.slane %v1296, %v1302
        %v1305 = vmul.f32 %v421, %v1303
        %v1306 = vmul.f32 %v422, %v1303
        %1309 = vrot.lane.b32.xlu0 %v1305, 29
        %v1310 = vpop.permute.xlu0 %1309
        %1311 = vrot.lane.b32.xlu0 %v1306, 29
        %v1312 = vpop.permute.xlu0 %1311
        %v1313 = vrot.slane %v1310, 4
        %v1314 = vrot.slane %v1312, 4
        %v1315 = vsel %vm444, %v1313, %v1314
        %vm1316 = vcmask 236544
        %v1317 = vsel %vm1316, %v1310, %v1315
        %v1318 = vsel %vm1316, %v1312, %v1314
        %v1321 = vadd.f32 %v1292, %v1317
        %v1322 = vadd.f32 %v1293, %v1318
        %1323 = vset.pattern.permute.xlu0 32
        %1324 = vperm.xlu0 %1323, %v404
        %v1325 = vpop.permute.xlu0 %1324
        %v1327 = vunpack.c.l.s4 839922192
        %v1328 = vunpack.c.0.s8 %v1327
        %v1329 = vlaneseq
        %v1330 = vshrl.u32 %v1329, 7
        %v1331 = vsub.s32 %v1328, %v1330
        %v1332 = vrot.slane %v1325, %v1331
        %v1334 = vmul.f32 %v421, %v1332
        %v1335 = vmul.f32 %v422, %v1332
        %1338 = vrot.lane.b32.xlu0 %v1334, 28
        %v1339 = vpop.permute.xlu0 %1338
        %1340 = vrot.lane.b32.xlu0 %v1335, 28
        %v1341 = vpop.permute.xlu0 %1340
        %v1342 = vrot.slane %v1339, 4
        %v1343 = vrot.slane %v1341, 4
        %v1344 = vsel %vm444, %v1342, %v1343
        %vm1345 = vcmask 228352
        %v1346 = vsel %vm1345, %v1339, %v1344
        %v1347 = vsel %vm1345, %v1341, %v1343
        %v1350 = vadd.f32 %v1321, %v1346
        %v1351 = vadd.f32 %v1322, %v1347
        %1352 = vset.pattern.permute.xlu0 33
        %1353 = vperm.xlu0 %1352, %v404
        %v1354 = vpop.permute.xlu0 %1353
        %v1356 = vunpack.c.l.s4 839922192
        %v1357 = vunpack.c.0.s8 %v1356
        %v1358 = vlaneseq
        %v1359 = vshrl.u32 %v1358, 7
        %v1360 = vsub.s32 %v1357, %v1359
        %v1361 = vrot.slane %v1354, %v1360
        %v1363 = vmul.f32 %v421, %v1361
        %v1364 = vmul.f32 %v422, %v1361
        %1367 = vrot.lane.b32.xlu0 %v1363, 27
        %v1368 = vpop.permute.xlu0 %1367
        %1369 = vrot.lane.b32.xlu0 %v1364, 27
        %v1370 = vpop.permute.xlu0 %1369
        %v1371 = vrot.slane %v1368, 4
        %v1372 = vrot.slane %v1370, 4
        %v1373 = vsel %vm444, %v1371, %v1372
        %vm1374 = vcmask 220160
        %v1375 = vsel %vm1374, %v1368, %v1373
        %v1376 = vsel %vm1374, %v1370, %v1372
        %v1379 = vadd.f32 %v1350, %v1375
        %v1380 = vadd.f32 %v1351, %v1376
        %1381 = vset.pattern.permute.xlu0 34
        %1382 = vperm.xlu0 %1381, %v404
        %v1383 = vpop.permute.xlu0 %1382
        %v1385 = vunpack.c.l.s4 839922192
        %v1386 = vunpack.c.0.s8 %v1385
        %v1387 = vlaneseq
        %v1388 = vshrl.u32 %v1387, 7
        %v1389 = vsub.s32 %v1386, %v1388
        %v1390 = vrot.slane %v1383, %v1389
        %v1392 = vmul.f32 %v421, %v1390
        %v1393 = vmul.f32 %v422, %v1390
        %1396 = vrot.lane.b32.xlu0 %v1392, 26
        %v1397 = vpop.permute.xlu0 %1396
        %1398 = vrot.lane.b32.xlu0 %v1393, 26
        %v1399 = vpop.permute.xlu0 %1398
        %v1400 = vrot.slane %v1397, 4
        %v1401 = vrot.slane %v1399, 4
        %v1402 = vsel %vm444, %v1400, %v1401
        %vm1403 = vcmask 211968
        %v1404 = vsel %vm1403, %v1397, %v1402
        %v1405 = vsel %vm1403, %v1399, %v1401
        %v1408 = vadd.f32 %v1379, %v1404
        %v1409 = vadd.f32 %v1380, %v1405
        %1410 = vset.pattern.permute.xlu0 35
        %1411 = vperm.xlu0 %1410, %v404
        %v1412 = vpop.permute.xlu0 %1411
        %v1414 = vunpack.c.l.s4 839922192
        %v1415 = vunpack.c.0.s8 %v1414
        %v1416 = vlaneseq
        %v1417 = vshrl.u32 %v1416, 7
        %v1418 = vsub.s32 %v1415, %v1417
        %v1419 = vrot.slane %v1412, %v1418
        %v1421 = vmul.f32 %v421, %v1419
        %v1422 = vmul.f32 %v422, %v1419
        %1425 = vrot.lane.b32.xlu0 %v1421, 8
        %v1426 = vpop.permute.xlu0 %1425
        %1427 = vrot.lane.b32.xlu0 %v1422, 8
        %v1428 = vpop.permute.xlu0 %1427
        %v1429 = vrot.slane %v1426, 4
        %v1430 = vrot.slane %v1428, 4
        %v1431 = vsel %vm444, %v1429, %v1430
        %vm1432 = vcmask 64512
        %v1433 = vsel %vm1432, %v1426, %v1431
        %v1434 = vsel %vm1432, %v1428, %v1430
        %v1437 = vadd.f32 %v1408, %v1433
        %v1438 = vadd.f32 %v1409, %v1434
        %1439 = vset.pattern.permute.xlu0 36
        %1440 = vperm.xlu0 %1439, %v404
        %v1441 = vpop.permute.xlu0 %1440
        %v1443 = vunpack.c.l.s4 839922192
        %v1444 = vunpack.c.0.s8 %v1443
        %v1445 = vlaneseq
        %v1446 = vshrl.u32 %v1445, 7
        %v1447 = vsub.s32 %v1444, %v1446
        %v1448 = vrot.slane %v1441, %v1447
        %v1450 = vmul.f32 %v421, %v1448
        %v1451 = vmul.f32 %v422, %v1448
        %1454 = vrot.lane.b32.xlu0 %v1450, 7
        %v1455 = vpop.permute.xlu0 %1454
        %1456 = vrot.lane.b32.xlu0 %v1451, 7
        %v1457 = vpop.permute.xlu0 %1456
        %v1458 = vrot.slane %v1455, 4
        %v1459 = vrot.slane %v1457, 4
        %v1460 = vsel %vm444, %v1458, %v1459
        %vm1461 = vcmask 56320
        %v1462 = vsel %vm1461, %v1455, %v1460
        %v1463 = vsel %vm1461, %v1457, %v1459
        %v1466 = vadd.f32 %v1437, %v1462
        %v1467 = vadd.f32 %v1438, %v1463
        %1468 = vset.pattern.permute.xlu0 37
        %1469 = vperm.xlu0 %1468, %v404
        %v1470 = vpop.permute.xlu0 %1469
        %v1472 = vunpack.c.l.s4 839922192
        %v1473 = vunpack.c.0.s8 %v1472
        %v1474 = vlaneseq
        %v1475 = vshrl.u32 %v1474, 7
        %v1476 = vsub.s32 %v1473, %v1475
        %v1477 = vrot.slane %v1470, %v1476
        %v1479 = vmul.f32 %v421, %v1477
        %v1480 = vmul.f32 %v422, %v1477
        %1483 = vrot.lane.b32.xlu0 %v1479, 6
        %v1484 = vpop.permute.xlu0 %1483
        %1485 = vrot.lane.b32.xlu0 %v1480, 6
        %v1486 = vpop.permute.xlu0 %1485
        %v1487 = vrot.slane %v1484, 4
        %v1488 = vrot.slane %v1486, 4
        %v1489 = vsel %vm444, %v1487, %v1488
        %vm1490 = vcmask 48128
        %v1491 = vsel %vm1490, %v1484, %v1489
        %v1492 = vsel %vm1490, %v1486, %v1488
        %v1495 = vadd.f32 %v1466, %v1491
        %v1496 = vadd.f32 %v1467, %v1492
        %1497 = vset.pattern.permute.xlu0 38
        %1498 = vperm.xlu0 %1497, %v404
        %v1499 = vpop.permute.xlu0 %1498
        %v1501 = vunpack.c.l.s4 839922192
        %v1502 = vunpack.c.0.s8 %v1501
        %v1503 = vlaneseq
        %v1504 = vshrl.u32 %v1503, 7
        %v1505 = vsub.s32 %v1502, %v1504
        %v1506 = vrot.slane %v1499, %v1505
        %v1508 = vmul.f32 %v421, %v1506
        %v1509 = vmul.f32 %v422, %v1506
        %1512 = vrot.lane.b32.xlu0 %v1508, 5
        %v1513 = vpop.permute.xlu0 %1512
        %1514 = vrot.lane.b32.xlu0 %v1509, 5
        %v1515 = vpop.permute.xlu0 %1514
        %v1516 = vrot.slane %v1513, 4
        %v1517 = vrot.slane %v1515, 4
        %v1518 = vsel %vm444, %v1516, %v1517
        %vm1519 = vcmask 39936
        %v1520 = vsel %vm1519, %v1513, %v1518
        %v1521 = vsel %vm1519, %v1515, %v1517
        %v1524 = vadd.f32 %v1495, %v1520
        %v1525 = vadd.f32 %v1496, %v1521
        %1526 = vset.pattern.permute.xlu0 39
        %1527 = vperm.xlu0 %1526, %v404
        %v1528 = vpop.permute.xlu0 %1527
        %v1530 = vunpack.c.l.s4 839922192
        %v1531 = vunpack.c.0.s8 %v1530
        %v1532 = vlaneseq
        %v1533 = vshrl.u32 %v1532, 7
        %v1534 = vsub.s32 %v1531, %v1533
        %v1535 = vrot.slane %v1528, %v1534
        %v1537 = vmul.f32 %v421, %v1535
        %v1538 = vmul.f32 %v422, %v1535
        %1541 = vrot.lane.b32.xlu0 %v1537, 4
        %v1542 = vpop.permute.xlu0 %1541
        %1543 = vrot.lane.b32.xlu0 %v1538, 4
        %v1544 = vpop.permute.xlu0 %1543
        %v1545 = vrot.slane %v1542, 4
        %v1546 = vrot.slane %v1544, 4
        %v1547 = vsel %vm444, %v1545, %v1546
        %vm1548 = vcmask 31744
        %v1549 = vsel %vm1548, %v1542, %v1547
        %v1550 = vsel %vm1548, %v1544, %v1546
        %v1553 = vadd.f32 %v1524, %v1549
        %v1554 = vadd.f32 %v1525, %v1550
        %1555 = vset.pattern.permute.xlu0 40
        %1556 = vperm.xlu0 %1555, %v404
        %v1557 = vpop.permute.xlu0 %1556
        %v1559 = vunpack.c.l.s4 839922192
        %v1560 = vunpack.c.0.s8 %v1559
        %v1561 = vlaneseq
        %v1562 = vshrl.u32 %v1561, 7
        %v1563 = vsub.s32 %v1560, %v1562
        %v1564 = vrot.slane %v1557, %v1563
        %v1566 = vmul.f32 %v421, %v1564
        %v1567 = vmul.f32 %v422, %v1564
        %1570 = vrot.lane.b32.xlu0 %v1566, 3
        %v1571 = vpop.permute.xlu0 %1570
        %1572 = vrot.lane.b32.xlu0 %v1567, 3
        %v1573 = vpop.permute.xlu0 %1572
        %v1574 = vrot.slane %v1571, 4
        %v1575 = vrot.slane %v1573, 4
        %v1576 = vsel %vm444, %v1574, %v1575
        %vm1577 = vcmask 23552
        %v1578 = vsel %vm1577, %v1571, %v1576
        %v1579 = vsel %vm1577, %v1573, %v1575
        %v1582 = vadd.f32 %v1553, %v1578
        %v1583 = vadd.f32 %v1554, %v1579
        %1584 = vset.pattern.permute.xlu0 41
        %1585 = vperm.xlu0 %1584, %v404
        %v1586 = vpop.permute.xlu0 %1585
        %v1588 = vunpack.c.l.s4 839922192
        %v1589 = vunpack.c.0.s8 %v1588
        %v1590 = vlaneseq
        %v1591 = vshrl.u32 %v1590, 7
        %v1592 = vsub.s32 %v1589, %v1591
        %v1593 = vrot.slane %v1586, %v1592
        %v1595 = vmul.f32 %v421, %v1593
        %v1596 = vmul.f32 %v422, %v1593
        %1599 = vrot.lane.b32.xlu0 %v1595, 2
        %v1600 = vpop.permute.xlu0 %1599
        %1601 = vrot.lane.b32.xlu0 %v1596, 2
        %v1602 = vpop.permute.xlu0 %1601
        %v1603 = vrot.slane %v1600, 4
        %v1604 = vrot.slane %v1602, 4
        %v1605 = vsel %vm444, %v1603, %v1604
        %vm1606 = vcmask 15360
        %v1607 = vsel %vm1606, %v1600, %v1605
        %v1608 = vsel %vm1606, %v1602, %v1604
        %v1611 = vadd.f32 %v1582, %v1607
        %v1612 = vadd.f32 %v1583, %v1608
        %v1613 = vld [vmem:[%s401 + $0x4] sm:$0xff]
        %v1614 = vld [vmem:[%s401 + $0xc] sm:$0xff]
        %1615 = vset.pattern.permute.xlu0 42
        %1616 = vperm.xlu0 %1615, %v404
        %v1617 = vpop.permute.xlu0 %1616
        %v1619 = vunpack.c.l.s4 839922192
        %v1620 = vunpack.c.0.s8 %v1619
        %v1621 = vlaneseq
        %v1622 = vshrl.u32 %v1621, 7
        %v1623 = vsub.s32 %v1620, %v1622
        %v1624 = vrot.slane %v1617, %v1623
        %v1626 = vmul.f32 %v1613, %v1624
        %v1627 = vmul.f32 %v1614, %v1624
        %1630 = vrot.lane.b32.xlu0 %v1626, 112
        %v1631 = vpop.permute.xlu0 %1630
        %1632 = vrot.lane.b32.xlu0 %v1627, 112
        %v1633 = vpop.permute.xlu0 %1632
        %v1634 = vrot.slane %v1631, 4
        %v1635 = vrot.slane %v1633, 4
        %v1636 = vsel %vm444, %v1634, %v1635
        %vm1637 = vcmask 916480
        %v1638 = vsel %vm1637, %v1631, %v1636
        %v1639 = vsel %vm1637, %v1633, %v1635
        %v1642 = vadd.f32 %v1611, %v1638
        %v1643 = vadd.f32 %v1612, %v1639
        %1644 = vset.pattern.permute.xlu0 43
        %1645 = vperm.xlu0 %1644, %v404
        %v1646 = vpop.permute.xlu0 %1645
        %v1648 = vunpack.c.l.s4 839922192
        %v1649 = vunpack.c.0.s8 %v1648
        %v1650 = vlaneseq
        %v1651 = vshrl.u32 %v1650, 7
        %v1652 = vsub.s32 %v1649, %v1651
        %v1653 = vrot.slane %v1646, %v1652
        %v1655 = vmul.f32 %v1613, %v1653
        %v1656 = vmul.f32 %v1614, %v1653
        %1659 = vrot.lane.b32.xlu0 %v1655, 111
        %v1660 = vpop.permute.xlu0 %1659
        %1661 = vrot.lane.b32.xlu0 %v1656, 111
        %v1662 = vpop.permute.xlu0 %1661
        %v1663 = vrot.slane %v1660, 4
        %v1664 = vrot.slane %v1662, 4
        %v1665 = vsel %vm444, %v1663, %v1664
        %vm1666 = vcmask 908288
        %v1667 = vsel %vm1666, %v1660, %v1665
        %v1668 = vsel %vm1666, %v1662, %v1664
        %v1671 = vadd.f32 %v1642, %v1667
        %v1672 = vadd.f32 %v1643, %v1668
        %1673 = vset.pattern.permute.xlu0 44
        %1674 = vperm.xlu0 %1673, %v404
        %v1675 = vpop.permute.xlu0 %1674
        %v1677 = vunpack.c.l.s4 839922192
        %v1678 = vunpack.c.0.s8 %v1677
        %v1679 = vlaneseq
        %v1680 = vshrl.u32 %v1679, 7
        %v1681 = vsub.s32 %v1678, %v1680
        %v1682 = vrot.slane %v1675, %v1681
        %v1684 = vmul.f32 %v1613, %v1682
        %v1685 = vmul.f32 %v1614, %v1682
        %1688 = vrot.lane.b32.xlu0 %v1684, 110
        %v1689 = vpop.permute.xlu0 %1688
        %1690 = vrot.lane.b32.xlu0 %v1685, 110
        %v1691 = vpop.permute.xlu0 %1690
        %v1692 = vrot.slane %v1689, 4
        %v1693 = vrot.slane %v1691, 4
        %v1694 = vsel %vm444, %v1692, %v1693
        %vm1695 = vcmask 900096
        %v1696 = vsel %vm1695, %v1689, %v1694
        %v1697 = vsel %vm1695, %v1691, %v1693
        %v1700 = vadd.f32 %v1671, %v1696
        %v1701 = vadd.f32 %v1672, %v1697
        %1702 = vset.pattern.permute.xlu0 45
        %1703 = vperm.xlu0 %1702, %v404
        %v1704 = vpop.permute.xlu0 %1703
        %v1706 = vunpack.c.l.s4 839922192
        %v1707 = vunpack.c.0.s8 %v1706
        %v1708 = vlaneseq
        %v1709 = vshrl.u32 %v1708, 7
        %v1710 = vsub.s32 %v1707, %v1709
        %v1711 = vrot.slane %v1704, %v1710
        %v1713 = vmul.f32 %v1613, %v1711
        %v1714 = vmul.f32 %v1614, %v1711
        %1717 = vrot.lane.b32.xlu0 %v1713, 109
        %v1718 = vpop.permute.xlu0 %1717
        %1719 = vrot.lane.b32.xlu0 %v1714, 109
        %v1720 = vpop.permute.xlu0 %1719
        %v1721 = vrot.slane %v1718, 4
        %v1722 = vrot.slane %v1720, 4
        %v1723 = vsel %vm444, %v1721, %v1722
        %vm1724 = vcmask 891904
        %v1725 = vsel %vm1724, %v1718, %v1723
        %v1726 = vsel %vm1724, %v1720, %v1722
        %v1729 = vadd.f32 %v1700, %v1725
        %v1730 = vadd.f32 %v1701, %v1726
        %1731 = vset.pattern.permute.xlu0 46
        %1732 = vperm.xlu0 %1731, %v404
        %v1733 = vpop.permute.xlu0 %1732
        %v1735 = vunpack.c.l.s4 839922192
        %v1736 = vunpack.c.0.s8 %v1735
        %v1737 = vlaneseq
        %v1738 = vshrl.u32 %v1737, 7
        %v1739 = vsub.s32 %v1736, %v1738
        %v1740 = vrot.slane %v1733, %v1739
        %v1742 = vmul.f32 %v1613, %v1740
        %v1743 = vmul.f32 %v1614, %v1740
        %1746 = vrot.lane.b32.xlu0 %v1742, 108
        %v1747 = vpop.permute.xlu0 %1746
        %1748 = vrot.lane.b32.xlu0 %v1743, 108
        %v1749 = vpop.permute.xlu0 %1748
        %v1750 = vrot.slane %v1747, 4
        %v1751 = vrot.slane %v1749, 4
        %v1752 = vsel %vm444, %v1750, %v1751
        %vm1753 = vcmask 883712
        %v1754 = vsel %vm1753, %v1747, %v1752
        %v1755 = vsel %vm1753, %v1749, %v1751
        %v1758 = vadd.f32 %v1729, %v1754
        %v1759 = vadd.f32 %v1730, %v1755
        %1760 = vset.pattern.permute.xlu0 47
        %1761 = vperm.xlu0 %1760, %v404
        %v1762 = vpop.permute.xlu0 %1761
        %v1764 = vunpack.c.l.s4 839922192
        %v1765 = vunpack.c.0.s8 %v1764
        %v1766 = vlaneseq
        %v1767 = vshrl.u32 %v1766, 7
        %v1768 = vsub.s32 %v1765, %v1767
        %v1769 = vrot.slane %v1762, %v1768
        %v1771 = vmul.f32 %v1613, %v1769
        %v1772 = vmul.f32 %v1614, %v1769
        %1775 = vrot.lane.b32.xlu0 %v1771, 107
        %v1776 = vpop.permute.xlu0 %1775
        %1777 = vrot.lane.b32.xlu0 %v1772, 107
        %v1778 = vpop.permute.xlu0 %1777
        %v1779 = vrot.slane %v1776, 4
        %v1780 = vrot.slane %v1778, 4
        %v1781 = vsel %vm444, %v1779, %v1780
        %vm1782 = vcmask 875520
        %v1783 = vsel %vm1782, %v1776, %v1781
        %v1784 = vsel %vm1782, %v1778, %v1780
        %v1787 = vadd.f32 %v1758, %v1783
        %v1788 = vadd.f32 %v1759, %v1784
        %1789 = vset.pattern.permute.xlu0 48
        %1790 = vperm.xlu0 %1789, %v404
        %v1791 = vpop.permute.xlu0 %1790
        %v1793 = vunpack.c.l.s4 839922192
        %v1794 = vunpack.c.0.s8 %v1793
        %v1795 = vlaneseq
        %v1796 = vshrl.u32 %v1795, 7
        %v1797 = vsub.s32 %v1794, %v1796
        %v1798 = vrot.slane %v1791, %v1797
        %v1800 = vmul.f32 %v1613, %v1798
        %v1801 = vmul.f32 %v1614, %v1798
        %1804 = vrot.lane.b32.xlu0 %v1800, 106
        %v1805 = vpop.permute.xlu0 %1804
        %1806 = vrot.lane.b32.xlu0 %v1801, 106
        %v1807 = vpop.permute.xlu0 %1806
        %v1808 = vrot.slane %v1805, 4
        %v1809 = vrot.slane %v1807, 4
        %v1810 = vsel %vm444, %v1808, %v1809
        %vm1811 = vcmask 867328
        %v1812 = vsel %vm1811, %v1805, %v1810
        %v1813 = vsel %vm1811, %v1807, %v1809
        %v1816 = vadd.f32 %v1787, %v1812
        %v1817 = vadd.f32 %v1788, %v1813
        %v1818 = vld [vmem:[%s396] sm:$0xf]
        %1820 = vset.pattern.permute.xlu0 0
        %1821 = vperm.xlu0 %1820, %v1818
        %v1822 = vpop.permute.xlu0 %1821
        %v1824 = vunpack.c.l.s4 839922192
        %v1825 = vunpack.c.0.s8 %v1824
        %v1826 = vlaneseq
        %v1827 = vshrl.u32 %v1826, 7
        %v1828 = vsub.s32 %v1825, %v1827
        %v1829 = vrot.slane %v1822, %v1828
        %v1831 = vadd.f32 %v1816, %v1829
        %v1832 = vadd.f32 %v1817, %v1829
        %v1835 = vrot.slane %v1831, 5
        %v1836 = vrot.slane %v1835, 4
        %v1837 = vrot.slane %v1832, 5
        %v1838 = vrot.slane %v1837, 4
        %v1841 = vadd.f32 %v1831, %v1836
        %v1842 = vadd.f32 %v1832, %v1838
        %v1843 = vrot.slane %v1831, 6
        %v1844 = vrot.slane %v1843, 4
        %v1845 = vrot.slane %v1832, 6
        %v1846 = vrot.slane %v1845, 4
        %v1849 = vadd.f32 %v1841, %v1844
        %v1850 = vadd.f32 %v1842, %v1846
        %v1851 = vrot.slane %v1831, 7
        %v1852 = vrot.slane %v1851, 4
        %v1853 = vrot.slane %v1832, 7
        %v1854 = vrot.slane %v1853, 4
        %v1857 = vadd.f32 %v1849, %v1852
        %v1858 = vadd.f32 %v1850, %v1854
        %v1859 = vmul.f32 %v1857, 0.25
        %v1860 = vmul.f32 %v1858, 0.25
        %v1863 = vlaneseq
        %v1864 = vshrl.u32 %v1863, 7
        %v1865 = vsub.s32 0, %v1864
        %v1866 = vrot.slane %v1859, %v1865
        %v1867 = vlaneseq
        %v1868 = vshrl.u32 %v1867, 7
        %v1869 = vsub.s32 4, %v1868
        %v1870 = vrot.slane %v1859, %v1869
        %v1871 = vlaneseq
        %v1872 = vshrl.u32 %v1871, 7
        %v1873 = vsub.s32 0, %v1872
        %v1874 = vrot.slane %v1860, %v1873
        %v1878 = vlaneseq
        %v1879 = vshrl.u32 %v1878, 7
        %v1880 = vsub.s32 0, %v1879
        %v1881 = vrot.slane %v1866, %v1880
        %v1882 = vlaneseq
        %v1883 = vshrl.u32 %v1882, 7
        %v1884 = vsub.s32 0, %v1883
        %v1885 = vrot.slane %v1870, %v1884
        %v1886 = vlaneseq
        %v1887 = vshrl.u32 %v1886, 7
        %v1888 = vsub.s32 0, %v1887
        %v1889 = vrot.slane %v1874, %v1888
        %v1892 = vcombine.low %v1881, %v1885
        %v1894 = vsub.f32 %v1831, %v1892
        %v1895 = vsub.f32 %v1832, %v1889
        %v1896 = vmul.f32 %v1894, %v1894
        %v1897 = vmul.f32 %v1895, %v1895
        %v1900 = vrot.slane %v1896, 5
        %v1901 = vrot.slane %v1900, 4
        %v1902 = vrot.slane %v1897, 5
        %v1903 = vrot.slane %v1902, 4
        %v1906 = vadd.f32 %v1896, %v1901
        %v1907 = vadd.f32 %v1897, %v1903
        %v1908 = vrot.slane %v1896, 6
        %v1909 = vrot.slane %v1908, 4
        %v1910 = vrot.slane %v1897, 6
        %v1911 = vrot.slane %v1910, 4
        %v1914 = vadd.f32 %v1906, %v1909
        %v1915 = vadd.f32 %v1907, %v1911
        %v1916 = vrot.slane %v1896, 7
        %v1917 = vrot.slane %v1916, 4
        %v1918 = vrot.slane %v1897, 7
        %v1919 = vrot.slane %v1918, 4
        %v1922 = vadd.f32 %v1914, %v1917
        %v1923 = vadd.f32 %v1915, %v1919
        %v1924 = vmul.f32 %v1922, 0.25
        %v1925 = vmul.f32 %v1923, 0.25
        %v1926 = vadd.f32 %v1924, 1e-05
        %v1927 = vadd.f32 %v1925, 1e-05
        %v1928 = vrsqrt.pop %v1926
        %v1929 = vrsqrt.pop %v1927
        %v1932 = vlaneseq
        %v1933 = vshrl.u32 %v1932, 7
        %v1934 = vsub.s32 0, %v1933
        %v1935 = vrot.slane %v1928, %v1934
        %v1936 = vlaneseq
        %v1937 = vshrl.u32 %v1936, 7
        %v1938 = vsub.s32 4, %v1937
        %v1939 = vrot.slane %v1928, %v1938
        %v1940 = vlaneseq
        %v1941 = vshrl.u32 %v1940, 7
        %v1942 = vsub.s32 0, %v1941
        %v1943 = vrot.slane %v1929, %v1942
        %v1947 = vlaneseq
        %v1948 = vshrl.u32 %v1947, 7
        %v1949 = vsub.s32 0, %v1948
        %v1950 = vrot.slane %v1935, %v1949
        %v1951 = vlaneseq
        %v1952 = vshrl.u32 %v1951, 7
        %v1953 = vsub.s32 0, %v1952
        %v1954 = vrot.slane %v1939, %v1953
        %v1955 = vlaneseq
        %v1956 = vshrl.u32 %v1955, 7
        %v1957 = vsub.s32 0, %v1956
        %v1958 = vrot.slane %v1943, %v1957
        %v1961 = vcombine.low %v1950, %v1954
        %v1963 = vmul.f32 %v1894, %v1961
        %v1964 = vmul.f32 %v1895, %v1958
        %v1965 = vld [vmem:[%s3] sm:$0xf]
        %1967 = vset.pattern.permute.xlu0 0
        %1968 = vperm.xlu0 %1967, %v1965
        %v1969 = vpop.permute.xlu0 %1968
        %v1971 = vunpack.c.l.s4 839922192
        %v1972 = vunpack.c.0.s8 %v1971
        %v1973 = vlaneseq
        %v1974 = vshrl.u32 %v1973, 7
        %v1975 = vsub.s32 %v1972, %v1974
        %v1976 = vrot.slane %v1969, %v1975
        %v1978 = vmul.f32 %v1963, %v1976
        %v1979 = vmul.f32 %v1964, %v1976
        %v1980 = vld [vmem:[%s4] sm:$0xf]
        %1982 = vset.pattern.permute.xlu0 0
        %1983 = vperm.xlu0 %1982, %v1980
        %v1984 = vpop.permute.xlu0 %1983
        %v1986 = vunpack.c.l.s4 839922192
        %v1987 = vunpack.c.0.s8 %v1986
        %v1988 = vlaneseq
        %v1989 = vshrl.u32 %v1988, 7
        %v1990 = vsub.s32 %v1987, %v1989
        %v1991 = vrot.slane %v1984, %v1990
        %v1993 = vadd.f32 %v1978, %v1991
        %v1994 = vadd.f32 %v1979, %v1991
        %v1995 = vld [vmem:[%s5] sm:$0x7]
        %v1997 = vlaneseq
        %v1998 = vshrl.u32 %v1997, 7
        %v1999 = vsub.s32 0, %v1998
        %v2000 = vrot.slane %v1995, %v1999
        %v2001 = vlaneseq
        %v2002 = vshrl.u32 %v2001, 7
        %v2003 = vsub.s32 1, %v2002
        %v2004 = vrot.slane %v1995, %v2003
        %v2005 = vlaneseq
        %v2006 = vshrl.u32 %v2005, 7
        %v2007 = vsub.s32 2, %v2006
        %v2008 = vrot.slane %v1995, %v2007
        %v2010 = vcombine.low %v2000, %v2004
        %v2012 = vmul.f32 %v1993, %v2010
        %v2013 = vmul.f32 %v1994, %v2008
        %2014 = vst [vmem:[#allocation2] sm:$0xf] 0.0
        %2015 = vst [vmem:[#allocation2 + $0x10] sm:$0xf] 0.0
        %2016 = vst [vmem:[#allocation2 + $0x4] sm:$0xff] %v2012
        %2017 = vst [vmem:[#allocation2 + $0xc] sm:$0xf] %v2013
        %v2018 = vld [vmem:[%s6] sm:$0xff]
        %v2019 = vld [vmem:[#allocation2] sm:$0xff]
        %v2020 = vld [vmem:[#allocation2 + $0x8] sm:$0xff]
        %s2021 = scalar_lea.vmem %s6, 8
        %v2022 = vld [vmem:[%s2021] sm:$0xff]
        %v2025 = vcombine.high %v2019, %v2019
        %v2026 = vcombine.high %v2020, %v2020
        %2027 = vrot.lane.b32.xlu0 %v2019, 24
        %v2028 = vpop.permute.xlu0 %2027
        %2029 = vrot.lane.b32.xlu0 %v2025, 24
        %v2030 = vpop.permute.xlu0 %2029
        %2031 = vrot.lane.b32.xlu0 %v2020, 24
        %v2032 = vpop.permute.xlu0 %2031
        %2033 = vrot.lane.b32.xlu0 %v2026, 24
        %v2034 = vpop.permute.xlu0 %2033
        %vm2035 = vcmask 195584
        %v2036 = vsel %vm2035, %v2028, %v2030
        %v2037 = vsel %vm2035, %v2030, %v2032
        %v2038 = vsel %vm2035, %v2032, %v2034
        %v2040 = vsel %vm1548, %v2022, 0
        %v2042 = vsel %vm444, %v2036, 0
        %v2044 = vsel %vm444, %v2037, 0
        %v2046 = vsel %vm444, %v2038, 0
        %2048 = vmatprep.subr.mxu0 0.0
        %2049 = vmatpush1.msra.mxu0 0.0
        %2050 = vmatprep.subr.mxu0 0.0
        %2051 = vmatpush1.msra.mxu0 0.0
        %2052 = vmatprep.subr.mxu0 0.0
        %2053 = vmatpush1.msra.mxu0 0.0
        %2054 = vmatprep.subr.mxu0 0.0
        %2055 = vmatpush1.msra.mxu0 0.0
        %2056 = vmatprep.subr.mxu0 0.0
        %2057 = vmatpush1.msra.mxu0 0.0
        %2058 = vmatprep.subr.mxu0 0.0
        %2059 = vmatpush1.msra.mxu0 0.0
        %2060 = vmatprep.subr.mxu0 0.0
        %2061 = vmatpush1.msra.mxu0 0.0
        %2062 = vmatprep.subr.mxu0 0.0
        %2063 = vmatpush1.msra.mxu0 0.0
        %2064 = vmatprep.subr.mxu0 0.0
        %2065 = vmatpush1.msra.mxu0 0.0
        %2066 = vmatprep.subr.mxu0 0.0
        %2067 = vmatpush1.msra.mxu0 0.0
        %2068 = vmatprep.subr.mxu0 0.0
        %2069 = vmatpush1.msra.mxu0 0.0
        %2070 = vmatprep.subr.mxu0 0.0
        %2071 = vmatpush1.msra.mxu0 0.0
        %2072 = vmatprep.subr.mxu0 0.0
        %2073 = vmatpush1.msra.mxu0 0.0
        %2074 = vmatprep.subr.mxu0 0.0
        %2075 = vmatpush1.msra.mxu0 0.0
        %2076 = vmatprep.subr.mxu0 0.0
        %2077 = vmatpush1.msra.mxu0 0.0
        %2078 = vmatprep.subr.mxu0 %v2044
        %2079 = vmatpush1.msra.mxu0 %v2042
        %2080 = vmatprep.subr.mxu0 0.0
        %2081 = vmatpush2.msra.mxu0 0.0
        %2082 = vmatprep.subr.mxu0 0.0
        %2083 = vmatpush2.msra.mxu0 0.0
        %2084 = vmatprep.subr.mxu0 0.0
        %2085 = vmatpush2.msra.mxu0 0.0
        %2086 = vmatprep.subr.mxu0 0.0
        %2087 = vmatpush2.msra.mxu0 0.0
        %2088 = vmatprep.subr.mxu0 0.0
        %2089 = vmatpush2.msra.mxu0 0.0
        %2090 = vmatprep.subr.mxu0 0.0
        %2091 = vmatpush2.msra.mxu0 0.0
        %2092 = vmatprep.subr.mxu0 0.0
        %2093 = vmatpush2.msra.mxu0 0.0
        %2094 = vmatprep.subr.mxu0 0.0
        %2095 = vmatpush2.msra.mxu0 0.0
        %2096 = vmatprep.subr.mxu0 0.0
        %2097 = vmatpush2.msra.mxu0 0.0
        %2098 = vmatprep.subr.mxu0 0.0
        %2099 = vmatpush2.msra.mxu0 0.0
        %2100 = vmatprep.subr.mxu0 0.0
        %2101 = vmatpush2.msra.mxu0 0.0
        %2102 = vmatprep.subr.mxu0 0.0
        %2103 = vmatpush2.msra.mxu0 0.0
        %2104 = vmatprep.subr.mxu0 0.0
        %2105 = vmatpush2.msra.mxu0 0.0
        %2106 = vmatprep.subr.mxu0 0.0
        %2107 = vmatpush2.msra.mxu0 0.0
        %2108 = vmatprep.subr.mxu0 0.0
        %2109 = vmatpush2.msra.mxu0 0.0
        %2110 = vmatprep.subr.mxu0 0.0
        %2111 = vmatpush2.msra.mxu0 0.0
        %2112 = vmatprep.mubr.f32.mxu0 0.0
        %2113 = vmatmul.mubr.f32.gmra.mxu0 %v2040
        %v2114 = vpop.f32.mrf.mxu0
        %v2115 = vadd.f32 0.0, %v2114
        %v2116 = vpop.f32.mrf.mxu0
        %v2117 = vadd.f32 0.0, %v2116
        %2118 = vdwg.mxu0
        %2119 = vmatprep.subr.mxu0 0.0
        %2120 = vmatpush1.msra.mxu0 0.0
        %2121 = vmatprep.subr.mxu0 0.0
        %2122 = vmatpush1.msra.mxu0 0.0
        %2123 = vmatprep.subr.mxu0 0.0
        %2124 = vmatpush1.msra.mxu0 0.0
        %2125 = vmatprep.subr.mxu0 0.0
        %2126 = vmatpush1.msra.mxu0 0.0
        %2127 = vmatprep.subr.mxu0 0.0
        %2128 = vmatpush1.msra.mxu0 0.0
        %2129 = vmatprep.subr.mxu0 0.0
        %2130 = vmatpush1.msra.mxu0 0.0
        %2131 = vmatprep.subr.mxu0 0.0
        %2132 = vmatpush1.msra.mxu0 0.0
        %2133 = vmatprep.subr.mxu0 0.0
        %2134 = vmatpush1.msra.mxu0 0.0
        %2135 = vmatprep.subr.mxu0 0.0
        %2136 = vmatpush1.msra.mxu0 0.0
        %2137 = vmatprep.subr.mxu0 0.0
        %2138 = vmatpush1.msra.mxu0 0.0
        %2139 = vmatprep.subr.mxu0 0.0
        %2140 = vmatpush1.msra.mxu0 0.0
        %2141 = vmatprep.subr.mxu0 0.0
        %2142 = vmatpush1.msra.mxu0 0.0
        %2143 = vmatprep.subr.mxu0 0.0
        %2144 = vmatpush1.msra.mxu0 0.0
        %2145 = vmatprep.subr.mxu0 0.0
        %2146 = vmatpush1.msra.mxu0 0.0
        %2147 = vmatprep.subr.mxu0 0.0
        %2148 = vmatpush1.msra.mxu0 0.0
        %2149 = vmatprep.subr.mxu0 0.0
        %2150 = vmatpush1.msra.mxu0 %v2046
        %2151 = vmatprep.subr.mxu0 0.0
        %2152 = vmatpush2.msra.mxu0 0.0
        %2153 = vmatprep.subr.mxu0 0.0
        %2154 = vmatpush2.msra.mxu0 0.0
        %2155 = vmatprep.subr.mxu0 0.0
        %2156 = vmatpush2.msra.mxu0 0.0
        %2157 = vmatprep.subr.mxu0 0.0
        %2158 = vmatpush2.msra.mxu0 0.0
        %2159 = vmatprep.subr.mxu0 0.0
        %2160 = vmatpush2.msra.mxu0 0.0
        %2161 = vmatprep.subr.mxu0 0.0
        %2162 = vmatpush2.msra.mxu0 0.0
        %2163 = vmatprep.subr.mxu0 0.0
        %2164 = vmatpush2.msra.mxu0 0.0
        %2165 = vmatprep.subr.mxu0 0.0
        %2166 = vmatpush2.msra.mxu0 0.0
        %2167 = vmatprep.subr.mxu0 0.0
        %2168 = vmatpush2.msra.mxu0 0.0
        %2169 = vmatprep.subr.mxu0 0.0
        %2170 = vmatpush2.msra.mxu0 0.0
        %2171 = vmatprep.subr.mxu0 0.0
        %2172 = vmatpush2.msra.mxu0 0.0
        %2173 = vmatprep.subr.mxu0 0.0
        %2174 = vmatpush2.msra.mxu0 0.0
        %2175 = vmatprep.subr.mxu0 0.0
        %2176 = vmatpush2.msra.mxu0 0.0
        %2177 = vmatprep.subr.mxu0 0.0
        %2178 = vmatpush2.msra.mxu0 0.0
        %2179 = vmatprep.subr.mxu0 0.0
        %2180 = vmatpush2.msra.mxu0 0.0
        %2181 = vmatprep.subr.mxu0 0.0
        %2182 = vmatpush2.msra.mxu0 0.0
        %2183 = vmatprep.mubr.f32.mxu0 0.0
        %2184 = vmatmul.mubr.f32.gmra.mxu0 %v2040
        %v2185 = vpop.f32.mrf.mxu0
        %v2186 = vadd.f32 0.0, %v2185
        %v2187 = vpop.f32.mrf.mxu0
        %2188 = vdwg.mxu0
        %2189 = vrot.lane.b32.xlu0 %v2019, 25
        %v2190 = vpop.permute.xlu0 %2189
        %2191 = vrot.lane.b32.xlu0 %v2025, 25
        %v2192 = vpop.permute.xlu0 %2191
        %2193 = vrot.lane.b32.xlu0 %v2020, 25
        %v2194 = vpop.permute.xlu0 %2193
        %2195 = vrot.lane.b32.xlu0 %v2026, 25
        %v2196 = vpop.permute.xlu0 %2195
        %vm2197 = vcmask 203776
        %v2198 = vsel %vm2197, %v2190, %v2192
        %v2199 = vsel %vm2197, %v2192, %v2194
        %v2200 = vsel %vm2197, %v2194, %v2196
        %v2202 = vsel %vm1548, %v2018, 0
        %v2204 = vsel %vm444, %v2198, 0
        %v2206 = vsel %vm444, %v2199, 0
        %v2208 = vsel %vm444, %v2200, 0
        %2210 = vmatprep.subr.mxu0 0.0
        %2211 = vmatpush1.msra.mxu0 0.0
        %2212 = vmatprep.subr.mxu0 0.0
        %2213 = vmatpush1.msra.mxu0 0.0
        %2214 = vmatprep.subr.mxu0 0.0
        %2215 = vmatpush1.msra.mxu0 0.0
        %2216 = vmatprep.subr.mxu0 0.0
        %2217 = vmatpush1.msra.mxu0 0.0
        %2218 = vmatprep.subr.mxu0 0.0
        %2219 = vmatpush1.msra.mxu0 0.0
        %2220 = vmatprep.subr.mxu0 0.0
        %2221 = vmatpush1.msra.mxu0 0.0
        %2222 = vmatprep.subr.mxu0 0.0
        %2223 = vmatpush1.msra.mxu0 0.0
        %2224 = vmatprep.subr.mxu0 0.0
        %2225 = vmatpush1.msra.mxu0 0.0
        %2226 = vmatprep.subr.mxu0 0.0
        %2227 = vmatpush1.msra.mxu0 0.0
        %2228 = vmatprep.subr.mxu0 0.0
        %2229 = vmatpush1.msra.mxu0 0.0
        %2230 = vmatprep.subr.mxu0 0.0
        %2231 = vmatpush1.msra.mxu0 0.0
        %2232 = vmatprep.subr.mxu0 0.0
        %2233 = vmatpush1.msra.mxu0 0.0
        %2234 = vmatprep.subr.mxu0 0.0
        %2235 = vmatpush1.msra.mxu0 0.0
        %2236 = vmatprep.subr.mxu0 0.0
        %2237 = vmatpush1.msra.mxu0 0.0
        %2238 = vmatprep.subr.mxu0 0.0
        %2239 = vmatpush1.msra.mxu0 0.0
        %2240 = vmatprep.subr.mxu0 %v2206
        %2241 = vmatpush1.msra.mxu0 %v2204
        %2242 = vmatprep.subr.mxu0 0.0
        %2243 = vmatpush2.msra.mxu0 0.0
        %2244 = vmatprep.subr.mxu0 0.0
        %2245 = vmatpush2.msra.mxu0 0.0
        %2246 = vmatprep.subr.mxu0 0.0
        %2247 = vmatpush2.msra.mxu0 0.0
        %2248 = vmatprep.subr.mxu0 0.0
        %2249 = vmatpush2.msra.mxu0 0.0
        %2250 = vmatprep.subr.mxu0 0.0
        %2251 = vmatpush2.msra.mxu0 0.0
        %2252 = vmatprep.subr.mxu0 0.0
        %2253 = vmatpush2.msra.mxu0 0.0
        %2254 = vmatprep.subr.mxu0 0.0
        %2255 = vmatpush2.msra.mxu0 0.0
        %2256 = vmatprep.subr.mxu0 0.0
        %2257 = vmatpush2.msra.mxu0 0.0
        %2258 = vmatprep.subr.mxu0 0.0
        %2259 = vmatpush2.msra.mxu0 0.0
        %2260 = vmatprep.subr.mxu0 0.0
        %2261 = vmatpush2.msra.mxu0 0.0
        %2262 = vmatprep.subr.mxu0 0.0
        %2263 = vmatpush2.msra.mxu0 0.0
        %2264 = vmatprep.subr.mxu0 0.0
        %2265 = vmatpush2.msra.mxu0 0.0
        %2266 = vmatprep.subr.mxu0 0.0
        %2267 = vmatpush2.msra.mxu0 0.0
        %2268 = vmatprep.subr.mxu0 0.0
        %2269 = vmatpush2.msra.mxu0 0.0
        %2270 = vmatprep.subr.mxu0 0.0
        %2271 = vmatpush2.msra.mxu0 0.0
        %2272 = vmatprep.subr.mxu0 0.0
        %2273 = vmatpush2.msra.mxu0 0.0
        %2274 = vmatprep.mubr.f32.mxu0 0.0
        %2275 = vmatmul.mubr.f32.gmra.mxu0 %v2202
        %v2276 = vpop.f32.mrf.mxu0
        %v2277 = vadd.f32 %v2115, %v2276
        %v2278 = vpop.f32.mrf.mxu0
        %v2279 = vadd.f32 %v2117, %v2278
        %2280 = vdwg.mxu0
        %2281 = vmatprep.subr.mxu0 0.0
        %2282 = vmatpush1.msra.mxu0 0.0
        %2283 = vmatprep.subr.mxu0 0.0
        %2284 = vmatpush1.msra.mxu0 0.0
        %2285 = vmatprep.subr.mxu0 0.0
        %2286 = vmatpush1.msra.mxu0 0.0
        %2287 = vmatprep.subr.mxu0 0.0
        %2288 = vmatpush1.msra.mxu0 0.0
        %2289 = vmatprep.subr.mxu0 0.0
        %2290 = vmatpush1.msra.mxu0 0.0
        %2291 = vmatprep.subr.mxu0 0.0
        %2292 = vmatpush1.msra.mxu0 0.0
        %2293 = vmatprep.subr.mxu0 0.0
        %2294 = vmatpush1.msra.mxu0 0.0
        %2295 = vmatprep.subr.mxu0 0.0
        %2296 = vmatpush1.msra.mxu0 0.0
        %2297 = vmatprep.subr.mxu0 0.0
        %2298 = vmatpush1.msra.mxu0 0.0
        %2299 = vmatprep.subr.mxu0 0.0
        %2300 = vmatpush1.msra.mxu0 0.0
        %2301 = vmatprep.subr.mxu0 0.0
        %2302 = vmatpush1.msra.mxu0 0.0
        %2303 = vmatprep.subr.mxu0 0.0
        %2304 = vmatpush1.msra.mxu0 0.0
        %2305 = vmatprep.subr.mxu0 0.0
        %2306 = vmatpush1.msra.mxu0 0.0
        %2307 = vmatprep.subr.mxu0 0.0
        %2308 = vmatpush1.msra.mxu0 0.0
        %2309 = vmatprep.subr.mxu0 0.0
        %2310 = vmatpush1.msra.mxu0 0.0
        %2311 = vmatprep.subr.mxu0 0.0
        %2312 = vmatpush1.msra.mxu0 %v2208
        %2313 = vmatprep.subr.mxu0 0.0
        %2314 = vmatpush2.msra.mxu0 0.0
        %2315 = vmatprep.subr.mxu0 0.0
        %2316 = vmatpush2.msra.mxu0 0.0
        %2317 = vmatprep.subr.mxu0 0.0
        %2318 = vmatpush2.msra.mxu0 0.0
        %2319 = vmatprep.subr.mxu0 0.0
        %2320 = vmatpush2.msra.mxu0 0.0
        %2321 = vmatprep.subr.mxu0 0.0
        %2322 = vmatpush2.msra.mxu0 0.0
        %2323 = vmatprep.subr.mxu0 0.0
        %2324 = vmatpush2.msra.mxu0 0.0
        %2325 = vmatprep.subr.mxu0 0.0
        %2326 = vmatpush2.msra.mxu0 0.0
        %2327 = vmatprep.subr.mxu0 0.0
        %2328 = vmatpush2.msra.mxu0 0.0
        %2329 = vmatprep.subr.mxu0 0.0
        %2330 = vmatpush2.msra.mxu0 0.0
        %2331 = vmatprep.subr.mxu0 0.0
        %2332 = vmatpush2.msra.mxu0 0.0
        %2333 = vmatprep.subr.mxu0 0.0
        %2334 = vmatpush2.msra.mxu0 0.0
        %2335 = vmatprep.subr.mxu0 0.0
        %2336 = vmatpush2.msra.mxu0 0.0
        %2337 = vmatprep.subr.mxu0 0.0
        %2338 = vmatpush2.msra.mxu0 0.0
        %2339 = vmatprep.subr.mxu0 0.0
        %2340 = vmatpush2.msra.mxu0 0.0
        %2341 = vmatprep.subr.mxu0 0.0
        %2342 = vmatpush2.msra.mxu0 0.0
        %2343 = vmatprep.subr.mxu0 0.0
        %2344 = vmatpush2.msra.mxu0 0.0
        %2345 = vmatprep.mubr.f32.mxu0 0.0
        %2346 = vmatmul.mubr.f32.gmra.mxu0 %v2202
        %v2347 = vpop.f32.mrf.mxu0
        %v2348 = vadd.f32 %v2186, %v2347
        %v2349 = vpop.f32.mrf.mxu0
        %2350 = vdwg.mxu0
        %s2351 = scalar_lea.vmem %s6, 16
        %v2352 = vld [vmem:[%s2351] sm:$0xff]
        %v2353 = vld [vmem:[#allocation2] sm:$0xff]
        %v2354 = vld [vmem:[#allocation2 + $0x8] sm:$0xff]
        %v2357 = vcombine.high %v2353, %v2353
        %v2358 = vcombine.high %v2354, %v2354
        %2359 = vrot.lane.b32.xlu0 %v2353, 23
        %v2360 = vpop.permute.xlu0 %2359
        %2361 = vrot.lane.b32.xlu0 %v2357, 23
        %v2362 = vpop.permute.xlu0 %2361
        %2363 = vrot.lane.b32.xlu0 %v2354, 23
        %v2364 = vpop.permute.xlu0 %2363
        %2365 = vrot.lane.b32.xlu0 %v2358, 23
        %v2366 = vpop.permute.xlu0 %2365
        %vm2367 = vcmask 187392
        %v2368 = vsel %vm2367, %v2360, %v2362
        %v2369 = vsel %vm2367, %v2362, %v2364
        %v2370 = vsel %vm2367, %v2364, %v2366
        %v2372 = vsel %vm1548, %v2352, 0
        %v2374 = vsel %vm444, %v2368, 0
        %v2376 = vsel %vm444, %v2369, 0
        %v2378 = vsel %vm444, %v2370, 0
        %2380 = vmatprep.subr.mxu0 0.0
        %2381 = vmatpush1.msra.mxu0 0.0
        %2382 = vmatprep.subr.mxu0 0.0
        %2383 = vmatpush1.msra.mxu0 0.0
        %2384 = vmatprep.subr.mxu0 0.0
        %2385 = vmatpush1.msra.mxu0 0.0
        %2386 = vmatprep.subr.mxu0 0.0
        %2387 = vmatpush1.msra.mxu0 0.0
        %2388 = vmatprep.subr.mxu0 0.0
        %2389 = vmatpush1.msra.mxu0 0.0
        %2390 = vmatprep.subr.mxu0 0.0
        %2391 = vmatpush1.msra.mxu0 0.0
        %2392 = vmatprep.subr.mxu0 0.0
        %2393 = vmatpush1.msra.mxu0 0.0
        %2394 = vmatprep.subr.mxu0 0.0
        %2395 = vmatpush1.msra.mxu0 0.0
        %2396 = vmatprep.subr.mxu0 0.0
        %2397 = vmatpush1.msra.mxu0 0.0
        %2398 = vmatprep.subr.mxu0 0.0
        %2399 = vmatpush1.msra.mxu0 0.0
        %2400 = vmatprep.subr.mxu0 0.0
        %2401 = vmatpush1.msra.mxu0 0.0
        %2402 = vmatprep.subr.mxu0 0.0
        %2403 = vmatpush1.msra.mxu0 0.0
        %2404 = vmatprep.subr.mxu0 0.0
        %2405 = vmatpush1.msra.mxu0 0.0
        %2406 = vmatprep.subr.mxu0 0.0
        %2407 = vmatpush1.msra.mxu0 0.0
        %2408 = vmatprep.subr.mxu0 0.0
        %2409 = vmatpush1.msra.mxu0 0.0
        %2410 = vmatprep.subr.mxu0 %v2376
        %2411 = vmatpush1.msra.mxu0 %v2374
        %2412 = vmatprep.subr.mxu0 0.0
        %2413 = vmatpush2.msra.mxu0 0.0
        %2414 = vmatprep.subr.mxu0 0.0
        %2415 = vmatpush2.msra.mxu0 0.0
        %2416 = vmatprep.subr.mxu0 0.0
        %2417 = vmatpush2.msra.mxu0 0.0
        %2418 = vmatprep.subr.mxu0 0.0
        %2419 = vmatpush2.msra.mxu0 0.0
        %2420 = vmatprep.subr.mxu0 0.0
        %2421 = vmatpush2.msra.mxu0 0.0
        %2422 = vmatprep.subr.mxu0 0.0
        %2423 = vmatpush2.msra.mxu0 0.0
        %2424 = vmatprep.subr.mxu0 0.0
        %2425 = vmatpush2.msra.mxu0 0.0
        %2426 = vmatprep.subr.mxu0 0.0
        %2427 = vmatpush2.msra.mxu0 0.0
        %2428 = vmatprep.subr.mxu0 0.0
        %2429 = vmatpush2.msra.mxu0 0.0
        %2430 = vmatprep.subr.mxu0 0.0
        %2431 = vmatpush2.msra.mxu0 0.0
        %2432 = vmatprep.subr.mxu0 0.0
        %2433 = vmatpush2.msra.mxu0 0.0
        %2434 = vmatprep.subr.mxu0 0.0
        %2435 = vmatpush2.msra.mxu0 0.0
        %2436 = vmatprep.subr.mxu0 0.0
        %2437 = vmatpush2.msra.mxu0 0.0
        %2438 = vmatprep.subr.mxu0 0.0
        %2439 = vmatpush2.msra.mxu0 0.0
        %2440 = vmatprep.subr.mxu0 0.0
        %2441 = vmatpush2.msra.mxu0 0.0
        %2442 = vmatprep.subr.mxu0 0.0
        %2443 = vmatpush2.msra.mxu0 0.0
        %2444 = vmatprep.mubr.f32.mxu0 0.0
        %2445 = vmatmul.mubr.f32.gmra.mxu0 %v2372
        %v2446 = vpop.f32.mrf.mxu0
        %v2447 = vadd.f32 0.0, %v2446
        %v2448 = vpop.f32.mrf.mxu0
        %v2449 = vadd.f32 0.0, %v2448
        %2450 = vdwg.mxu0
        %2451 = vmatprep.subr.mxu0 0.0
        %2452 = vmatpush1.msra.mxu0 0.0
        %2453 = vmatprep.subr.mxu0 0.0
        %2454 = vmatpush1.msra.mxu0 0.0
        %2455 = vmatprep.subr.mxu0 0.0
        %2456 = vmatpush1.msra.mxu0 0.0
        %2457 = vmatprep.subr.mxu0 0.0
        %2458 = vmatpush1.msra.mxu0 0.0
        %2459 = vmatprep.subr.mxu0 0.0
        %2460 = vmatpush1.msra.mxu0 0.0
        %2461 = vmatprep.subr.mxu0 0.0
        %2462 = vmatpush1.msra.mxu0 0.0
        %2463 = vmatprep.subr.mxu0 0.0
        %2464 = vmatpush1.msra.mxu0 0.0
        %2465 = vmatprep.subr.mxu0 0.0
        %2466 = vmatpush1.msra.mxu0 0.0
        %2467 = vmatprep.subr.mxu0 0.0
        %2468 = vmatpush1.msra.mxu0 0.0
        %2469 = vmatprep.subr.mxu0 0.0
        %2470 = vmatpush1.msra.mxu0 0.0
        %2471 = vmatprep.subr.mxu0 0.0
        %2472 = vmatpush1.msra.mxu0 0.0
        %2473 = vmatprep.subr.mxu0 0.0
        %2474 = vmatpush1.msra.mxu0 0.0
        %2475 = vmatprep.subr.mxu0 0.0
        %2476 = vmatpush1.msra.mxu0 0.0
        %2477 = vmatprep.subr.mxu0 0.0
        %2478 = vmatpush1.msra.mxu0 0.0
        %2479 = vmatprep.subr.mxu0 0.0
        %2480 = vmatpush1.msra.mxu0 0.0
        %2481 = vmatprep.subr.mxu0 0.0
        %2482 = vmatpush1.msra.mxu0 %v2378
        %2483 = vmatprep.subr.mxu0 0.0
        %2484 = vmatpush2.msra.mxu0 0.0
        %2485 = vmatprep.subr.mxu0 0.0
        %2486 = vmatpush2.msra.mxu0 0.0
        %2487 = vmatprep.subr.mxu0 0.0
        %2488 = vmatpush2.msra.mxu0 0.0
        %2489 = vmatprep.subr.mxu0 0.0
        %2490 = vmatpush2.msra.mxu0 0.0
        %2491 = vmatprep.subr.mxu0 0.0
        %2492 = vmatpush2.msra.mxu0 0.0
        %2493 = vmatprep.subr.mxu0 0.0
        %2494 = vmatpush2.msra.mxu0 0.0
        %2495 = vmatprep.subr.mxu0 0.0
        %2496 = vmatpush2.msra.mxu0 0.0
        %2497 = vmatprep.subr.mxu0 0.0
        %2498 = vmatpush2.msra.mxu0 0.0
        %2499 = vmatprep.subr.mxu0 0.0
        %2500 = vmatpush2.msra.mxu0 0.0
        %2501 = vmatprep.subr.mxu0 0.0
        %2502 = vmatpush2.msra.mxu0 0.0
        %2503 = vmatprep.subr.mxu0 0.0
        %2504 = vmatpush2.msra.mxu0 0.0
        %2505 = vmatprep.subr.mxu0 0.0
        %2506 = vmatpush2.msra.mxu0 0.0
        %2507 = vmatprep.subr.mxu0 0.0
        %2508 = vmatpush2.msra.mxu0 0.0
        %2509 = vmatprep.subr.mxu0 0.0
        %2510 = vmatpush2.msra.mxu0 0.0
        %2511 = vmatprep.subr.mxu0 0.0
        %2512 = vmatpush2.msra.mxu0 0.0
        %2513 = vmatprep.subr.mxu0 0.0
        %2514 = vmatpush2.msra.mxu0 0.0
        %2515 = vmatprep.mubr.f32.mxu0 0.0
        %2516 = vmatmul.mubr.f32.gmra.mxu0 %v2372
        %v2517 = vpop.f32.mrf.mxu0
        %v2518 = vadd.f32 0.0, %v2517
        %v2519 = vpop.f32.mrf.mxu0
        %2520 = vdwg.mxu0
        %v2521 = vadd.f32 %v2277, %v2447
        %v2522 = vadd.f32 %v2279, %v2449
        %v2523 = vadd.f32 %v2348, %v2518
        %s2524 = scalar_lea.vmem %s6, 24
        %v2525 = vld [vmem:[%s2524] sm:$0xff]
        %v2526 = vld [vmem:[#allocation2] sm:$0xff]
        %v2527 = vld [vmem:[#allocation2 + $0x8] sm:$0xff]
        %v2530 = vcombine.high %v2526, %v2526
        %v2531 = vcombine.high %v2527, %v2527
        %2532 = vrot.lane.b32.xlu0 %v2526, 1
        %v2533 = vpop.permute.xlu0 %2532
        %2534 = vrot.lane.b32.xlu0 %v2530, 1
        %v2535 = vpop.permute.xlu0 %2534
        %2536 = vrot.lane.b32.xlu0 %v2527, 1
        %v2537 = vpop.permute.xlu0 %2536
        %2538 = vrot.lane.b32.xlu0 %v2531, 1
        %v2539 = vpop.permute.xlu0 %2538
        %vm2540 = vcmask 7168
        %v2541 = vsel %vm2540, %v2533, %v2535
        %v2542 = vsel %vm2540, %v2535, %v2537
        %v2543 = vsel %vm2540, %v2537, %v2539
        %v2545 = vsel %vm1548, %v2525, 0
        %v2547 = vsel %vm444, %v2541, 0
        %v2549 = vsel %vm444, %v2542, 0
        %v2551 = vsel %vm444, %v2543, 0
        %2553 = vmatprep.subr.mxu0 0.0
        %2554 = vmatpush1.msra.mxu0 0.0
        %2555 = vmatprep.subr.mxu0 0.0
        %2556 = vmatpush1.msra.mxu0 0.0
        %2557 = vmatprep.subr.mxu0 0.0
        %2558 = vmatpush1.msra.mxu0 0.0
        %2559 = vmatprep.subr.mxu0 0.0
        %2560 = vmatpush1.msra.mxu0 0.0
        %2561 = vmatprep.subr.mxu0 0.0
        %2562 = vmatpush1.msra.mxu0 0.0
        %2563 = vmatprep.subr.mxu0 0.0
        %2564 = vmatpush1.msra.mxu0 0.0
        %2565 = vmatprep.subr.mxu0 0.0
        %2566 = vmatpush1.msra.mxu0 0.0
        %2567 = vmatprep.subr.mxu0 0.0
        %2568 = vmatpush1.msra.mxu0 0.0
        %2569 = vmatprep.subr.mxu0 0.0
        %2570 = vmatpush1.msra.mxu0 0.0
        %2571 = vmatprep.subr.mxu0 0.0
        %2572 = vmatpush1.msra.mxu0 0.0
        %2573 = vmatprep.subr.mxu0 0.0
        %2574 = vmatpush1.msra.mxu0 0.0
        %2575 = vmatprep.subr.mxu0 0.0
        %2576 = vmatpush1.msra.mxu0 0.0
        %2577 = vmatprep.subr.mxu0 0.0
        %2578 = vmatpush1.msra.mxu0 0.0
        %2579 = vmatprep.subr.mxu0 0.0
        %2580 = vmatpush1.msra.mxu0 0.0
        %2581 = vmatprep.subr.mxu0 0.0
        %2582 = vmatpush1.msra.mxu0 0.0
        %2583 = vmatprep.subr.mxu0 %v2549
        %2584 = vmatpush1.msra.mxu0 %v2547
        %2585 = vmatprep.subr.mxu0 0.0
        %2586 = vmatpush2.msra.mxu0 0.0
        %2587 = vmatprep.subr.mxu0 0.0
        %2588 = vmatpush2.msra.mxu0 0.0
        %2589 = vmatprep.subr.mxu0 0.0
        %2590 = vmatpush2.msra.mxu0 0.0
        %2591 = vmatprep.subr.mxu0 0.0
        %2592 = vmatpush2.msra.mxu0 0.0
        %2593 = vmatprep.subr.mxu0 0.0
        %2594 = vmatpush2.msra.mxu0 0.0
        %2595 = vmatprep.subr.mxu0 0.0
        %2596 = vmatpush2.msra.mxu0 0.0
        %2597 = vmatprep.subr.mxu0 0.0
        %2598 = vmatpush2.msra.mxu0 0.0
        %2599 = vmatprep.subr.mxu0 0.0
        %2600 = vmatpush2.msra.mxu0 0.0
        %2601 = vmatprep.subr.mxu0 0.0
        %2602 = vmatpush2.msra.mxu0 0.0
        %2603 = vmatprep.subr.mxu0 0.0
        %2604 = vmatpush2.msra.mxu0 0.0
        %2605 = vmatprep.subr.mxu0 0.0
        %2606 = vmatpush2.msra.mxu0 0.0
        %2607 = vmatprep.subr.mxu0 0.0
        %2608 = vmatpush2.msra.mxu0 0.0
        %2609 = vmatprep.subr.mxu0 0.0
        %2610 = vmatpush2.msra.mxu0 0.0
        %2611 = vmatprep.subr.mxu0 0.0
        %2612 = vmatpush2.msra.mxu0 0.0
        %2613 = vmatprep.subr.mxu0 0.0
        %2614 = vmatpush2.msra.mxu0 0.0
        %2615 = vmatprep.subr.mxu0 0.0
        %2616 = vmatpush2.msra.mxu0 0.0
        %2617 = vmatprep.mubr.f32.mxu0 0.0
        %2618 = vmatmul.mubr.f32.gmra.mxu0 %v2545
        %v2619 = vpop.f32.mrf.mxu0
        %v2620 = vadd.f32 0.0, %v2619
        %v2621 = vpop.f32.mrf.mxu0
        %v2622 = vadd.f32 0.0, %v2621
        %2623 = vdwg.mxu0
        %2624 = vmatprep.subr.mxu0 0.0
        %2625 = vmatpush1.msra.mxu0 0.0
        %2626 = vmatprep.subr.mxu0 0.0
        %2627 = vmatpush1.msra.mxu0 0.0
        %2628 = vmatprep.subr.mxu0 0.0
        %2629 = vmatpush1.msra.mxu0 0.0
        %2630 = vmatprep.subr.mxu0 0.0
        %2631 = vmatpush1.msra.mxu0 0.0
        %2632 = vmatprep.subr.mxu0 0.0
        %2633 = vmatpush1.msra.mxu0 0.0
        %2634 = vmatprep.subr.mxu0 0.0
        %2635 = vmatpush1.msra.mxu0 0.0
        %2636 = vmatprep.subr.mxu0 0.0
        %2637 = vmatpush1.msra.mxu0 0.0
        %2638 = vmatprep.subr.mxu0 0.0
        %2639 = vmatpush1.msra.mxu0 0.0
        %2640 = vmatprep.subr.mxu0 0.0
        %2641 = vmatpush1.msra.mxu0 0.0
        %2642 = vmatprep.subr.mxu0 0.0
        %2643 = vmatpush1.msra.mxu0 0.0
        %2644 = vmatprep.subr.mxu0 0.0
        %2645 = vmatpush1.msra.mxu0 0.0
        %2646 = vmatprep.subr.mxu0 0.0
        %2647 = vmatpush1.msra.mxu0 0.0
        %2648 = vmatprep.subr.mxu0 0.0
        %2649 = vmatpush1.msra.mxu0 0.0
        %2650 = vmatprep.subr.mxu0 0.0
        %2651 = vmatpush1.msra.mxu0 0.0
        %2652 = vmatprep.subr.mxu0 0.0
        %2653 = vmatpush1.msra.mxu0 0.0
        %2654 = vmatprep.subr.mxu0 0.0
        %2655 = vmatpush1.msra.mxu0 %v2551
        %2656 = vmatprep.subr.mxu0 0.0
        %2657 = vmatpush2.msra.mxu0 0.0
        %2658 = vmatprep.subr.mxu0 0.0
        %2659 = vmatpush2.msra.mxu0 0.0
        %2660 = vmatprep.subr.mxu0 0.0
        %2661 = vmatpush2.msra.mxu0 0.0
        %2662 = vmatprep.subr.mxu0 0.0
        %2663 = vmatpush2.msra.mxu0 0.0
        %2664 = vmatprep.subr.mxu0 0.0
        %2665 = vmatpush2.msra.mxu0 0.0
        %2666 = vmatprep.subr.mxu0 0.0
        %2667 = vmatpush2.msra.mxu0 0.0
        %2668 = vmatprep.subr.mxu0 0.0
        %2669 = vmatpush2.msra.mxu0 0.0
        %2670 = vmatprep.subr.mxu0 0.0
        %2671 = vmatpush2.msra.mxu0 0.0
        %2672 = vmatprep.subr.mxu0 0.0
        %2673 = vmatpush2.msra.mxu0 0.0
        %2674 = vmatprep.subr.mxu0 0.0
        %2675 = vmatpush2.msra.mxu0 0.0
        %2676 = vmatprep.subr.mxu0 0.0
        %2677 = vmatpush2.msra.mxu0 0.0
        %2678 = vmatprep.subr.mxu0 0.0
        %2679 = vmatpush2.msra.mxu0 0.0
        %2680 = vmatprep.subr.mxu0 0.0
        %2681 = vmatpush2.msra.mxu0 0.0
        %2682 = vmatprep.subr.mxu0 0.0
        %2683 = vmatpush2.msra.mxu0 0.0
        %2684 = vmatprep.subr.mxu0 0.0
        %2685 = vmatpush2.msra.mxu0 0.0
        %2686 = vmatprep.subr.mxu0 0.0
        %2687 = vmatpush2.msra.mxu0 0.0
        %2688 = vmatprep.mubr.f32.mxu0 0.0
        %2689 = vmatmul.mubr.f32.gmra.mxu0 %v2545
        %v2690 = vpop.f32.mrf.mxu0
        %v2691 = vadd.f32 0.0, %v2690
        %v2692 = vpop.f32.mrf.mxu0
        %2693 = vdwg.mxu0
        %v2694 = vadd.f32 %v2521, %v2620
        %v2695 = vadd.f32 %v2522, %v2622
        %v2696 = vadd.f32 %v2523, %v2691
        %s2697 = scalar_lea.vmem %s6, 32
        %v2698 = vld [vmem:[%s2697] sm:$0xff]
        %v2699 = vld [vmem:[#allocation2 + $0x4] sm:$0xff]
        %v2700 = vld [vmem:[#allocation2 + $0xc] sm:$0xf]
        %v2703 = vcombine.high %v2699, %v2699
        %v2705 = vsel %vm1548, %v2698, 0
        %v2707 = vsel %vm444, %v2699, 0
        %v2709 = vsel %vm444, %v2703, 0
        %v2711 = vsel %vm444, %v2700, 0
        %2713 = vmatprep.subr.mxu0 0.0
        %2714 = vmatpush1.msra.mxu0 0.0
        %2715 = vmatprep.subr.mxu0 0.0
        %2716 = vmatpush1.msra.mxu0 0.0
        %2717 = vmatprep.subr.mxu0 0.0
        %2718 = vmatpush1.msra.mxu0 0.0
        %2719 = vmatprep.subr.mxu0 0.0
        %2720 = vmatpush1.msra.mxu0 0.0
        %2721 = vmatprep.subr.mxu0 0.0
        %2722 = vmatpush1.msra.mxu0 0.0
        %2723 = vmatprep.subr.mxu0 0.0
        %2724 = vmatpush1.msra.mxu0 0.0
        %2725 = vmatprep.subr.mxu0 0.0
        %2726 = vmatpush1.msra.mxu0 0.0
        %2727 = vmatprep.subr.mxu0 0.0
        %2728 = vmatpush1.msra.mxu0 0.0
        %2729 = vmatprep.subr.mxu0 0.0
        %2730 = vmatpush1.msra.mxu0 0.0
        %2731 = vmatprep.subr.mxu0 0.0
        %2732 = vmatpush1.msra.mxu0 0.0
        %2733 = vmatprep.subr.mxu0 0.0
        %2734 = vmatpush1.msra.mxu0 0.0
        %2735 = vmatprep.subr.mxu0 0.0
        %2736 = vmatpush1.msra.mxu0 0.0
        %2737 = vmatprep.subr.mxu0 0.0
        %2738 = vmatpush1.msra.mxu0 0.0
        %2739 = vmatprep.subr.mxu0 0.0
        %2740 = vmatpush1.msra.mxu0 0.0
        %2741 = vmatprep.subr.mxu0 0.0
        %2742 = vmatpush1.msra.mxu0 0.0
        %2743 = vmatprep.subr.mxu0 %v2709
        %2744 = vmatpush1.msra.mxu0 %v2707
        %2745 = vmatprep.subr.mxu0 0.0
        %2746 = vmatpush2.msra.mxu0 0.0
        %2747 = vmatprep.subr.mxu0 0.0
        %2748 = vmatpush2.msra.mxu0 0.0
        %2749 = vmatprep.subr.mxu0 0.0
        %2750 = vmatpush2.msra.mxu0 0.0
        %2751 = vmatprep.subr.mxu0 0.0
        %2752 = vmatpush2.msra.mxu0 0.0
        %2753 = vmatprep.subr.mxu0 0.0
        %2754 = vmatpush2.msra.mxu0 0.0
        %2755 = vmatprep.subr.mxu0 0.0
        %2756 = vmatpush2.msra.mxu0 0.0
        %2757 = vmatprep.subr.mxu0 0.0
        %2758 = vmatpush2.msra.mxu0 0.0
        %2759 = vmatprep.subr.mxu0 0.0
        %2760 = vmatpush2.msra.mxu0 0.0
        %2761 = vmatprep.subr.mxu0 0.0
        %2762 = vmatpush2.msra.mxu0 0.0
        %2763 = vmatprep.subr.mxu0 0.0
        %2764 = vmatpush2.msra.mxu0 0.0
        %2765 = vmatprep.subr.mxu0 0.0
        %2766 = vmatpush2.msra.mxu0 0.0
        %2767 = vmatprep.subr.mxu0 0.0
        %2768 = vmatpush2.msra.mxu0 0.0
        %2769 = vmatprep.subr.mxu0 0.0
        %2770 = vmatpush2.msra.mxu0 0.0
        %2771 = vmatprep.subr.mxu0 0.0
        %2772 = vmatpush2.msra.mxu0 0.0
        %2773 = vmatprep.subr.mxu0 0.0
        %2774 = vmatpush2.msra.mxu0 0.0
        %2775 = vmatprep.subr.mxu0 0.0
        %2776 = vmatpush2.msra.mxu0 0.0
        %2777 = vmatprep.mubr.f32.mxu0 0.0
        %2778 = vmatmul.mubr.f32.gmra.mxu0 %v2705
        %v2779 = vpop.f32.mrf.mxu0
        %v2780 = vadd.f32 0.0, %v2779
        %v2781 = vpop.f32.mrf.mxu0
        %v2782 = vadd.f32 0.0, %v2781
        %2783 = vdwg.mxu0
        %2784 = vmatprep.subr.mxu0 0.0
        %2785 = vmatpush1.msra.mxu0 0.0
        %2786 = vmatprep.subr.mxu0 0.0
        %2787 = vmatpush1.msra.mxu0 0.0
        %2788 = vmatprep.subr.mxu0 0.0
        %2789 = vmatpush1.msra.mxu0 0.0
        %2790 = vmatprep.subr.mxu0 0.0
        %2791 = vmatpush1.msra.mxu0 0.0
        %2792 = vmatprep.subr.mxu0 0.0
        %2793 = vmatpush1.msra.mxu0 0.0
        %2794 = vmatprep.subr.mxu0 0.0
        %2795 = vmatpush1.msra.mxu0 0.0
        %2796 = vmatprep.subr.mxu0 0.0
        %2797 = vmatpush1.msra.mxu0 0.0
        %2798 = vmatprep.subr.mxu0 0.0
        %2799 = vmatpush1.msra.mxu0 0.0
        %2800 = vmatprep.subr.mxu0 0.0
        %2801 = vmatpush1.msra.mxu0 0.0
        %2802 = vmatprep.subr.mxu0 0.0
        %2803 = vmatpush1.msra.mxu0 0.0
        %2804 = vmatprep.subr.mxu0 0.0
        %2805 = vmatpush1.msra.mxu0 0.0
        %2806 = vmatprep.subr.mxu0 0.0
        %2807 = vmatpush1.msra.mxu0 0.0
        %2808 = vmatprep.subr.mxu0 0.0
        %2809 = vmatpush1.msra.mxu0 0.0
        %2810 = vmatprep.subr.mxu0 0.0
        %2811 = vmatpush1.msra.mxu0 0.0
        %2812 = vmatprep.subr.mxu0 0.0
        %2813 = vmatpush1.msra.mxu0 0.0
        %2814 = vmatprep.subr.mxu0 0.0
        %2815 = vmatpush1.msra.mxu0 %v2711
        %2816 = vmatprep.subr.mxu0 0.0
        %2817 = vmatpush2.msra.mxu0 0.0
        %2818 = vmatprep.subr.mxu0 0.0
        %2819 = vmatpush2.msra.mxu0 0.0
        %2820 = vmatprep.subr.mxu0 0.0
        %2821 = vmatpush2.msra.mxu0 0.0
        %2822 = vmatprep.subr.mxu0 0.0
        %2823 = vmatpush2.msra.mxu0 0.0
        %2824 = vmatprep.subr.mxu0 0.0
        %2825 = vmatpush2.msra.mxu0 0.0
        %2826 = vmatprep.subr.mxu0 0.0
        %2827 = vmatpush2.msra.mxu0 0.0
        %2828 = vmatprep.subr.mxu0 0.0
        %2829 = vmatpush2.msra.mxu0 0.0
        %2830 = vmatprep.subr.mxu0 0.0
        %2831 = vmatpush2.msra.mxu0 0.0
        %2832 = vmatprep.subr.mxu0 0.0
        %2833 = vmatpush2.msra.mxu0 0.0
        %2834 = vmatprep.subr.mxu0 0.0
        %2835 = vmatpush2.msra.mxu0 0.0
        %2836 = vmatprep.subr.mxu0 0.0
        %2837 = vmatpush2.msra.mxu0 0.0
        %2838 = vmatprep.subr.mxu0 0.0
        %2839 = vmatpush2.msra.mxu0 0.0
        %2840 = vmatprep.subr.mxu0 0.0
        %2841 = vmatpush2.msra.mxu0 0.0
        %2842 = vmatprep.subr.mxu0 0.0
        %2843 = vmatpush2.msra.mxu0 0.0
        %2844 = vmatprep.subr.mxu0 0.0
        %2845 = vmatpush2.msra.mxu0 0.0
        %2846 = vmatprep.subr.mxu0 0.0
        %2847 = vmatpush2.msra.mxu0 0.0
        %2848 = vmatprep.mubr.f32.mxu0 0.0
        %2849 = vmatmul.mubr.f32.gmra.mxu0 %v2705
        %v2850 = vpop.f32.mrf.mxu0
        %v2851 = vadd.f32 0.0, %v2850
        %v2852 = vpop.f32.mrf.mxu0
        %2853 = vdwg.mxu0
        %v2854 = vadd.f32 %v2694, %v2780
        %v2855 = vadd.f32 %v2695, %v2782
        %v2856 = vadd.f32 %v2696, %v2851
        %s2857 = scalar_lea.vmem %s6, 40
        %v2858 = vld [vmem:[%s2857] sm:$0xff]
        %v2859 = vld [vmem:[#allocation2 + $0x4] sm:$0xff]
        %v2860 = vld [vmem:[#allocation2 + $0xc] sm:$0xff]
        %v2863 = vcombine.high %v2859, %v2859
        %v2864 = vcombine.high %v2860, %v2860
        %2865 = vrot.lane.b32.xlu0 %v2859, 127
        %v2866 = vpop.permute.xlu0 %2865
        %2867 = vrot.lane.b32.xlu0 %v2863, 127
        %v2868 = vpop.permute.xlu0 %2867
        %2869 = vrot.lane.b32.xlu0 %v2860, 127
        %v2870 = vpop.permute.xlu0 %2869
        %2871 = vrot.lane.b32.xlu0 %v2864, 127
        %v2872 = vpop.permute.xlu0 %2871
        %v2873 = vsel %vm446, %v2866, %v2868
        %v2874 = vsel %vm446, %v2868, %v2870
        %v2875 = vsel %vm446, %v2870, %v2872
        %v2877 = vsel %vm1548, %v2858, 0
        %v2879 = vsel %vm444, %v2873, 0
        %v2881 = vsel %vm444, %v2874, 0
        %v2883 = vsel %vm444, %v2875, 0
        %2885 = vmatprep.subr.mxu0 0.0
        %2886 = vmatpush1.msra.mxu0 0.0
        %2887 = vmatprep.subr.mxu0 0.0
        %2888 = vmatpush1.msra.mxu0 0.0
        %2889 = vmatprep.subr.mxu0 0.0
        %2890 = vmatpush1.msra.mxu0 0.0
        %2891 = vmatprep.subr.mxu0 0.0
        %2892 = vmatpush1.msra.mxu0 0.0
        %2893 = vmatprep.subr.mxu0 0.0
        %2894 = vmatpush1.msra.mxu0 0.0
        %2895 = vmatprep.subr.mxu0 0.0
        %2896 = vmatpush1.msra.mxu0 0.0
        %2897 = vmatprep.subr.mxu0 0.0
        %2898 = vmatpush1.msra.mxu0 0.0
        %2899 = vmatprep.subr.mxu0 0.0
        %2900 = vmatpush1.msra.mxu0 0.0
        %2901 = vmatprep.subr.mxu0 0.0
        %2902 = vmatpush1.msra.mxu0 0.0
        %2903 = vmatprep.subr.mxu0 0.0
        %2904 = vmatpush1.msra.mxu0 0.0
        %2905 = vmatprep.subr.mxu0 0.0
        %2906 = vmatpush1.msra.mxu0 0.0
        %2907 = vmatprep.subr.mxu0 0.0
        %2908 = vmatpush1.msra.mxu0 0.0
        %2909 = vmatprep.subr.mxu0 0.0
        %2910 = vmatpush1.msra.mxu0 0.0
        %2911 = vmatprep.subr.mxu0 0.0
        %2912 = vmatpush1.msra.mxu0 0.0
        %2913 = vmatprep.subr.mxu0 0.0
        %2914 = vmatpush1.msra.mxu0 0.0
        %2915 = vmatprep.subr.mxu0 %v2881
        %2916 = vmatpush1.msra.mxu0 %v2879
        %2917 = vmatprep.subr.mxu0 0.0
        %2918 = vmatpush2.msra.mxu0 0.0
        %2919 = vmatprep.subr.mxu0 0.0
        %2920 = vmatpush2.msra.mxu0 0.0
        %2921 = vmatprep.subr.mxu0 0.0
        %2922 = vmatpush2.msra.mxu0 0.0
        %2923 = vmatprep.subr.mxu0 0.0
        %2924 = vmatpush2.msra.mxu0 0.0
        %2925 = vmatprep.subr.mxu0 0.0
        %2926 = vmatpush2.msra.mxu0 0.0
        %2927 = vmatprep.subr.mxu0 0.0
        %2928 = vmatpush2.msra.mxu0 0.0
        %2929 = vmatprep.subr.mxu0 0.0
        %2930 = vmatpush2.msra.mxu0 0.0
        %2931 = vmatprep.subr.mxu0 0.0
        %2932 = vmatpush2.msra.mxu0 0.0
        %2933 = vmatprep.subr.mxu0 0.0
        %2934 = vmatpush2.msra.mxu0 0.0
        %2935 = vmatprep.subr.mxu0 0.0
        %2936 = vmatpush2.msra.mxu0 0.0
        %2937 = vmatprep.subr.mxu0 0.0
        %2938 = vmatpush2.msra.mxu0 0.0
        %2939 = vmatprep.subr.mxu0 0.0
        %2940 = vmatpush2.msra.mxu0 0.0
        %2941 = vmatprep.subr.mxu0 0.0
        %2942 = vmatpush2.msra.mxu0 0.0
        %2943 = vmatprep.subr.mxu0 0.0
        %2944 = vmatpush2.msra.mxu0 0.0
        %2945 = vmatprep.subr.mxu0 0.0
        %2946 = vmatpush2.msra.mxu0 0.0
        %2947 = vmatprep.subr.mxu0 0.0
        %2948 = vmatpush2.msra.mxu0 0.0
        %2949 = vmatprep.mubr.f32.mxu0 0.0
        %2950 = vmatmul.mubr.f32.gmra.mxu0 %v2877
        %v2951 = vpop.f32.mrf.mxu0
        %v2952 = vadd.f32 0.0, %v2951
        %v2953 = vpop.f32.mrf.mxu0
        %v2954 = vadd.f32 0.0, %v2953
        %2955 = vdwg.mxu0
        %2956 = vmatprep.subr.mxu0 0.0
        %2957 = vmatpush1.msra.mxu0 0.0
        %2958 = vmatprep.subr.mxu0 0.0
        %2959 = vmatpush1.msra.mxu0 0.0
        %2960 = vmatprep.subr.mxu0 0.0
        %2961 = vmatpush1.msra.mxu0 0.0
        %2962 = vmatprep.subr.mxu0 0.0
        %2963 = vmatpush1.msra.mxu0 0.0
        %2964 = vmatprep.subr.mxu0 0.0
        %2965 = vmatpush1.msra.mxu0 0.0
        %2966 = vmatprep.subr.mxu0 0.0
        %2967 = vmatpush1.msra.mxu0 0.0
        %2968 = vmatprep.subr.mxu0 0.0
        %2969 = vmatpush1.msra.mxu0 0.0
        %2970 = vmatprep.subr.mxu0 0.0
        %2971 = vmatpush1.msra.mxu0 0.0
        %2972 = vmatprep.subr.mxu0 0.0
        %2973 = vmatpush1.msra.mxu0 0.0
        %2974 = vmatprep.subr.mxu0 0.0
        %2975 = vmatpush1.msra.mxu0 0.0
        %2976 = vmatprep.subr.mxu0 0.0
        %2977 = vmatpush1.msra.mxu0 0.0
        %2978 = vmatprep.subr.mxu0 0.0
        %2979 = vmatpush1.msra.mxu0 0.0
        %2980 = vmatprep.subr.mxu0 0.0
        %2981 = vmatpush1.msra.mxu0 0.0
        %2982 = vmatprep.subr.mxu0 0.0
        %2983 = vmatpush1.msra.mxu0 0.0
        %2984 = vmatprep.subr.mxu0 0.0
        %2985 = vmatpush1.msra.mxu0 0.0
        %2986 = vmatprep.subr.mxu0 0.0
        %2987 = vmatpush1.msra.mxu0 %v2883
        %2988 = vmatprep.subr.mxu0 0.0
        %2989 = vmatpush2.msra.mxu0 0.0
        %2990 = vmatprep.subr.mxu0 0.0
        %2991 = vmatpush2.msra.mxu0 0.0
        %2992 = vmatprep.subr.mxu0 0.0
        %2993 = vmatpush2.msra.mxu0 0.0
        %2994 = vmatprep.subr.mxu0 0.0
        %2995 = vmatpush2.msra.mxu0 0.0
        %2996 = vmatprep.subr.mxu0 0.0
        %2997 = vmatpush2.msra.mxu0 0.0
        %2998 = vmatprep.subr.mxu0 0.0
        %2999 = vmatpush2.msra.mxu0 0.0
        %3000 = vmatprep.subr.mxu0 0.0
        %3001 = vmatpush2.msra.mxu0 0.0
        %3002 = vmatprep.subr.mxu0 0.0
        %3003 = vmatpush2.msra.mxu0 0.0
        %3004 = vmatprep.subr.mxu0 0.0
        %3005 = vmatpush2.msra.mxu0 0.0
        %3006 = vmatprep.subr.mxu0 0.0
        %3007 = vmatpush2.msra.mxu0 0.0
        %3008 = vmatprep.subr.mxu0 0.0
        %3009 = vmatpush2.msra.mxu0 0.0
        %3010 = vmatprep.subr.mxu0 0.0
        %3011 = vmatpush2.msra.mxu0 0.0
        %3012 = vmatprep.subr.mxu0 0.0
        %3013 = vmatpush2.msra.mxu0 0.0
        %3014 = vmatprep.subr.mxu0 0.0
        %3015 = vmatpush2.msra.mxu0 0.0
        %3016 = vmatprep.subr.mxu0 0.0
        %3017 = vmatpush2.msra.mxu0 0.0
        %3018 = vmatprep.subr.mxu0 0.0
        %3019 = vmatpush2.msra.mxu0 0.0
        %3020 = vmatprep.mubr.f32.mxu0 0.0
        %3021 = vmatmul.mubr.f32.gmra.mxu0 %v2877
        %v3022 = vpop.f32.mrf.mxu0
        %v3023 = vadd.f32 0.0, %v3022
        %v3024 = vpop.f32.mrf.mxu0
        %3025 = vdwg.mxu0
        %v3026 = vadd.f32 %v2854, %v2952
        %v3027 = vadd.f32 %v2855, %v2954
        %v3028 = vadd.f32 %v2856, %v3023
        %s3029 = scalar_lea.vmem %s6, 48
        %v3030 = vld [vmem:[%s3029] sm:$0xff]
        %v3031 = vld [vmem:[#allocation2 + $0x4] sm:$0xff]
        %v3032 = vld [vmem:[#allocation2 + $0xc] sm:$0xff]
        %v3035 = vcombine.high %v3031, %v3031
        %v3036 = vcombine.high %v3032, %v3032
        %3037 = vrot.lane.b32.xlu0 %v3031, 105
        %v3038 = vpop.permute.xlu0 %3037
        %3039 = vrot.lane.b32.xlu0 %v3035, 105
        %v3040 = vpop.permute.xlu0 %3039
        %3041 = vrot.lane.b32.xlu0 %v3032, 105
        %v3042 = vpop.permute.xlu0 %3041
        %3043 = vrot.lane.b32.xlu0 %v3036, 105
        %v3044 = vpop.permute.xlu0 %3043
        %vm3045 = vcmask 859136
        %v3046 = vsel %vm3045, %v3038, %v3040
        %v3047 = vsel %vm3045, %v3040, %v3042
        %v3048 = vsel %vm3045, %v3042, %v3044
        %v3050 = vsel %vm1548, %v3030, 0
        %v3052 = vsel %vm444, %v3046, 0
        %v3054 = vsel %vm444, %v3047, 0
        %v3056 = vsel %vm444, %v3048, 0
        %3058 = vmatprep.subr.mxu0 0.0
        %3059 = vmatpush1.msra.mxu0 0.0
        %3060 = vmatprep.subr.mxu0 0.0
        %3061 = vmatpush1.msra.mxu0 0.0
        %3062 = vmatprep.subr.mxu0 0.0
        %3063 = vmatpush1.msra.mxu0 0.0
        %3064 = vmatprep.subr.mxu0 0.0
        %3065 = vmatpush1.msra.mxu0 0.0
        %3066 = vmatprep.subr.mxu0 0.0
        %3067 = vmatpush1.msra.mxu0 0.0
        %3068 = vmatprep.subr.mxu0 0.0
        %3069 = vmatpush1.msra.mxu0 0.0
        %3070 = vmatprep.subr.mxu0 0.0
        %3071 = vmatpush1.msra.mxu0 0.0
        %3072 = vmatprep.subr.mxu0 0.0
        %3073 = vmatpush1.msra.mxu0 0.0
        %3074 = vmatprep.subr.mxu0 0.0
        %3075 = vmatpush1.msra.mxu0 0.0
        %3076 = vmatprep.subr.mxu0 0.0
        %3077 = vmatpush1.msra.mxu0 0.0
        %3078 = vmatprep.subr.mxu0 0.0
        %3079 = vmatpush1.msra.mxu0 0.0
        %3080 = vmatprep.subr.mxu0 0.0
        %3081 = vmatpush1.msra.mxu0 0.0
        %3082 = vmatprep.subr.mxu0 0.0
        %3083 = vmatpush1.msra.mxu0 0.0
        %3084 = vmatprep.subr.mxu0 0.0
        %3085 = vmatpush1.msra.mxu0 0.0
        %3086 = vmatprep.subr.mxu0 0.0
        %3087 = vmatpush1.msra.mxu0 0.0
        %3088 = vmatprep.subr.mxu0 %v3054
        %3089 = vmatpush1.msra.mxu0 %v3052
        %3090 = vmatprep.subr.mxu0 0.0
        %3091 = vmatpush2.msra.mxu0 0.0
        %3092 = vmatprep.subr.mxu0 0.0
        %3093 = vmatpush2.msra.mxu0 0.0
        %3094 = vmatprep.subr.mxu0 0.0
        %3095 = vmatpush2.msra.mxu0 0.0
        %3096 = vmatprep.subr.mxu0 0.0
        %3097 = vmatpush2.msra.mxu0 0.0
        %3098 = vmatprep.subr.mxu0 0.0
        %3099 = vmatpush2.msra.mxu0 0.0
        %3100 = vmatprep.subr.mxu0 0.0
        %3101 = vmatpush2.msra.mxu0 0.0
        %3102 = vmatprep.subr.mxu0 0.0
        %3103 = vmatpush2.msra.mxu0 0.0
        %3104 = vmatprep.subr.mxu0 0.0
        %3105 = vmatpush2.msra.mxu0 0.0
        %3106 = vmatprep.subr.mxu0 0.0
        %3107 = vmatpush2.msra.mxu0 0.0
        %3108 = vmatprep.subr.mxu0 0.0
        %3109 = vmatpush2.msra.mxu0 0.0
        %3110 = vmatprep.subr.mxu0 0.0
        %3111 = vmatpush2.msra.mxu0 0.0
        %3112 = vmatprep.subr.mxu0 0.0
        %3113 = vmatpush2.msra.mxu0 0.0
        %3114 = vmatprep.subr.mxu0 0.0
        %3115 = vmatpush2.msra.mxu0 0.0
        %3116 = vmatprep.subr.mxu0 0.0
        %3117 = vmatpush2.msra.mxu0 0.0
        %3118 = vmatprep.subr.mxu0 0.0
        %3119 = vmatpush2.msra.mxu0 0.0
        %3120 = vmatprep.subr.mxu0 0.0
        %3121 = vmatpush2.msra.mxu0 0.0
        %3122 = vmatprep.mubr.f32.mxu0 0.0
        %3123 = vmatmul.mubr.f32.gmra.mxu0 %v3050
        %v3124 = vpop.f32.mrf.mxu0
        %v3125 = vadd.f32 0.0, %v3124
        %v3126 = vpop.f32.mrf.mxu0
        %v3127 = vadd.f32 0.0, %v3126
        %3128 = vdwg.mxu0
        %3129 = vmatprep.subr.mxu0 0.0
        %3130 = vmatpush1.msra.mxu0 0.0
        %3131 = vmatprep.subr.mxu0 0.0
        %3132 = vmatpush1.msra.mxu0 0.0
        %3133 = vmatprep.subr.mxu0 0.0
        %3134 = vmatpush1.msra.mxu0 0.0
        %3135 = vmatprep.subr.mxu0 0.0
        %3136 = vmatpush1.msra.mxu0 0.0
        %3137 = vmatprep.subr.mxu0 0.0
        %3138 = vmatpush1.msra.mxu0 0.0
        %3139 = vmatprep.subr.mxu0 0.0
        %3140 = vmatpush1.msra.mxu0 0.0
        %3141 = vmatprep.subr.mxu0 0.0
        %3142 = vmatpush1.msra.mxu0 0.0
        %3143 = vmatprep.subr.mxu0 0.0
        %3144 = vmatpush1.msra.mxu0 0.0
        %3145 = vmatprep.subr.mxu0 0.0
        %3146 = vmatpush1.msra.mxu0 0.0
        %3147 = vmatprep.subr.mxu0 0.0
        %3148 = vmatpush1.msra.mxu0 0.0
        %3149 = vmatprep.subr.mxu0 0.0
        %3150 = vmatpush1.msra.mxu0 0.0
        %3151 = vmatprep.subr.mxu0 0.0
        %3152 = vmatpush1.msra.mxu0 0.0
        %3153 = vmatprep.subr.mxu0 0.0
        %3154 = vmatpush1.msra.mxu0 0.0
        %3155 = vmatprep.subr.mxu0 0.0
        %3156 = vmatpush1.msra.mxu0 0.0
        %3157 = vmatprep.subr.mxu0 0.0
        %3158 = vmatpush1.msra.mxu0 0.0
        %3159 = vmatprep.subr.mxu0 0.0
        %3160 = vmatpush1.msra.mxu0 %v3056
        %3161 = vmatprep.subr.mxu0 0.0
        %3162 = vmatpush2.msra.mxu0 0.0
        %3163 = vmatprep.subr.mxu0 0.0
        %3164 = vmatpush2.msra.mxu0 0.0
        %3165 = vmatprep.subr.mxu0 0.0
        %3166 = vmatpush2.msra.mxu0 0.0
        %3167 = vmatprep.subr.mxu0 0.0
        %3168 = vmatpush2.msra.mxu0 0.0
        %3169 = vmatprep.subr.mxu0 0.0
        %3170 = vmatpush2.msra.mxu0 0.0
        %3171 = vmatprep.subr.mxu0 0.0
        %3172 = vmatpush2.msra.mxu0 0.0
        %3173 = vmatprep.subr.mxu0 0.0
        %3174 = vmatpush2.msra.mxu0 0.0
        %3175 = vmatprep.subr.mxu0 0.0
        %3176 = vmatpush2.msra.mxu0 0.0
        %3177 = vmatprep.subr.mxu0 0.0
        %3178 = vmatpush2.msra.mxu0 0.0
        %3179 = vmatprep.subr.mxu0 0.0
        %3180 = vmatpush2.msra.mxu0 0.0
        %3181 = vmatprep.subr.mxu0 0.0
        %3182 = vmatpush2.msra.mxu0 0.0
        %3183 = vmatprep.subr.mxu0 0.0
        %3184 = vmatpush2.msra.mxu0 0.0
        %3185 = vmatprep.subr.mxu0 0.0
        %3186 = vmatpush2.msra.mxu0 0.0
        %3187 = vmatprep.subr.mxu0 0.0
        %3188 = vmatpush2.msra.mxu0 0.0
        %3189 = vmatprep.subr.mxu0 0.0
        %3190 = vmatpush2.msra.mxu0 0.0
        %3191 = vmatprep.subr.mxu0 0.0
        %3192 = vmatpush2.msra.mxu0 0.0
        %3193 = vmatprep.mubr.f32.mxu0 0.0
        %3194 = vmatmul.mubr.f32.gmra.mxu0 %v3050
        %v3195 = vpop.f32.mrf.mxu0
        %v3196 = vadd.f32 0.0, %v3195
        %v3197 = vpop.f32.mrf.mxu0
        %3198 = vdwg.mxu0
        %v3199 = vadd.f32 %v3026, %v3125
        %v3200 = vadd.f32 %v3027, %v3127
        %v3201 = vadd.f32 %v3028, %v3196
        %s3202 = scalar_lea.vmem %s6, 56
        %v3203 = vld [vmem:[%s3202] sm:$0xff]
        %v3204 = vld [vmem:[#allocation2 + $0x4] sm:$0xff]
        %v3205 = vld [vmem:[#allocation2 + $0xc] sm:$0xff]
        %v3208 = vcombine.high %v3204, %v3204
        %v3209 = vcombine.high %v3205, %v3205
        %3210 = vrot.lane.b32.xlu0 %v3204, 104
        %v3211 = vpop.permute.xlu0 %3210
        %3212 = vrot.lane.b32.xlu0 %v3208, 104
        %v3213 = vpop.permute.xlu0 %3212
        %3214 = vrot.lane.b32.xlu0 %v3205, 104
        %v3215 = vpop.permute.xlu0 %3214
        %3216 = vrot.lane.b32.xlu0 %v3209, 104
        %v3217 = vpop.permute.xlu0 %3216
        %v3218 = vsel %vm620, %v3211, %v3213
        %v3219 = vsel %vm620, %v3213, %v3215
        %v3220 = vsel %vm620, %v3215, %v3217
        %v3222 = vsel %vm1548, %v3203, 0
        %v3224 = vsel %vm444, %v3218, 0
        %v3226 = vsel %vm444, %v3219, 0
        %v3228 = vsel %vm444, %v3220, 0
        %3230 = vmatprep.subr.mxu0 0.0
        %3231 = vmatpush1.msra.mxu0 0.0
        %3232 = vmatprep.subr.mxu0 0.0
        %3233 = vmatpush1.msra.mxu0 0.0
        %3234 = vmatprep.subr.mxu0 0.0
        %3235 = vmatpush1.msra.mxu0 0.0
        %3236 = vmatprep.subr.mxu0 0.0
        %3237 = vmatpush1.msra.mxu0 0.0
        %3238 = vmatprep.subr.mxu0 0.0
        %3239 = vmatpush1.msra.mxu0 0.0
        %3240 = vmatprep.subr.mxu0 0.0
        %3241 = vmatpush1.msra.mxu0 0.0
        %3242 = vmatprep.subr.mxu0 0.0
        %3243 = vmatpush1.msra.mxu0 0.0
        %3244 = vmatprep.subr.mxu0 0.0
        %3245 = vmatpush1.msra.mxu0 0.0
        %3246 = vmatprep.subr.mxu0 0.0
        %3247 = vmatpush1.msra.mxu0 0.0
        %3248 = vmatprep.subr.mxu0 0.0
        %3249 = vmatpush1.msra.mxu0 0.0
        %3250 = vmatprep.subr.mxu0 0.0
        %3251 = vmatpush1.msra.mxu0 0.0
        %3252 = vmatprep.subr.mxu0 0.0
        %3253 = vmatpush1.msra.mxu0 0.0
        %3254 = vmatprep.subr.mxu0 0.0
        %3255 = vmatpush1.msra.mxu0 0.0
        %3256 = vmatprep.subr.mxu0 0.0
        %3257 = vmatpush1.msra.mxu0 0.0
        %3258 = vmatprep.subr.mxu0 0.0
        %3259 = vmatpush1.msra.mxu0 0.0
        %3260 = vmatprep.subr.mxu0 %v3226
        %3261 = vmatpush1.msra.mxu0 %v3224
        %3262 = vmatprep.subr.mxu0 0.0
        %3263 = vmatpush2.msra.mxu0 0.0
        %3264 = vmatprep.subr.mxu0 0.0
        %3265 = vmatpush2.msra.mxu0 0.0
        %3266 = vmatprep.subr.mxu0 0.0
        %3267 = vmatpush2.msra.mxu0 0.0
        %3268 = vmatprep.subr.mxu0 0.0
        %3269 = vmatpush2.msra.mxu0 0.0
        %3270 = vmatprep.subr.mxu0 0.0
        %3271 = vmatpush2.msra.mxu0 0.0
        %3272 = vmatprep.subr.mxu0 0.0
        %3273 = vmatpush2.msra.mxu0 0.0
        %3274 = vmatprep.subr.mxu0 0.0
        %3275 = vmatpush2.msra.mxu0 0.0
        %3276 = vmatprep.subr.mxu0 0.0
        %3277 = vmatpush2.msra.mxu0 0.0
        %3278 = vmatprep.subr.mxu0 0.0
        %3279 = vmatpush2.msra.mxu0 0.0
        %3280 = vmatprep.subr.mxu0 0.0
        %3281 = vmatpush2.msra.mxu0 0.0
        %3282 = vmatprep.subr.mxu0 0.0
        %3283 = vmatpush2.msra.mxu0 0.0
        %3284 = vmatprep.subr.mxu0 0.0
        %3285 = vmatpush2.msra.mxu0 0.0
        %3286 = vmatprep.subr.mxu0 0.0
        %3287 = vmatpush2.msra.mxu0 0.0
        %3288 = vmatprep.subr.mxu0 0.0
        %3289 = vmatpush2.msra.mxu0 0.0
        %3290 = vmatprep.subr.mxu0 0.0
        %3291 = vmatpush2.msra.mxu0 0.0
        %3292 = vmatprep.subr.mxu0 0.0
        %3293 = vmatpush2.msra.mxu0 0.0
        %3294 = vmatprep.mubr.f32.mxu0 0.0
        %3295 = vmatmul.mubr.f32.gmra.mxu0 %v3222
        %v3296 = vpop.f32.mrf.mxu0
        %v3297 = vadd.f32 0.0, %v3296
        %v3298 = vpop.f32.mrf.mxu0
        %v3299 = vadd.f32 0.0, %v3298
        %3300 = vdwg.mxu0
        %3301 = vmatprep.subr.mxu0 0.0
        %3302 = vmatpush1.msra.mxu0 0.0
        %3303 = vmatprep.subr.mxu0 0.0
        %3304 = vmatpush1.msra.mxu0 0.0
        %3305 = vmatprep.subr.mxu0 0.0
        %3306 = vmatpush1.msra.mxu0 0.0
        %3307 = vmatprep.subr.mxu0 0.0
        %3308 = vmatpush1.msra.mxu0 0.0
        %3309 = vmatprep.subr.mxu0 0.0
        %3310 = vmatpush1.msra.mxu0 0.0
        %3311 = vmatprep.subr.mxu0 0.0
        %3312 = vmatpush1.msra.mxu0 0.0
        %3313 = vmatprep.subr.mxu0 0.0
        %3314 = vmatpush1.msra.mxu0 0.0
        %3315 = vmatprep.subr.mxu0 0.0
        %3316 = vmatpush1.msra.mxu0 0.0
        %3317 = vmatprep.subr.mxu0 0.0
        %3318 = vmatpush1.msra.mxu0 0.0
        %3319 = vmatprep.subr.mxu0 0.0
        %3320 = vmatpush1.msra.mxu0 0.0
        %3321 = vmatprep.subr.mxu0 0.0
        %3322 = vmatpush1.msra.mxu0 0.0
        %3323 = vmatprep.subr.mxu0 0.0
        %3324 = vmatpush1.msra.mxu0 0.0
        %3325 = vmatprep.subr.mxu0 0.0
        %3326 = vmatpush1.msra.mxu0 0.0
        %3327 = vmatprep.subr.mxu0 0.0
        %3328 = vmatpush1.msra.mxu0 0.0
        %3329 = vmatprep.subr.mxu0 0.0
        %3330 = vmatpush1.msra.mxu0 0.0
        %3331 = vmatprep.subr.mxu0 0.0
        %3332 = vmatpush1.msra.mxu0 %v3228
        %3333 = vmatprep.subr.mxu0 0.0
        %3334 = vmatpush2.msra.mxu0 0.0
        %3335 = vmatprep.subr.mxu0 0.0
        %3336 = vmatpush2.msra.mxu0 0.0
        %3337 = vmatprep.subr.mxu0 0.0
        %3338 = vmatpush2.msra.mxu0 0.0
        %3339 = vmatprep.subr.mxu0 0.0
        %3340 = vmatpush2.msra.mxu0 0.0
        %3341 = vmatprep.subr.mxu0 0.0
        %3342 = vmatpush2.msra.mxu0 0.0
        %3343 = vmatprep.subr.mxu0 0.0
        %3344 = vmatpush2.msra.mxu0 0.0
        %3345 = vmatprep.subr.mxu0 0.0
        %3346 = vmatpush2.msra.mxu0 0.0
        %3347 = vmatprep.subr.mxu0 0.0
        %3348 = vmatpush2.msra.mxu0 0.0
        %3349 = vmatprep.subr.mxu0 0.0
        %3350 = vmatpush2.msra.mxu0 0.0
        %3351 = vmatprep.subr.mxu0 0.0
        %3352 = vmatpush2.msra.mxu0 0.0
        %3353 = vmatprep.subr.mxu0 0.0
        %3354 = vmatpush2.msra.mxu0 0.0
        %3355 = vmatprep.subr.mxu0 0.0
        %3356 = vmatpush2.msra.mxu0 0.0
        %3357 = vmatprep.subr.mxu0 0.0
        %3358 = vmatpush2.msra.mxu0 0.0
        %3359 = vmatprep.subr.mxu0 0.0
        %3360 = vmatpush2.msra.mxu0 0.0
        %3361 = vmatprep.subr.mxu0 0.0
        %3362 = vmatpush2.msra.mxu0 0.0
        %3363 = vmatprep.subr.mxu0 0.0
        %3364 = vmatpush2.msra.mxu0 0.0
        %3365 = vmatprep.mubr.f32.mxu0 0.0
        %3366 = vmatmul.mubr.f32.gmra.mxu0 %v3222
        %v3367 = vpop.f32.mrf.mxu0
        %v3368 = vadd.f32 0.0, %v3367
        %v3369 = vpop.f32.mrf.mxu0
        %3370 = vdwg.mxu0
        %v3371 = vadd.f32 %v3199, %v3297
        %v3372 = vadd.f32 %v3200, %v3299
        %v3373 = vadd.f32 %v3201, %v3368
        %s3374 = scalar_lea.vmem %s6, 64
        %v3375 = vld [vmem:[%s3374] sm:$0xff]
        %v3376 = vld [vmem:[#allocation2 + $0x4] sm:$0xff]
        %v3377 = vld [vmem:[#allocation2 + $0xc] sm:$0xff]
        %v3380 = vcombine.high %v3376, %v3376
        %v3381 = vcombine.high %v3377, %v3377
        %3382 = vrot.lane.b32.xlu0 %v3376, 103
        %v3383 = vpop.permute.xlu0 %3382
        %3384 = vrot.lane.b32.xlu0 %v3380, 103
        %v3385 = vpop.permute.xlu0 %3384
        %3386 = vrot.lane.b32.xlu0 %v3377, 103
        %v3387 = vpop.permute.xlu0 %3386
        %3388 = vrot.lane.b32.xlu0 %v3381, 103
        %v3389 = vpop.permute.xlu0 %3388
        %v3390 = vsel %vm649, %v3383, %v3385
        %v3391 = vsel %vm649, %v3385, %v3387
        %v3392 = vsel %vm649, %v3387, %v3389
        %v3394 = vsel %vm1548, %v3375, 0
        %v3396 = vsel %vm444, %v3390, 0
        %v3398 = vsel %vm444, %v3391, 0
        %v3400 = vsel %vm444, %v3392, 0
        %3402 = vmatprep.subr.mxu0 0.0
        %3403 = vmatpush1.msra.mxu0 0.0
        %3404 = vmatprep.subr.mxu0 0.0
        %3405 = vmatpush1.msra.mxu0 0.0
        %3406 = vmatprep.subr.mxu0 0.0
        %3407 = vmatpush1.msra.mxu0 0.0
        %3408 = vmatprep.subr.mxu0 0.0
        %3409 = vmatpush1.msra.mxu0 0.0
        %3410 = vmatprep.subr.mxu0 0.0
        %3411 = vmatpush1.msra.mxu0 0.0
        %3412 = vmatprep.subr.mxu0 0.0
        %3413 = vmatpush1.msra.mxu0 0.0
        %3414 = vmatprep.subr.mxu0 0.0
        %3415 = vmatpush1.msra.mxu0 0.0
        %3416 = vmatprep.subr.mxu0 0.0
        %3417 = vmatpush1.msra.mxu0 0.0
        %3418 = vmatprep.subr.mxu0 0.0
        %3419 = vmatpush1.msra.mxu0 0.0
        %3420 = vmatprep.subr.mxu0 0.0
        %3421 = vmatpush1.msra.mxu0 0.0
        %3422 = vmatprep.subr.mxu0 0.0
        %3423 = vmatpush1.msra.mxu0 0.0
        %3424 = vmatprep.subr.mxu0 0.0
        %3425 = vmatpush1.msra.mxu0 0.0
        %3426 = vmatprep.subr.mxu0 0.0
        %3427 = vmatpush1.msra.mxu0 0.0
        %3428 = vmatprep.subr.mxu0 0.0
        %3429 = vmatpush1.msra.mxu0 0.0
        %3430 = vmatprep.subr.mxu0 0.0
        %3431 = vmatpush1.msra.mxu0 0.0
        %3432 = vmatprep.subr.mxu0 %v3398
        %3433 = vmatpush1.msra.mxu0 %v3396
        %3434 = vmatprep.subr.mxu0 0.0
        %3435 = vmatpush2.msra.mxu0 0.0
        %3436 = vmatprep.subr.mxu0 0.0
        %3437 = vmatpush2.msra.mxu0 0.0
        %3438 = vmatprep.subr.mxu0 0.0
        %3439 = vmatpush2.msra.mxu0 0.0
        %3440 = vmatprep.subr.mxu0 0.0
        %3441 = vmatpush2.msra.mxu0 0.0
        %3442 = vmatprep.subr.mxu0 0.0
        %3443 = vmatpush2.msra.mxu0 0.0
        %3444 = vmatprep.subr.mxu0 0.0
        %3445 = vmatpush2.msra.mxu0 0.0
        %3446 = vmatprep.subr.mxu0 0.0
        %3447 = vmatpush2.msra.mxu0 0.0
        %3448 = vmatprep.subr.mxu0 0.0
        %3449 = vmatpush2.msra.mxu0 0.0
        %3450 = vmatprep.subr.mxu0 0.0
        %3451 = vmatpush2.msra.mxu0 0.0
        %3452 = vmatprep.subr.mxu0 0.0
        %3453 = vmatpush2.msra.mxu0 0.0
        %3454 = vmatprep.subr.mxu0 0.0
        %3455 = vmatpush2.msra.mxu0 0.0
        %3456 = vmatprep.subr.mxu0 0.0
        %3457 = vmatpush2.msra.mxu0 0.0
        %3458 = vmatprep.subr.mxu0 0.0
        %3459 = vmatpush2.msra.mxu0 0.0
        %3460 = vmatprep.subr.mxu0 0.0
        %3461 = vmatpush2.msra.mxu0 0.0
        %3462 = vmatprep.subr.mxu0 0.0
        %3463 = vmatpush2.msra.mxu0 0.0
        %3464 = vmatprep.subr.mxu0 0.0
        %3465 = vmatpush2.msra.mxu0 0.0
        %3466 = vmatprep.mubr.f32.mxu0 0.0
        %3467 = vmatmul.mubr.f32.gmra.mxu0 %v3394
        %v3468 = vpop.f32.mrf.mxu0
        %v3469 = vadd.f32 0.0, %v3468
        %v3470 = vpop.f32.mrf.mxu0
        %v3471 = vadd.f32 0.0, %v3470
        %3472 = vdwg.mxu0
        %3473 = vmatprep.subr.mxu0 0.0
        %3474 = vmatpush1.msra.mxu0 0.0
        %3475 = vmatprep.subr.mxu0 0.0
        %3476 = vmatpush1.msra.mxu0 0.0
        %3477 = vmatprep.subr.mxu0 0.0
        %3478 = vmatpush1.msra.mxu0 0.0
        %3479 = vmatprep.subr.mxu0 0.0
        %3480 = vmatpush1.msra.mxu0 0.0
        %3481 = vmatprep.subr.mxu0 0.0
        %3482 = vmatpush1.msra.mxu0 0.0
        %3483 = vmatprep.subr.mxu0 0.0
        %3484 = vmatpush1.msra.mxu0 0.0
        %3485 = vmatprep.subr.mxu0 0.0
        %3486 = vmatpush1.msra.mxu0 0.0
        %3487 = vmatprep.subr.mxu0 0.0
        %3488 = vmatpush1.msra.mxu0 0.0
        %3489 = vmatprep.subr.mxu0 0.0
        %3490 = vmatpush1.msra.mxu0 0.0
        %3491 = vmatprep.subr.mxu0 0.0
        %3492 = vmatpush1.msra.mxu0 0.0
        %3493 = vmatprep.subr.mxu0 0.0
        %3494 = vmatpush1.msra.mxu0 0.0
        %3495 = vmatprep.subr.mxu0 0.0
        %3496 = vmatpush1.msra.mxu0 0.0
        %3497 = vmatprep.subr.mxu0 0.0
        %3498 = vmatpush1.msra.mxu0 0.0
        %3499 = vmatprep.subr.mxu0 0.0
        %3500 = vmatpush1.msra.mxu0 0.0
        %3501 = vmatprep.subr.mxu0 0.0
        %3502 = vmatpush1.msra.mxu0 0.0
        %3503 = vmatprep.subr.mxu0 0.0
        %3504 = vmatpush1.msra.mxu0 %v3400
        %3505 = vmatprep.subr.mxu0 0.0
        %3506 = vmatpush2.msra.mxu0 0.0
        %3507 = vmatprep.subr.mxu0 0.0
        %3508 = vmatpush2.msra.mxu0 0.0
        %3509 = vmatprep.subr.mxu0 0.0
        %3510 = vmatpush2.msra.mxu0 0.0
        %3511 = vmatprep.subr.mxu0 0.0
        %3512 = vmatpush2.msra.mxu0 0.0
        %3513 = vmatprep.subr.mxu0 0.0
        %3514 = vmatpush2.msra.mxu0 0.0
        %3515 = vmatprep.subr.mxu0 0.0
        %3516 = vmatpush2.msra.mxu0 0.0
        %3517 = vmatprep.subr.mxu0 0.0
        %3518 = vmatpush2.msra.mxu0 0.0
        %3519 = vmatprep.subr.mxu0 0.0
        %3520 = vmatpush2.msra.mxu0 0.0
        %3521 = vmatprep.subr.mxu0 0.0
        %3522 = vmatpush2.msra.mxu0 0.0
        %3523 = vmatprep.subr.mxu0 0.0
        %3524 = vmatpush2.msra.mxu0 0.0
        %3525 = vmatprep.subr.mxu0 0.0
        %3526 = vmatpush2.msra.mxu0 0.0
        %3527 = vmatprep.subr.mxu0 0.0
        %3528 = vmatpush2.msra.mxu0 0.0
        %3529 = vmatprep.subr.mxu0 0.0
        %3530 = vmatpush2.msra.mxu0 0.0
        %3531 = vmatprep.subr.mxu0 0.0
        %3532 = vmatpush2.msra.mxu0 0.0
        %3533 = vmatprep.subr.mxu0 0.0
        %3534 = vmatpush2.msra.mxu0 0.0
        %3535 = vmatprep.subr.mxu0 0.0
        %3536 = vmatpush2.msra.mxu0 0.0
        %3537 = vmatprep.mubr.f32.mxu0 0.0
        %3538 = vmatmul.mubr.f32.gmra.mxu0 %v3394
        %v3539 = vpop.f32.mrf.mxu0
        %v3540 = vadd.f32 0.0, %v3539
        %v3541 = vpop.f32.mrf.mxu0
        %3542 = vdwg.mxu0
        %v3543 = vadd.f32 %v3371, %v3469
        %v3544 = vadd.f32 %v3372, %v3471
        %v3545 = vadd.f32 %v3373, %v3540
        %v3546 = vld [vmem:[%s7] sm:$0xff]
        %3548 = vset.pattern.permute.xlu0 0
        %3549 = vperm.xlu0 %3548, %v3546
        %v3550 = vpop.permute.xlu0 %3549
        %v3552 = vadd.f32 %v3543, %v3550
        %v3553 = vadd.f32 %v3544, %v3550
        %v3554 = vadd.f32 %v3545, %v3550
        %v3555 = vmul.f32 %v3552, 0.5
        %v3556 = vmul.f32 %v3553, 0.5
        %v3557 = vmul.f32 %v3554, 0.5
        %v3558 = vmul.f32 %v3552, 0.70710677
        %v3559 = vmul.f32 %v3553, 0.70710677
        %v3560 = vmul.f32 %v3554, 0.70710677
        %v3561 = vand.u32 2147483647, %v3558
        %v3562 = vand.u32 2147483647, %v3559
        %v3563 = vand.u32 2147483647, %v3560
        %v3564 = vmul.f32 %v3561, 0.3275911
        %v3565 = vmul.f32 %v3562, 0.3275911
        %v3566 = vmul.f32 %v3563, 0.3275911
        %v3567 = vadd.f32 %v3564, 1.0
        %v3568 = vadd.f32 %v3565, 1.0
        %v3569 = vadd.f32 %v3566, 1.0
        %v3570 = vrcp.pop %v3567
        %v3571 = vmul.f32 1.0, %v3570
        %v3572 = vrcp.pop %v3568
        %v3573 = vmul.f32 1.0, %v3572
        %v3574 = vrcp.pop %v3569
        %v3575 = vmul.f32 1.0, %v3574
        %v3576 = vmul.f32 %v3571, 1.0614054
        %v3577 = vmul.f32 %v3573, 1.0614054
        %v3578 = vmul.f32 %v3575, 1.0614054
        %v3579 = vadd.f32 %v3576, -1.4531521
        %v3580 = vadd.f32 %v3577, -1.4531521
        %v3581 = vadd.f32 %v3578, -1.4531521
        %v3582 = vmul.f32 %v3579, %v3571
        %v3583 = vmul.f32 %v3580, %v3573
        %v3584 = vmul.f32 %v3581, %v3575
        %v3585 = vadd.f32 %v3582, 1.4214138
        %v3586 = vadd.f32 %v3583, 1.4214138
        %v3587 = vadd.f32 %v3584, 1.4214138
        %v3588 = vmul.f32 %v3585, %v3571
        %v3589 = vmul.f32 %v3586, %v3573
        %v3590 = vmul.f32 %v3587, %v3575
        %v3591 = vadd.f32 %v3588, -0.28449672
        %v3592 = vadd.f32 %v3589, -0.28449672
        %v3593 = vadd.f32 %v3590, -0.28449672
        %v3594 = vmul.f32 %v3591, %v3571
        %v3595 = vmul.f32 %v3592, %v3573
        %v3596 = vmul.f32 %v3593, %v3575
        %v3597 = vadd.f32 %v3594, 0.2548296
        %v3598 = vadd.f32 %v3595, 0.2548296
        %v3599 = vadd.f32 %v3596, 0.2548296
        %v3600 = vmul.f32 %v3597, %v3571
        %v3601 = vmul.f32 %v3598, %v3573
        %v3602 = vmul.f32 %v3599, %v3575
        %v3603 = vsub.f32 0.0, %v3561
        %v3604 = vsub.f32 0.0, %v3562
        %v3605 = vsub.f32 0.0, %v3563
        %v3606 = vmul.f32 %v3603, %v3561
        %v3607 = vmul.f32 %v3604, %v3562
        %v3608 = vmul.f32 %v3605, %v3563
        %v3609 = vmul.f32 %v3606, 1.442695
        %v3610 = vpow.pop %v3609
        %v3611 = vmul.f32 %v3607, 1.442695
        %v3612 = vpow.pop %v3611
        %v3613 = vmul.f32 %v3608, 1.442695
        %v3614 = vpow.pop %v3613
        %v3615 = vmul.f32 %v3600, %v3610
        %v3616 = vmul.f32 %v3601, %v3612
        %v3617 = vmul.f32 %v3602, %v3614
        %v3618 = vsub.f32 1.0, %v3615
        %v3619 = vsub.f32 1.0, %v3616
        %v3620 = vsub.f32 1.0, %v3617
        %vm3621 = vcmp.ge.f32.partialorder %v3558, 0.0
        %vm3622 = vcmp.ge.f32.partialorder %v3559, 0.0
        %vm3623 = vcmp.ge.f32.partialorder %v3560, 0.0
        %v3624 = vsub.f32 0.0, %v3618
        %v3625 = vsub.f32 0.0, %v3619
        %v3626 = vsub.f32 0.0, %v3620
        %v3627 = vsel %vm3621, %v3618, %v3624
        %v3628 = vsel %vm3622, %v3619, %v3625
        %v3629 = vsel %vm3623, %v3620, %v3626
        %v3630 = vadd.f32 %v3627, 1.0
        %v3631 = vadd.f32 %v3628, 1.0
        %v3632 = vadd.f32 %v3629, 1.0
        %v3633 = vmul.f32 %v3555, %v3630
        %v3634 = vmul.f32 %v3556, %v3631
        %v3635 = vmul.f32 %v3557, %v3632
        %v3636 = vld [vmem:[%s8] sm:$0xff]
        %v3637 = vld [vmem:[%s401] sm:$0xff]
        %v3638 = vld [vmem:[%s401 + $0x8] sm:$0xff]
        %v3639 = vld [vmem:[%s9] sm:$0xff]
        %v3642 = vcombine.high %v3637, %v3637
        %v3643 = vcombine.high %v3638, %v3638
        %3644 = vrot.lane.b32.xlu0 %v3637, 53
        %v3645 = vpop.permute.xlu0 %3644
        %3646 = vrot.lane.b32.xlu0 %v3642, 53
        %v3647 = vpop.permute.xlu0 %3646
        %3648 = vrot.lane.b32.xlu0 %v3638, 53
        %v3649 = vpop.permute.xlu0 %3648
        %3650 = vrot.lane.b32.xlu0 %v3643, 53
        %v3651 = vpop.permute.xlu0 %3650
        %v3652 = vsel %vm1113, %v3645, %v3647
        %v3653 = vsel %vm1113, %v3647, %v3649
        %v3654 = vsel %vm1113, %v3649, %v3651
        %v3656 = vsel %vm1548, %v3639, 0
        %v3658 = vsel %vm444, %v3652, 0
        %v3660 = vsel %vm444, %v3653, 0
        %v3662 = vsel %vm444, %v3654, 0
        %3664 = vmatprep.subr.mxu0 0.0
        %3665 = vmatpush1.msra.mxu0 0.0
        %3666 = vmatprep.subr.mxu0 0.0
        %3667 = vmatpush1.msra.mxu0 0.0
        %3668 = vmatprep.subr.mxu0 0.0
        %3669 = vmatpush1.msra.mxu0 0.0
        %3670 = vmatprep.subr.mxu0 0.0
        %3671 = vmatpush1.msra.mxu0 0.0
        %3672 = vmatprep.subr.mxu0 0.0
        %3673 = vmatpush1.msra.mxu0 0.0
        %3674 = vmatprep.subr.mxu0 0.0
        %3675 = vmatpush1.msra.mxu0 0.0
        %3676 = vmatprep.subr.mxu0 0.0
        %3677 = vmatpush1.msra.mxu0 0.0
        %3678 = vmatprep.subr.mxu0 0.0
        %3679 = vmatpush1.msra.mxu0 0.0
        %3680 = vmatprep.subr.mxu0 0.0
        %3681 = vmatpush1.msra.mxu0 0.0
        %3682 = vmatprep.subr.mxu0 0.0
        %3683 = vmatpush1.msra.mxu0 0.0
        %3684 = vmatprep.subr.mxu0 0.0
        %3685 = vmatpush1.msra.mxu0 0.0
        %3686 = vmatprep.subr.mxu0 0.0
        %3687 = vmatpush1.msra.mxu0 0.0
        %3688 = vmatprep.subr.mxu0 0.0
        %3689 = vmatpush1.msra.mxu0 0.0
        %3690 = vmatprep.subr.mxu0 0.0
        %3691 = vmatpush1.msra.mxu0 0.0
        %3692 = vmatprep.subr.mxu0 0.0
        %3693 = vmatpush1.msra.mxu0 0.0
        %3694 = vmatprep.subr.mxu0 %v3660
        %3695 = vmatpush1.msra.mxu0 %v3658
        %3696 = vmatprep.subr.mxu0 0.0
        %3697 = vmatpush2.msra.mxu0 0.0
        %3698 = vmatprep.subr.mxu0 0.0
        %3699 = vmatpush2.msra.mxu0 0.0
        %3700 = vmatprep.subr.mxu0 0.0
        %3701 = vmatpush2.msra.mxu0 0.0
        %3702 = vmatprep.subr.mxu0 0.0
        %3703 = vmatpush2.msra.mxu0 0.0
        %3704 = vmatprep.subr.mxu0 0.0
        %3705 = vmatpush2.msra.mxu0 0.0
        %3706 = vmatprep.subr.mxu0 0.0
        %3707 = vmatpush2.msra.mxu0 0.0
        %3708 = vmatprep.subr.mxu0 0.0
        %3709 = vmatpush2.msra.mxu0 0.0
        %3710 = vmatprep.subr.mxu0 0.0
        %3711 = vmatpush2.msra.mxu0 0.0
        %3712 = vmatprep.subr.mxu0 0.0
        %3713 = vmatpush2.msra.mxu0 0.0
        %3714 = vmatprep.subr.mxu0 0.0
        %3715 = vmatpush2.msra.mxu0 0.0
        %3716 = vmatprep.subr.mxu0 0.0
        %3717 = vmatpush2.msra.mxu0 0.0
        %3718 = vmatprep.subr.mxu0 0.0
        %3719 = vmatpush2.msra.mxu0 0.0
        %3720 = vmatprep.subr.mxu0 0.0
        %3721 = vmatpush2.msra.mxu0 0.0
        %3722 = vmatprep.subr.mxu0 0.0
        %3723 = vmatpush2.msra.mxu0 0.0
        %3724 = vmatprep.subr.mxu0 0.0
        %3725 = vmatpush2.msra.mxu0 0.0
        %3726 = vmatprep.subr.mxu0 0.0
        %3727 = vmatpush2.msra.mxu0 0.0
        %3728 = vmatprep.mubr.f32.mxu0 0.0
        %3729 = vmatmul.mubr.f32.gmra.mxu0 %v3656
        %v3730 = vpop.f32.mrf.mxu0
        %v3731 = vadd.f32 0.0, %v3730
        %v3732 = vpop.f32.mrf.mxu0
        %v3733 = vadd.f32 0.0, %v3732
        %3734 = vdwg.mxu0
        %3735 = vmatprep.subr.mxu0 0.0
        %3736 = vmatpush1.msra.mxu0 0.0
        %3737 = vmatprep.subr.mxu0 0.0
        %3738 = vmatpush1.msra.mxu0 0.0
        %3739 = vmatprep.subr.mxu0 0.0
        %3740 = vmatpush1.msra.mxu0 0.0
        %3741 = vmatprep.subr.mxu0 0.0
        %3742 = vmatpush1.msra.mxu0 0.0
        %3743 = vmatprep.subr.mxu0 0.0
        %3744 = vmatpush1.msra.mxu0 0.0
        %3745 = vmatprep.subr.mxu0 0.0
        %3746 = vmatpush1.msra.mxu0 0.0
        %3747 = vmatprep.subr.mxu0 0.0
        %3748 = vmatpush1.msra.mxu0 0.0
        %3749 = vmatprep.subr.mxu0 0.0
        %3750 = vmatpush1.msra.mxu0 0.0
        %3751 = vmatprep.subr.mxu0 0.0
        %3752 = vmatpush1.msra.mxu0 0.0
        %3753 = vmatprep.subr.mxu0 0.0
        %3754 = vmatpush1.msra.mxu0 0.0
        %3755 = vmatprep.subr.mxu0 0.0
        %3756 = vmatpush1.msra.mxu0 0.0
        %3757 = vmatprep.subr.mxu0 0.0
        %3758 = vmatpush1.msra.mxu0 0.0
        %3759 = vmatprep.subr.mxu0 0.0
        %3760 = vmatpush1.msra.mxu0 0.0
        %3761 = vmatprep.subr.mxu0 0.0
        %3762 = vmatpush1.msra.mxu0 0.0
        %3763 = vmatprep.subr.mxu0 0.0
        %3764 = vmatpush1.msra.mxu0 0.0
        %3765 = vmatprep.subr.mxu0 0.0
        %3766 = vmatpush1.msra.mxu0 %v3662
        %3767 = vmatprep.subr.mxu0 0.0
        %3768 = vmatpush2.msra.mxu0 0.0
        %3769 = vmatprep.subr.mxu0 0.0
        %3770 = vmatpush2.msra.mxu0 0.0
        %3771 = vmatprep.subr.mxu0 0.0
        %3772 = vmatpush2.msra.mxu0 0.0
        %3773 = vmatprep.subr.mxu0 0.0
        %3774 = vmatpush2.msra.mxu0 0.0
        %3775 = vmatprep.subr.mxu0 0.0
        %3776 = vmatpush2.msra.mxu0 0.0
        %3777 = vmatprep.subr.mxu0 0.0
        %3778 = vmatpush2.msra.mxu0 0.0
        %3779 = vmatprep.subr.mxu0 0.0
        %3780 = vmatpush2.msra.mxu0 0.0
        %3781 = vmatprep.subr.mxu0 0.0
        %3782 = vmatpush2.msra.mxu0 0.0
        %3783 = vmatprep.subr.mxu0 0.0
        %3784 = vmatpush2.msra.mxu0 0.0
        %3785 = vmatprep.subr.mxu0 0.0
        %3786 = vmatpush2.msra.mxu0 0.0
        %3787 = vmatprep.subr.mxu0 0.0
        %3788 = vmatpush2.msra.mxu0 0.0
        %3789 = vmatprep.subr.mxu0 0.0
        %3790 = vmatpush2.msra.mxu0 0.0
        %3791 = vmatprep.subr.mxu0 0.0
        %3792 = vmatpush2.msra.mxu0 0.0
        %3793 = vmatprep.subr.mxu0 0.0
        %3794 = vmatpush2.msra.mxu0 0.0
        %3795 = vmatprep.subr.mxu0 0.0
        %3796 = vmatpush2.msra.mxu0 0.0
        %3797 = vmatprep.subr.mxu0 0.0
        %3798 = vmatpush2.msra.mxu0 0.0
        %3799 = vmatprep.mubr.f32.mxu0 0.0
        %3800 = vmatmul.mubr.f32.gmra.mxu0 %v3656
        %v3801 = vpop.f32.mrf.mxu0
        %v3802 = vadd.f32 0.0, %v3801
        %v3803 = vpop.f32.mrf.mxu0
        %3804 = vdwg.mxu0
        %v3806 = vsel %vm1432, %v3636, 0
        %3808 = vmatprep.subr.mxu0 0.0
        %3809 = vmatpush1.msra.mxu0 0.0
        %3810 = vmatprep.subr.mxu0 0.0
        %3811 = vmatpush1.msra.mxu0 0.0
        %3812 = vmatprep.subr.mxu0 0.0
        %3813 = vmatpush1.msra.mxu0 0.0
        %3814 = vmatprep.subr.mxu0 0.0
        %3815 = vmatpush1.msra.mxu0 0.0
        %3816 = vmatprep.subr.mxu0 0.0
        %3817 = vmatpush1.msra.mxu0 0.0
        %3818 = vmatprep.subr.mxu0 0.0
        %3819 = vmatpush1.msra.mxu0 0.0
        %3820 = vmatprep.subr.mxu0 0.0
        %3821 = vmatpush1.msra.mxu0 0.0
        %3822 = vmatprep.subr.mxu0 0.0
        %3823 = vmatpush1.msra.mxu0 0.0
        %3824 = vmatprep.subr.mxu0 0.0
        %3825 = vmatpush1.msra.mxu0 0.0
        %3826 = vmatprep.subr.mxu0 0.0
        %3827 = vmatpush1.msra.mxu0 0.0
        %3828 = vmatprep.subr.mxu0 0.0
        %3829 = vmatpush1.msra.mxu0 0.0
        %3830 = vmatprep.subr.mxu0 0.0
        %3831 = vmatpush1.msra.mxu0 0.0
        %3832 = vmatprep.subr.mxu0 0.0
        %3833 = vmatpush1.msra.mxu0 0.0
        %3834 = vmatprep.subr.mxu0 0.0
        %3835 = vmatpush1.msra.mxu0 0.0
        %3836 = vmatprep.subr.mxu0 0.0
        %3837 = vmatpush1.msra.mxu0 0.0
        %3838 = vmatprep.subr.mxu0 %v3634
        %3839 = vmatpush1.msra.mxu0 %v3633
        %3840 = vmatprep.subr.mxu0 0.0
        %3841 = vmatpush2.msra.mxu0 0.0
        %3842 = vmatprep.subr.mxu0 0.0
        %3843 = vmatpush2.msra.mxu0 0.0
        %3844 = vmatprep.subr.mxu0 0.0
        %3845 = vmatpush2.msra.mxu0 0.0
        %3846 = vmatprep.subr.mxu0 0.0
        %3847 = vmatpush2.msra.mxu0 0.0
        %3848 = vmatprep.subr.mxu0 0.0
        %3849 = vmatpush2.msra.mxu0 0.0
        %3850 = vmatprep.subr.mxu0 0.0
        %3851 = vmatpush2.msra.mxu0 0.0
        %3852 = vmatprep.subr.mxu0 0.0
        %3853 = vmatpush2.msra.mxu0 0.0
        %3854 = vmatprep.subr.mxu0 0.0
        %3855 = vmatpush2.msra.mxu0 0.0
        %3856 = vmatprep.subr.mxu0 0.0
        %3857 = vmatpush2.msra.mxu0 0.0
        %3858 = vmatprep.subr.mxu0 0.0
        %3859 = vmatpush2.msra.mxu0 0.0
        %3860 = vmatprep.subr.mxu0 0.0
        %3861 = vmatpush2.msra.mxu0 0.0
        %3862 = vmatprep.subr.mxu0 0.0
        %3863 = vmatpush2.msra.mxu0 0.0
        %3864 = vmatprep.subr.mxu0 0.0
        %3865 = vmatpush2.msra.mxu0 0.0
        %3866 = vmatprep.subr.mxu0 0.0
        %3867 = vmatpush2.msra.mxu0 0.0
        %3868 = vmatprep.subr.mxu0 0.0
        %3869 = vmatpush2.msra.mxu0 0.0
        %3870 = vmatprep.subr.mxu0 0.0
        %3871 = vmatpush2.msra.mxu0 0.0
        %3872 = vmatprep.mubr.f32.mxu0 0.0
        %3873 = vmatmul.mubr.f32.gmra.mxu0 %v3806
        %v3874 = vpop.f32.mrf.mxu0
        %v3875 = vadd.f32 %v3731, %v3874
        %v3876 = vpop.f32.mrf.mxu0
        %v3877 = vadd.f32 %v3733, %v3876
        %3878 = vdwg.mxu0
        %3879 = vmatprep.subr.mxu0 0.0
        %3880 = vmatpush1.msra.mxu0 0.0
        %3881 = vmatprep.subr.mxu0 0.0
        %3882 = vmatpush1.msra.mxu0 0.0
        %3883 = vmatprep.subr.mxu0 0.0
        %3884 = vmatpush1.msra.mxu0 0.0
        %3885 = vmatprep.subr.mxu0 0.0
        %3886 = vmatpush1.msra.mxu0 0.0
        %3887 = vmatprep.subr.mxu0 0.0
        %3888 = vmatpush1.msra.mxu0 0.0
        %3889 = vmatprep.subr.mxu0 0.0
        %3890 = vmatpush1.msra.mxu0 0.0
        %3891 = vmatprep.subr.mxu0 0.0
        %3892 = vmatpush1.msra.mxu0 0.0
        %3893 = vmatprep.subr.mxu0 0.0
        %3894 = vmatpush1.msra.mxu0 0.0
        %3895 = vmatprep.subr.mxu0 0.0
        %3896 = vmatpush1.msra.mxu0 0.0
        %3897 = vmatprep.subr.mxu0 0.0
        %3898 = vmatpush1.msra.mxu0 0.0
        %3899 = vmatprep.subr.mxu0 0.0
        %3900 = vmatpush1.msra.mxu0 0.0
        %3901 = vmatprep.subr.mxu0 0.0
        %3902 = vmatpush1.msra.mxu0 0.0
        %3903 = vmatprep.subr.mxu0 0.0
        %3904 = vmatpush1.msra.mxu0 0.0
        %3905 = vmatprep.subr.mxu0 0.0
        %3906 = vmatpush1.msra.mxu0 0.0
        %3907 = vmatprep.subr.mxu0 0.0
        %3908 = vmatpush1.msra.mxu0 0.0
        %3909 = vmatprep.subr.mxu0 0.0
        %3910 = vmatpush1.msra.mxu0 %v3635
        %3911 = vmatprep.subr.mxu0 0.0
        %3912 = vmatpush2.msra.mxu0 0.0
        %3913 = vmatprep.subr.mxu0 0.0
        %3914 = vmatpush2.msra.mxu0 0.0
        %3915 = vmatprep.subr.mxu0 0.0
        %3916 = vmatpush2.msra.mxu0 0.0
        %3917 = vmatprep.subr.mxu0 0.0
        %3918 = vmatpush2.msra.mxu0 0.0
        %3919 = vmatprep.subr.mxu0 0.0
        %3920 = vmatpush2.msra.mxu0 0.0
        %3921 = vmatprep.subr.mxu0 0.0
        %3922 = vmatpush2.msra.mxu0 0.0
        %3923 = vmatprep.subr.mxu0 0.0
        %3924 = vmatpush2.msra.mxu0 0.0
        %3925 = vmatprep.subr.mxu0 0.0
        %3926 = vmatpush2.msra.mxu0 0.0
        %3927 = vmatprep.subr.mxu0 0.0
        %3928 = vmatpush2.msra.mxu0 0.0
        %3929 = vmatprep.subr.mxu0 0.0
        %3930 = vmatpush2.msra.mxu0 0.0
        %3931 = vmatprep.subr.mxu0 0.0
        %3932 = vmatpush2.msra.mxu0 0.0
        %3933 = vmatprep.subr.mxu0 0.0
        %3934 = vmatpush2.msra.mxu0 0.0
        %3935 = vmatprep.subr.mxu0 0.0
        %3936 = vmatpush2.msra.mxu0 0.0
        %3937 = vmatprep.subr.mxu0 0.0
        %3938 = vmatpush2.msra.mxu0 0.0
        %3939 = vmatprep.subr.mxu0 0.0
        %3940 = vmatpush2.msra.mxu0 0.0
        %3941 = vmatprep.subr.mxu0 0.0
        %3942 = vmatpush2.msra.mxu0 0.0
        %3943 = vmatprep.mubr.f32.mxu0 0.0
        %3944 = vmatmul.mubr.f32.gmra.mxu0 %v3806
        %v3945 = vpop.f32.mrf.mxu0
        %v3946 = vadd.f32 %v3802, %v3945
        %v3947 = vpop.f32.mrf.mxu0
        %3948 = vdwg.mxu0
        %v3949 = vld [vmem:[%s10] sm:$0xff]
        %3951 = vset.pattern.permute.xlu0 0
        %3952 = vperm.xlu0 %3951, %v3949
        %v3953 = vpop.permute.xlu0 %3952
        %v3955 = vadd.f32 %v3875, %v3953
        %v3956 = vadd.f32 %v3877, %v3953
        %v3957 = vadd.f32 %v3946, %v3953
        %3958 = vst [vmem:[%s392] sm:$0xff] %v3955
        %3959 = vst [vmem:[%s392 + $0x8] sm:$0xff] %v3956
        %3960 = vst [vmem:[%s392 + $0x10] sm:$0xff] %v3957
        %s3961 = sand.u32 %s274, 1
        %s3962 = scalar_lea.sflag [#allocation4], %s3961
        %s3963 = sand.u32 %s274, 1
        %s3964 = smul.addr %s3963, 24
        %s3965 = scalar_lea.vmem [#allocation3], %s3964
        // Predicated region
        $region65: #{tpu_custom_call.1} parent=63 // pred_check
          %p3966 = pneg %p284
        $region66: #{tpu_custom_call.1} parent=63 // pred_check_branch
          %3968 = sbr.rel (%p3966) target = $region68
        $region67: #{tpu_custom_call.1} parent=63 // pred_region
          %s3970 = ssub.s32 384, 384
          %3971 = vsyncadd %s3962, %s3970
          %s3972 = smul.addr %s25, 3
          %s3973 = smul.addr %s3972, 128
          %s3974 = scalar_lea.hbm %s11, %s3973
          %s3976 = sshll.u32 %s3965, 4
          %s3977 = int_to_ptr.vmem [resolvable:$true] %s3976
          %3979 = dma.vmem_to_hbm [thread:$0]  %s3977, 384, %s3974, %s3962
        $region68: #{tpu_custom_call.1} parent=63 // pred_fallthru
          _
      $region64: #{tpu_custom_call.1} parent=5 // pred_fallthru
        _
      %p3980 = scmp.le.s32.totalorder 2, %s20
      // Predicated region
      $region69: #{tpu_custom_call.1} parent=5 // pred_check
        %p3981 = pneg %p3980
      $region70: #{tpu_custom_call.1} parent=5 // pred_check_branch
        %3983 = sbr.rel (%p3981) target = $region72
      $region71: #{tpu_custom_call.1} parent=5 // pred_region
        %s3984 = ssub.s32 %s20, 2
        // Predicated region
        $region73: #{tpu_custom_call.1} parent=71 // pred_check
          %p3985 = pneg %p290
        $region74: #{tpu_custom_call.1} parent=71 // pred_check_branch
          %3987 = sbr.rel (%p3985) target = $region76
        $region75: #{tpu_custom_call.1} parent=71 // pred_region
          %s3988 = sand.u32 %s275, 1
          %s3989 = scalar_lea.sflag [#allocation4], %s3988
          %s3990 = sand.u32 %s275, 1
          %s3991 = smul.addr %s3990, 24
          %s3992 = scalar_lea.vmem [#allocation3], %s3991
          %3993 = dma.done %s3989, 384
        $region76: #{tpu_custom_call.1} parent=71 // pred_fallthru
          _
      $region72: #{tpu_custom_call.1} parent=5 // pred_fallthru
        _
    $region6: #{tpu_custom_call.1} parent=1 // loop_footer
      %s24 = sadd.s32 1, %s20
    $region7: #{tpu_custom_call.1} parent=1 // loop_footer_branch
      %19 = sbr.rel target = $region3
    $region8: #{tpu_custom_call.1} parent=1 // loop_exit
      _
    %3994 = vsyncpa [#allocation4], 1
    %s3995 = scalar_lea.sflag [#allocation4], 1
    %3996 = vsyncpa %s3995, 1

</llo_original>
